<compile_context>
chip_gen: v5e
topology: v5e:2x2
jax: 0.10.0
libtpu: 0.0.40
codegen_flags: <defaults>
</compile_context>

<pallas_src>
import jax
import jax.numpy as jnp
from jax import lax
from jax.experimental import pallas as pl
from jax.experimental.pallas import tpu as pltpu

BN_EPS = 1e-5
LEAKY_SLOPE = 0.01


def _leaky(y):
    return jnp.where(y > 0, y, LEAKY_SLOPE * y)


# --------------------- pass 1: 1x1 conv + BN1 partial stats ------------------
def conv1_stats_kernel(x_ref, w1_ref, y1_ref, st1_ref):
    _, TH, W, C = x_ref.shape
    Cmid = w1_ref.shape[1]
    # bf16 operands for the MXU, f32 accumulation.
    xb = x_ref[...].reshape(TH * W, C).astype(jnp.bfloat16)
    y1 = jnp.dot(xb, w1_ref[...], preferred_element_type=jnp.float32)
    # Per-tile BN statistics fused into the matmul epilogue (single pass).
    st1_ref[...] = jnp.concatenate(
        [jnp.sum(y1, axis=0, keepdims=True),
         jnp.sum(y1 * y1, axis=0, keepdims=True)], axis=0).reshape(1, 1, 2, Cmid)
    y1_ref[...] = y1.reshape(1, TH, W, Cmid).astype(y1_ref.dtype)


# -------- pass 2: BN1+leaky -> 3x3 conv (9 accumulated MXU taps) + stats -----
def conv3_stats_kernel(y1_ref, scale1_ref, shift1_ref, w2_ref,
                       y2_ref, st2_ref, ap_ref, acc_ref):
    _, H, W, Cmid = y1_ref.shape
    C = w2_ref.shape[2]

    # BN1 (precomputed per-channel scale/shift) + LeakyReLU in f32.
    a = y1_ref[...].astype(jnp.float32).reshape(H, W, Cmid)
    a = a * scale1_ref[...].reshape(1, 1, Cmid) + shift1_ref[...].reshape(1, 1, Cmid)
    a = _leaky(a)

    # Zero only the 1-pixel halo strips of the padded activation scratch, then
    # write the interior.  All stores keep the full lane extent (Cmid).
    rz = jnp.zeros((1, W + 2, Cmid), jnp.float32)
    cz = jnp.zeros((H + 2, 1, Cmid), jnp.float32)
    ap_ref[0:1, :, :] = rz
    ap_ref[H + 1:H + 2, :, :] = rz
    ap_ref[:, 0:1, :] = cz
    ap_ref[:, W + 1:W + 2, :] = cz
    ap_ref[1:H + 1, 1:W + 1, :] = a

    # Nine shifted taps, each an MXU matmul with f32 accumulation into a VMEM
    # accumulator (no im2col buffer, no unaligned lane-dim stores).
    acc_ref[...] = jnp.zeros_like(acc_ref)
    for kh in range(3):
        for kw in range(3):
            tap = ap_ref[kh:kh + H, kw:kw + W, :].reshape(H * W, Cmid)
            acc_ref[...] += jnp.dot(tap.astype(jnp.bfloat16),
                                    w2_ref[kh * 3 + kw],
                                    preferred_element_type=jnp.float32)

    y2 = acc_ref[...]
    st2_ref[...] = jnp.concatenate(
        [jnp.sum(y2, axis=0, keepdims=True),
         jnp.sum(y2 * y2, axis=0, keepdims=True)], axis=0).reshape(1, 2, C)
    y2_ref[...] = y2.reshape(1, H, W, C).astype(y2_ref.dtype)


# -------------------- pass 3: BN2 + LeakyReLU + residual add -----------------
def bn_residual_kernel(x_ref, y2_ref, scale2_ref, shift2_ref, o_ref):
    C = x_ref.shape[-1]
    y = y2_ref[...].astype(jnp.float32)
    y = y * scale2_ref[...].reshape(1, 1, 1, C) + shift2_ref[...].reshape(1, 1, 1, C)
    o_ref[...] = (x_ref[...].astype(jnp.float32) + _leaky(y)).astype(o_ref.dtype)


# ------------------------------- JAX glue ------------------------------------
def _scale_shift(stats, gamma, beta, count):
    """Fold (sum, sumsq) partials into training-mode BN scale/shift (f32)."""
    c = stats.shape[-1]
    s = jnp.sum(stats.reshape(-1, 2, c), axis=0)
    mean = s[0] / count
    var = jnp.maximum(s[1] / count - mean * mean, 0.0)       # biased variance
    inv = gamma.astype(jnp.float32) * lax.rsqrt(var + BN_EPS)
    scale = inv.reshape(1, c).astype(jnp.float32)
    shift = (beta.astype(jnp.float32) - mean * inv).reshape(1, c).astype(jnp.float32)
    return scale, shift


def _row_block(H, W):
    """Largest row-block dividing H with TH*W matmul rows <= 4096."""
    for th in range(H, 0, -1):
        if H % th == 0 and th * W <= 4096:
            return th
    return H


def _compiler_params(semantics, block_bytes):
    # ~3x the double-buffered per-step working set, floored at 8 MiB and kept
    # well under v7x's 64 MiB per-core VMEM.
    limit = int(min(40 << 20, max(8 << 20, 6 * block_bytes)))
    return pltpu.CompilerParams(dimension_semantics=semantics,
                                vmem_limit_bytes=limit)


@jax.jit
def residual_block_forward(x_nhwc, w1_bf, g1, b1, w2t_bf, g2, b2):
    """x_nhwc: (N,H,W,C).  w1_bf: (C,Cmid) bf16.  w2t_bf: (9,Cmid,C) bf16.
    g1/b1: (Cmid,) f32.  g2/b2: (C,) f32."""
    N, H, W, C = x_nhwc.shape
    Cmid = w1_bf.shape[1]
    TH = _row_block(H, W)
    HB = H // TH
    count = N * H * W
    xb = x_nhwc.dtype.itemsize

    # ------------------ pass 1: conv1x1 + BN1 partial stats ------------------
    blk1 = TH * W * (C * xb + Cmid * 2) + C * Cmid * 2 + 2 * Cmid * 4
    y1_raw, st1 = pl.pallas_call(
        conv1_stats_kernel,
        out_shape=(jax.ShapeDtypeStruct((N, H, W, Cmid), jnp.bfloat16),
                   jax.ShapeDtypeStruct((N, HB, 2, Cmid), jnp.float32)),
        grid_spec=pltpu.PrefetchScalarGridSpec(
            num_scalar_prefetch=0, grid=(N, HB),
            in_specs=[pl.BlockSpec((1, TH, W, C), lambda n, h: (n, h, 0, 0)),
                      pl.BlockSpec((C, Cmid), lambda n, h: (0, 0))],
            out_specs=(pl.BlockSpec((1, TH, W, Cmid), lambda n, h: (n, h, 0, 0)),
                       pl.BlockSpec((1, 1, 2, Cmid), lambda n, h: (n, h, 0, 0)))),
        compiler_params=_compiler_params(("parallel", "parallel"), blk1),
        cost_estimate=pl.CostEstimate(
            flops=2 * N * H * W * C * Cmid, transcendentals=0,
            bytes_accessed=N * H * W * (C * xb + Cmid * 2)),
    )(x_nhwc, w1_bf)
    scale1, shift1 = _scale_shift(st1, g1, b1, count)

    # -------- pass 2: BN1+leaky -> 3x3 conv + BN2 partial stats --------------
    # Full image per block => the 3x3 needs no cross-block halo exchange.
    blk2 = (H * W * (Cmid * 2 + C * 2 + C * 4)
            + (H + 2) * (W + 2) * Cmid * 4
            + 9 * Cmid * C * 2 + 4 * Cmid * 4 + 2 * C * 4)
    y2_raw, st2 = pl.pallas_call(
        conv3_stats_kernel,
        out_shape=(jax.ShapeDtypeStruct((N, H, W, C), jnp.bfloat16),
                   jax.ShapeDtypeStruct((N, 2, C), jnp.float32)),
        grid_spec=pltpu.PrefetchScalarGridSpec(
            num_scalar_prefetch=0, grid=(N,),
            in_specs=[pl.BlockSpec((1, H, W, Cmid), lambda n: (n, 0, 0, 0)),
                      pl.BlockSpec((1, Cmid), lambda n: (0, 0)),
                      pl.BlockSpec((1, Cmid), lambda n: (0, 0)),
                      pl.BlockSpec((9, Cmid, C), lambda n: (0, 0, 0))],
            out_specs=(pl.BlockSpec((1, H, W, C), lambda n: (n, 0, 0, 0)),
                       pl.BlockSpec((1, 2, C), lambda n: (n, 0, 0))),
            scratch_shapes=[pltpu.VMEM((H + 2, W + 2, Cmid), jnp.float32),
                            pltpu.VMEM((H * W, C), jnp.float32)]),
        compiler_params=_compiler_params(("parallel",), blk2),
        cost_estimate=pl.CostEstimate(
            flops=2 * N * H * W * 9 * Cmid * C, transcendentals=0,
            bytes_accessed=N * H * W * (Cmid * 2 + C * 2)),
    )(y1_raw, scale1, shift1, w2t_bf)
    scale2, shift2 = _scale_shift(st2, g2, b2, count)

    # ------------------ pass 3: BN2 + LeakyReLU + residual add ---------------
    blk3 = TH * W * C * (2 * xb + 2) + 2 * C * 4
    out = pl.pallas_call(
        bn_residual_kernel,
        out_shape=jax.ShapeDtypeStruct((N, H, W, C), x_nhwc.dtype),
        grid_spec=pltpu.PrefetchScalarGridSpec(
            num_scalar_prefetch=0, grid=(N, HB),
            in_specs=[pl.BlockSpec((1, TH, W, C), lambda n, h: (n, h, 0, 0)),
                      pl.BlockSpec((1, TH, W, C), lambda n, h: (n, h, 0, 0)),
                      pl.BlockSpec((1, C), lambda n, h: (0, 0)),
                      pl.BlockSpec((1, C), lambda n, h: (0, 0))],
            out_specs=pl.BlockSpec((1, TH, W, C), lambda n, h: (n, h, 0, 0))),
        compiler_params=_compiler_params(("parallel", "parallel"), blk3),
        cost_estimate=pl.CostEstimate(
            flops=6 * N * H * W * C, transcendentals=0,
            bytes_accessed=N * H * W * C * (2 * xb + 2)),
    )(x_nhwc, y2_raw, scale2, shift2)
    return out


# ----------------------- pure-JAX reference (NCHW, PyTorch-style) ------------
def _bn_train_nchw(y, gamma, beta):
    mean = jnp.mean(y, axis=(0, 2, 3), keepdims=True)
    var = jnp.mean((y - mean) ** 2, axis=(0, 2, 3), keepdims=True)
    y = (y - mean) * lax.rsqrt(var + BN_EPS)
    return y * gamma.reshape(1, -1, 1, 1) + beta.reshape(1, -1, 1, 1)


def residual_block_ref(x, w1_pt, g1, b1, w2_pt, g2, b2):
    dn = ("NCHW", "OIHW", "NCHW")
    y = lax.conv_general_dilated(x, w1_pt, (1, 1), "VALID", dimension_numbers=dn)
    y = _leaky(_bn_train_nchw(y, g1, b1))
    y = lax.conv_general_dilated(y, w2_pt, (1, 1), ((1, 1), (1, 1)),
                                 dimension_numbers=dn)
    y = _leaky(_bn_train_nchw(y, g2, b2))
    return x + y


if __name__ == "__main__":
    N, C, H, W = 2, 4, 16, 16          # channels=4 -> hidden = channels // 2 = 2
    Cmid = C // 2

    key = jax.random.PRNGKey(0)
    kx, kw1, kw2, kg1, kb1, kg2, kb2 = jax.random.split(key, 7)

    # Deterministic synthetic parameters (PyTorch OIHW weight layout, no bias).
    x_nchw = jax.random.normal(kx, (N, C, H, W), jnp.float32)
    w1_pt = jax.random.normal(kw1, (Cmid, C, 1, 1), jnp.float32) * 0.5
    w2_pt = jax.random.normal(kw2, (C, Cmid, 3, 3), jnp.float32) * 0.2
    g1 = 1.0 + 0.1 * jax.random.normal(kg1, (Cmid,), jnp.float32)
    b1 = 0.1 * jax.random.normal(kb1, (Cmid,), jnp.float32)
    g2 = 1.0 + 0.1 * jax.random.normal(kg2, (C,), jnp.float32)
    b2 = 0.1 * jax.random.normal(kb2, (C,), jnp.float32)

    # Kernel layouts: NHWC activations; bf16 matmul weights.
    #   w1: (Cin, Cmid).  w2: (tap, Cin, Cout) with tap = kh*3 + kw.
    x_nhwc = jnp.transpose(x_nchw, (0, 2, 3, 1))
    w1_bf = jnp.transpose(w1_pt[:, :, 0, 0], (1, 0)).astype(jnp.bfloat16)
    w2t_bf = jnp.transpose(w2_pt, (2, 3, 1, 0)).reshape(9, Cmid, C).astype(jnp.bfloat16)

    out_nhwc = residual_block_forward(x_nhwc, w1_bf, g1, b1, w2t_bf, g2, b2)
    out_nchw = jnp.transpose(out_nhwc, (0, 3, 1, 2))
    jax.block_until_ready(out_nchw)

    ref = residual_block_ref(x_nchw, w1_pt, g1, b1, w2_pt, g2, b2)
    max_err = float(jnp.max(jnp.abs(out_nchw - ref)))
    rel_err = float(jnp.linalg.norm(out_nchw - ref) / jnp.linalg.norm(ref))
    # bf16 MXU operands / bf16 HBM intermediates => compare against the f32
    # reference with bf16-level tolerances; structural bugs give O(1) errors.
    if not (max_err < 2e-1 and rel_err < 3e-2):
        raise AssertionError(
            f"Pallas kernel mismatch vs reference: max {max_err}, rel {rel_err}")

    print("KERNEL_OK")
</pallas_src>

<mosaic_0001>
module attributes {stable_mosaic.version = 11 : i64} {
  func.func @conv1_stats_kernel(%arg0: i32, %arg1: i32, %arg2: memref<1x16x16x4xf32, #tpu.memory_space<vmem>>, %arg3: memref<4x2xbf16, #tpu.memory_space<vmem>>, %arg4: memref<1x16x16x2xbf16, #tpu.memory_space<vmem>>, %arg5: memref<1x1x2x2xf32, #tpu.memory_space<vmem>>) attributes {dimension_semantics = [#tpu.dimension_semantics<parallel>, #tpu.dimension_semantics<parallel>], iteration_bounds = array<i64: 2, 1>, scalar_prefetch = 0 : i64, scratch_operands = 0 : i64, tpu.core_type = #tpu.core_type<tc>, window_params = [{transform_indices = @transform_0, window_bounds = array<i64: 1, 16, 16, 4>}, {pipeline_mode = #tpu.pipeline_mode<synchronous>, transform_indices = @transform_1, window_bounds = array<i64: 4, 2>}, {transform_indices = @transform_2, window_bounds = array<i64: 1, 16, 16, 2>}, {transform_indices = @transform_3, window_bounds = array<i64: 1, 1, 2, 2>}]} {
    %c0 = arith.constant 0 : index
    %c0_0 = arith.constant 0 : index
    %c0_1 = arith.constant 0 : index
    %c0_2 = arith.constant 0 : index
    %0 = vector.load %arg2[%c0, %c0_0, %c0_1, %c0_2] : memref<1x16x16x4xf32, #tpu.memory_space<vmem>>, vector<1x16x16x4xf32>
    %1 = vector.shape_cast %0 : vector<1x16x16x4xf32> to vector<256x4xf32>
    %2 = arith.truncf %1 : vector<256x4xf32> to vector<256x4xbf16>
    %c0_3 = arith.constant 0 : index
    %c0_4 = arith.constant 0 : index
    %3 = vector.load %arg3[%c0_3, %c0_4] : memref<4x2xbf16, #tpu.memory_space<vmem>>, vector<4x2xbf16>
    %cst = arith.constant dense<0.000000e+00> : vector<256x2xf32>
    %4 = tpu.matmul %2, %3, %cst {dimension_numbers = #tpu.dot_dimension_numbers<[1], [0], [0], [1], [0, 0, 1, 1], [], []>} : vector<256x4xbf16>, vector<4x2xbf16>, vector<256x2xf32> -> vector<256x2xf32>
    %cst_5 = arith.constant dense<0.000000e+00> : vector<2xf32>
    %5 = vector.multi_reduction <add>, %4, %cst_5 [0] : vector<256x2xf32> to vector<2xf32>
    %6 = vector.shape_cast %5 : vector<2xf32> to vector<1x2xf32>
    %7 = arith.mulf %4, %4 : vector<256x2xf32>
    %cst_6 = arith.constant dense<0.000000e+00> : vector<2xf32>
    %8 = vector.multi_reduction <add>, %7, %cst_6 [0] : vector<256x2xf32> to vector<2xf32>
    %9 = vector.shape_cast %8 : vector<2xf32> to vector<1x2xf32>
    %10 = tpu.concatenate %6, %9 in 0 : vector<1x2xf32>, vector<1x2xf32> -> vector<2x2xf32>
    %11 = vector.shape_cast %10 : vector<2x2xf32> to vector<1x1x2x2xf32>
    %c0_7 = arith.constant 0 : index
    %c0_8 = arith.constant 0 : index
    %c0_9 = arith.constant 0 : index
    %c0_10 = arith.constant 0 : index
    %12 = vector.load %arg5[%c0_7, %c0_8, %c0_9, %c0_10] : memref<1x1x2x2xf32, #tpu.memory_space<vmem>>, vector<1x1x2x2xf32>
    tpu.vector_store %arg5[%c0_7, %c0_8, %c0_9, %c0_10], %11 {strides = array<i32>} : memref<1x1x2x2xf32, #tpu.memory_space<vmem>>, vector<1x1x2x2xf32>,
    %13 = vector.shape_cast %4 : vector<256x2xf32> to vector<1x16x16x2xf32>
    %14 = arith.truncf %13 : vector<1x16x16x2xf32> to vector<1x16x16x2xbf16>
    %c0_11 = arith.constant 0 : index
    %c0_12 = arith.constant 0 : index
    %c0_13 = arith.constant 0 : index
    %c0_14 = arith.constant 0 : index
    %15 = vector.load %arg4[%c0_11, %c0_12, %c0_13, %c0_14] : memref<1x16x16x2xbf16, #tpu.memory_space<vmem>>, vector<1x16x16x2xbf16>
    tpu.vector_store %arg4[%c0_11, %c0_12, %c0_13, %c0_14], %14 {strides = array<i32>} : memref<1x16x16x2xbf16, #tpu.memory_space<vmem>>, vector<1x16x16x2xbf16>,
    return
  }
  func.func @transform_0(%arg0: i32, %arg1: i32) -> (i32, i32, i32, i32) {
    %c0_i32 = arith.constant 0 : i32
    %c0_i32_0 = arith.constant 0 : i32
    %c0_i32_1 = arith.constant 0 : i32
    return %arg0, %arg1, %c0_i32, %c0_i32_0 : i32, i32, i32, i32
  }
  func.func @transform_1(%arg0: i32, %arg1: i32) -> (i32, i32) {
    %c0_i32 = arith.constant 0 : i32
    %c0_i32_0 = arith.constant 0 : i32
    %c0_i32_1 = arith.constant 0 : i32
    return %c0_i32, %c0_i32_0 : i32, i32
  }
  func.func @transform_2(%arg0: i32, %arg1: i32) -> (i32, i32, i32, i32) {
    %c0_i32 = arith.constant 0 : i32
    %c0_i32_0 = arith.constant 0 : i32
    %c0_i32_1 = arith.constant 0 : i32
    return %arg0, %arg1, %c0_i32, %c0_i32_0 : i32, i32, i32, i32
  }
  func.func @transform_3(%arg0: i32, %arg1: i32) -> (i32, i32, i32, i32) {
    %c0_i32 = arith.constant 0 : i32
    %c0_i32_0 = arith.constant 0 : i32
    %c0_i32_1 = arith.constant 0 : i32
    return %arg0, %arg1, %c0_i32, %c0_i32_0 : i32, i32, i32, i32
  }
}

module attributes {stable_mosaic.version = 11 : i64} {
  func.func @conv3_stats_kernel(%arg0: i32, %arg1: memref<1x16x16x2xbf16, #tpu.memory_space<vmem>>, %arg2: memref<1x2xf32, #tpu.memory_space<vmem>>, %arg3: memref<1x2xf32, #tpu.memory_space<vmem>>, %arg4: memref<9x2x4xbf16, #tpu.memory_space<vmem>>, %arg5: memref<1x16x16x4xbf16, #tpu.memory_space<vmem>>, %arg6: memref<1x2x4xf32, #tpu.memory_space<vmem>>, %arg7: memref<18x18x2xf32, #tpu.memory_space<vmem>>, %arg8: memref<256x4xf32, #tpu.memory_space<vmem>>) attributes {dimension_semantics = [#tpu.dimension_semantics<parallel>], iteration_bounds = array<i64: 2>, scalar_prefetch = 0 : i64, scratch_operands = 2 : i64, tpu.core_type = #tpu.core_type<tc>, window_params = [{transform_indices = @transform_0, window_bounds = array<i64: 1, 16, 16, 2>}, {pipeline_mode = #tpu.pipeline_mode<synchronous>, transform_indices = @transform_1, window_bounds = array<i64: 1, 2>}, {pipeline_mode = #tpu.pipeline_mode<synchronous>, transform_indices = @transform_2, window_bounds = array<i64: 1, 2>}, {pipeline_mode = #tpu.pipeline_mode<synchronous>, transform_indices = @transform_3, window_bounds = array<i64: 9, 2, 4>}, {transform_indices = @transform_4, window_bounds = array<i64: 1, 16, 16, 4>}, {transform_indices = @transform_5, window_bounds = array<i64: 1, 2, 4>}]} {
    %c0 = arith.constant 0 : index
    %c0_0 = arith.constant 0 : index
    %c0_1 = arith.constant 0 : index
    %c0_2 = arith.constant 0 : index
    %0 = vector.load %arg1[%c0, %c0_0, %c0_1, %c0_2] : memref<1x16x16x2xbf16, #tpu.memory_space<vmem>>, vector<1x16x16x2xbf16>
    %1 = arith.extf %0 : vector<1x16x16x2xbf16> to vector<1x16x16x2xf32>
    %2 = vector.shape_cast %1 : vector<1x16x16x2xf32> to vector<16x16x2xf32>
    %c0_3 = arith.constant 0 : index
    %c0_4 = arith.constant 0 : index
    %3 = vector.load %arg2[%c0_3, %c0_4] : memref<1x2xf32, #tpu.memory_space<vmem>>, vector<1x2xf32>
    %4 = vector.shape_cast %3 : vector<1x2xf32> to vector<1x1x2xf32>
    %5 = vector.broadcast %4 : vector<1x1x2xf32> to vector<16x16x2xf32>
    %6 = arith.mulf %2, %5 : vector<16x16x2xf32>
    %c0_5 = arith.constant 0 : index
    %c0_6 = arith.constant 0 : index
    %7 = vector.load %arg3[%c0_5, %c0_6] : memref<1x2xf32, #tpu.memory_space<vmem>>, vector<1x2xf32>
    %8 = vector.shape_cast %7 : vector<1x2xf32> to vector<1x1x2xf32>
    %9 = vector.broadcast %8 : vector<1x1x2xf32> to vector<16x16x2xf32>
    %10 = arith.addf %6, %9 : vector<16x16x2xf32>
    %cst = arith.constant 0.000000e+00 : f32
    %11 = vector.broadcast %cst : f32 to vector<16x16x2xf32>
    %12 = arith.cmpf ogt, %10, %11 : vector<16x16x2xf32>
    %cst_7 = arith.constant 0.00999999977 : f32
    %13 = vector.broadcast %cst_7 : f32 to vector<16x16x2xf32>
    %14 = arith.mulf %13, %10 : vector<16x16x2xf32>
    %15 = arith.select %12, %10, %14 : vector<16x16x2xi1>, vector<16x16x2xf32>
    %cst_8 = arith.constant 0.000000e+00 : f32
    %16 = vector.broadcast %cst_8 : f32 to vector<1x18x2xf32>
    %cst_9 = arith.constant 0.000000e+00 : f32
    %17 = vector.broadcast %cst_9 : f32 to vector<18x1x2xf32>
    %c0_10 = arith.constant 0 : index
    %c0_11 = arith.constant 0 : index
    %c0_12 = arith.constant 0 : index
    %18 = vector.load %arg7[%c0_10, %c0_11, %c0_12] : memref<18x18x2xf32, #tpu.memory_space<vmem>>, vector<1x18x2xf32>
    tpu.vector_store %arg7[%c0_10, %c0_11, %c0_12], %16 {strides = array<i32>} : memref<18x18x2xf32, #tpu.memory_space<vmem>>, vector<1x18x2xf32>,
    %c17 = arith.constant 17 : index
    %c0_13 = arith.constant 0 : index
    %c0_14 = arith.constant 0 : index
    %19 = vector.load %arg7[%c17, %c0_13, %c0_14] : memref<18x18x2xf32, #tpu.memory_space<vmem>>, vector<1x18x2xf32>
    tpu.vector_store %arg7[%c17, %c0_13, %c0_14], %16 {strides = array<i32>} : memref<18x18x2xf32, #tpu.memory_space<vmem>>, vector<1x18x2xf32>,
    %c0_15 = arith.constant 0 : index
    %c0_16 = arith.constant 0 : index
    %c0_17 = arith.constant 0 : index
    %20 = vector.load %arg7[%c0_15, %c0_16, %c0_17] : memref<18x18x2xf32, #tpu.memory_space<vmem>>, vector<18x1x2xf32>
    tpu.vector_store %arg7[%c0_15, %c0_16, %c0_17], %17 {strides = array<i32>} : memref<18x18x2xf32, #tpu.memory_space<vmem>>, vector<18x1x2xf32>,
    %c0_18 = arith.constant 0 : index
    %c17_19 = arith.constant 17 : index
    %c0_20 = arith.constant 0 : index
    %21 = vector.load %arg7[%c0_18, %c17_19, %c0_20] : memref<18x18x2xf32, #tpu.memory_space<vmem>>, vector<18x1x2xf32>
    tpu.vector_store %arg7[%c0_18, %c17_19, %c0_20], %17 {strides = array<i32>} : memref<18x18x2xf32, #tpu.memory_space<vmem>>, vector<18x1x2xf32>,
    %c1 = arith.constant 1 : index
    %c1_21 = arith.constant 1 : index
    %c0_22 = arith.constant 0 : index
    %22 = vector.load %arg7[%c1, %c1_21, %c0_22] : memref<18x18x2xf32, #tpu.memory_space<vmem>>, vector<16x16x2xf32>
    tpu.vector_store %arg7[%c1, %c1_21, %c0_22], %15 {strides = array<i32>} : memref<18x18x2xf32, #tpu.memory_space<vmem>>, vector<16x16x2xf32>,
    %cst_23 = arith.constant 0.000000e+00 : f32
    %23 = vector.broadcast %cst_23 : f32 to vector<256x4xf32>
    %c0_24 = arith.constant 0 : index
    %c0_25 = arith.constant 0 : index
    %24 = vector.load %arg8[%c0_24, %c0_25] : memref<256x4xf32, #tpu.memory_space<vmem>>, vector<256x4xf32>
    tpu.vector_store %arg8[%c0_24, %c0_25], %23 {strides = array<i32>} : memref<256x4xf32, #tpu.memory_space<vmem>>, vector<256x4xf32>,
    %c0_26 = arith.constant 0 : index
    %c0_27 = arith.constant 0 : index
    %c0_28 = arith.constant 0 : index
    %25 = vector.load %arg7[%c0_26, %c0_27, %c0_28] : memref<18x18x2xf32, #tpu.memory_space<vmem>>, vector<16x16x2xf32>
    %26 = vector.shape_cast %25 : vector<16x16x2xf32> to vector<256x2xf32>
    %c0_29 = arith.constant 0 : index
    %c0_30 = arith.constant 0 : index
    %27 = vector.load %arg8[%c0_29, %c0_30] : memref<256x4xf32, #tpu.memory_space<vmem>>, vector<256x4xf32>
    %28 = arith.truncf %26 : vector<256x2xf32> to vector<256x2xbf16>
    %c0_31 = arith.constant 0 : index
    %c0_32 = arith.constant 0 : index
    %c0_33 = arith.constant 0 : index
    %29 = vector.load %arg4[%c0_31, %c0_32, %c0_33] : memref<9x2x4xbf16, #tpu.memory_space<vmem>>, vector<1x2x4xbf16>
    %30 = vector.shape_cast %29 : vector<1x2x4xbf16> to vector<2x4xbf16>
    %cst_34 = arith.constant dense<0.000000e+00> : vector<256x4xf32>
    %31 = tpu.matmul %28, %30, %cst_34 {dimension_numbers = #tpu.dot_dimension_numbers<[1], [0], [0], [1], [0, 0, 1, 1], [], []>} : vector<256x2xbf16>, vector<2x4xbf16>, vector<256x4xf32> -> vector<256x4xf32>
    %32 = arith.addf %27, %31 : vector<256x4xf32>
    %c0_35 = arith.constant 0 : index
    %c0_36 = arith.constant 0 : index
    %33 = vector.load %arg8[%c0_35, %c0_36] : memref<256x4xf32, #tpu.memory_space<vmem>>, vector<256x4xf32>
    tpu.vector_store %arg8[%c0_35, %c0_36], %32 {strides = array<i32>} : memref<256x4xf32, #tpu.memory_space<vmem>>, vector<256x4xf32>,
    %c0_37 = arith.constant 0 : index
    %c1_38 = arith.constant 1 : index
    %c0_39 = arith.constant 0 : index
    %34 = vector.load %arg7[%c0_37, %c1_38, %c0_39] : memref<18x18x2xf32, #tpu.memory_space<vmem>>, vector<16x16x2xf32>
    %35 = vector.shape_cast %34 : vector<16x16x2xf32> to vector<256x2xf32>
    %c0_40 = arith.constant 0 : index
    %c0_41 = arith.constant 0 : index
    %36 = vector.load %arg8[%c0_40, %c0_41] : memref<256x4xf32, #tpu.memory_space<vmem>>, vector<256x4xf32>
    %37 = arith.truncf %35 : vector<256x2xf32> to vector<256x2xbf16>
    %c1_42 = arith.constant 1 : index
    %c0_43 = arith.constant 0 : index
    %c0_44 = arith.constant 0 : index
    %38 = vector.load %arg4[%c1_42, %c0_43, %c0_44] : memref<9x2x4xbf16, #tpu.memory_space<vmem>>, vector<1x2x4xbf16>
    %39 = vector.shape_cast %38 : vector<1x2x4xbf16> to vector<2x4xbf16>
    %cst_45 = arith.constant dense<0.000000e+00> : vector<256x4xf32>
    %40 = tpu.matmul %37, %39, %cst_45 {dimension_numbers = #tpu.dot_dimension_numbers<[1], [0], [0], [1], [0, 0, 1, 1], [], []>} : vector<256x2xbf16>, vector<2x4xbf16>, vector<256x4xf32> -> vector<256x4xf32>
    %41 = arith.addf %36, %40 : vector<256x4xf32>
    %c0_46 = arith.constant 0 : index
    %c0_47 = arith.constant 0 : index
    %42 = vector.load %arg8[%c0_46, %c0_47] : memref<256x4xf32, #tpu.memory_space<vmem>>, vector<256x4xf32>
    tpu.vector_store %arg8[%c0_46, %c0_47], %41 {strides = array<i32>} : memref<256x4xf32, #tpu.memory_space<vmem>>, vector<256x4xf32>,
    %c0_48 = arith.constant 0 : index
    %c2 = arith.constant 2 : index
    %c0_49 = arith.constant 0 : index
    %43 = vector.load %arg7[%c0_48, %c2, %c0_49] : memref<18x18x2xf32, #tpu.memory_space<vmem>>, vector<16x16x2xf32>
    %44 = vector.shape_cast %43 : vector<16x16x2xf32> to vector<256x2xf32>
    %c0_50 = arith.constant 0 : index
    %c0_51 = arith.constant 0 : index
    %45 = vector.load %arg8[%c0_50, %c0_51] : memref<256x4xf32, #tpu.memory_space<vmem>>, vector<256x4xf32>
    %46 = arith.truncf %44 : vector<256x2xf32> to vector<256x2xbf16>
    %c2_52 = arith.constant 2 : index
    %c0_53 = arith.constant 0 : index
    %c0_54 = arith.constant 0 : index
    %47 = vector.load %arg4[%c2_52, %c0_53, %c0_54] : memref<9x2x4xbf16, #tpu.memory_space<vmem>>, vector<1x2x4xbf16>
    %48 = vector.shape_cast %47 : vector<1x2x4xbf16> to vector<2x4xbf16>
    %cst_55 = arith.constant dense<0.000000e+00> : vector<256x4xf32>
    %49 = tpu.matmul %46, %48, %cst_55 {dimension_numbers = #tpu.dot_dimension_numbers<[1], [0], [0], [1], [0, 0, 1, 1], [], []>} : vector<256x2xbf16>, vector<2x4xbf16>, vector<256x4xf32> -> vector<256x4xf32>
    %50 = arith.addf %45, %49 : vector<256x4xf32>
    %c0_56 = arith.constant 0 : index
    %c0_57 = arith.constant 0 : index
    %51 = vector.load %arg8[%c0_56, %c0_57] : memref<256x4xf32, #tpu.memory_space<vmem>>, vector<256x4xf32>
    tpu.vector_store %arg8[%c0_56, %c0_57], %50 {strides = array<i32>} : memref<256x4xf32, #tpu.memory_space<vmem>>, vector<256x4xf32>,
    %c1_58 = arith.constant 1 : index
    %c0_59 = arith.constant 0 : index
    %c0_60 = arith.constant 0 : index
    %52 = vector.load %arg7[%c1_58, %c0_59, %c0_60] : memref<18x18x2xf32, #tpu.memory_space<vmem>>, vector<16x16x2xf32>
    %53 = vector.shape_cast %52 : vector<16x16x2xf32> to vector<256x2xf32>
    %c0_61 = arith.constant 0 : index
    %c0_62 = arith.constant 0 : index
    %54 = vector.load %arg8[%c0_61, %c0_62] : memref<256x4xf32, #tpu.memory_space<vmem>>, vector<256x4xf32>
    %55 = arith.truncf %53 : vector<256x2xf32> to vector<256x2xbf16>
    %c3 = arith.constant 3 : index
    %c0_63 = arith.constant 0 : index
    %c0_64 = arith.constant 0 : index
    %56 = vector.load %arg4[%c3, %c0_63, %c0_64] : memref<9x2x4xbf16, #tpu.memory_space<vmem>>, vector<1x2x4xbf16>
    %57 = vector.shape_cast %56 : vector<1x2x4xbf16> to vector<2x4xbf16>
    %cst_65 = arith.constant dense<0.000000e+00> : vector<256x4xf32>
    %58 = tpu.matmul %55, %57, %cst_65 {dimension_numbers = #tpu.dot_dimension_numbers<[1], [0], [0], [1], [0, 0, 1, 1], [], []>} : vector<256x2xbf16>, vector<2x4xbf16>, vector<256x4xf32> -> vector<256x4xf32>
    %59 = arith.addf %54, %58 : vector<256x4xf32>
    %c0_66 = arith.constant 0 : index
    %c0_67 = arith.constant 0 : index
    %60 = vector.load %arg8[%c0_66, %c0_67] : memref<256x4xf32, #tpu.memory_space<vmem>>, vector<256x4xf32>
    tpu.vector_store %arg8[%c0_66, %c0_67], %59 {strides = array<i32>} : memref<256x4xf32, #tpu.memory_space<vmem>>, vector<256x4xf32>,
    %c1_68 = arith.constant 1 : index
    %c1_69 = arith.constant 1 : index
    %c0_70 = arith.constant 0 : index
    %61 = vector.load %arg7[%c1_68, %c1_69, %c0_70] : memref<18x18x2xf32, #tpu.memory_space<vmem>>, vector<16x16x2xf32>
    %62 = vector.shape_cast %61 : vector<16x16x2xf32> to vector<256x2xf32>
    %c0_71 = arith.constant 0 : index
    %c0_72 = arith.constant 0 : index
    %63 = vector.load %arg8[%c0_71, %c0_72] : memref<256x4xf32, #tpu.memory_space<vmem>>, vector<256x4xf32>
    %64 = arith.truncf %62 : vector<256x2xf32> to vector<256x2xbf16>
    %c4 = arith.constant 4 : index
    %c0_73 = arith.constant 0 : index
    %c0_74 = arith.constant 0 : index
    %65 = vector.load %arg4[%c4, %c0_73, %c0_74] : memref<9x2x4xbf16, #tpu.memory_space<vmem>>, vector<1x2x4xbf16>
    %66 = vector.shape_cast %65 : vector<1x2x4xbf16> to vector<2x4xbf16>
    %cst_75 = arith.constant dense<0.000000e+00> : vector<256x4xf32>
    %67 = tpu.matmul %64, %66, %cst_75 {dimension_numbers = #tpu.dot_dimension_numbers<[1], [0], [0], [1], [0, 0, 1, 1], [], []>} : vector<256x2xbf16>, vector<2x4xbf16>, vector<256x4xf32> -> vector<256x4xf32>
    %68 = arith.addf %63, %67 : vector<256x4xf32>
    %c0_76 = arith.constant 0 : index
    %c0_77 = arith.constant 0 : index
    %69 = vector.load %arg8[%c0_76, %c0_77] : memref<256x4xf32, #tpu.memory_space<vmem>>, vector<256x4xf32>
    tpu.vector_store %arg8[%c0_76, %c0_77], %68 {strides = array<i32>} : memref<256x4xf32, #tpu.memory_space<vmem>>, vector<256x4xf32>,
    %c1_78 = arith.constant 1 : index
    %c2_79 = arith.constant 2 : index
    %c0_80 = arith.constant 0 : index
    %70 = vector.load %arg7[%c1_78, %c2_79, %c0_80] : memref<18x18x2xf32, #tpu.memory_space<vmem>>, vector<16x16x2xf32>
    %71 = vector.shape_cast %70 : vector<16x16x2xf32> to vector<256x2xf32>
    %c0_81 = arith.constant 0 : index
    %c0_82 = arith.constant 0 : index
    %72 = vector.load %arg8[%c0_81, %c0_82] : memref<256x4xf32, #tpu.memory_space<vmem>>, vector<256x4xf32>
    %73 = arith.truncf %71 : vector<256x2xf32> to vector<256x2xbf16>
    %c5 = arith.constant 5 : index
    %c0_83 = arith.constant 0 : index
    %c0_84 = arith.constant 0 : index
    %74 = vector.load %arg4[%c5, %c0_83, %c0_84] : memref<9x2x4xbf16, #tpu.memory_space<vmem>>, vector<1x2x4xbf16>
    %75 = vector.shape_cast %74 : vector<1x2x4xbf16> to vector<2x4xbf16>
    %cst_85 = arith.constant dense<0.000000e+00> : vector<256x4xf32>
    %76 = tpu.matmul %73, %75, %cst_85 {dimension_numbers = #tpu.dot_dimension_numbers<[1], [0], [0], [1], [0, 0, 1, 1], [], []>} : vector<256x2xbf16>, vector<2x4xbf16>, vector<256x4xf32> -> vector<256x4xf32>
    %77 = arith.addf %72, %76 : vector<256x4xf32>
    %c0_86 = arith.constant 0 : index
    %c0_87 = arith.constant 0 : index
    %78 = vector.load %arg8[%c0_86, %c0_87] : memref<256x4xf32, #tpu.memory_space<vmem>>, vector<256x4xf32>
    tpu.vector_store %arg8[%c0_86, %c0_87], %77 {strides = array<i32>} : memref<256x4xf32, #tpu.memory_space<vmem>>, vector<256x4xf32>,
    %c2_88 = arith.constant 2 : index
    %c0_89 = arith.constant 0 : index
    %c0_90 = arith.constant 0 : index
    %79 = vector.load %arg7[%c2_88, %c0_89, %c0_90] : memref<18x18x2xf32, #tpu.memory_space<vmem>>, vector<16x16x2xf32>
    %80 = vector.shape_cast %79 : vector<16x16x2xf32> to vector<256x2xf32>
    %c0_91 = arith.constant 0 : index
    %c0_92 = arith.constant 0 : index
    %81 = vector.load %arg8[%c0_91, %c0_92] : memref<256x4xf32, #tpu.memory_space<vmem>>, vector<256x4xf32>
    %82 = arith.truncf %80 : vector<256x2xf32> to vector<256x2xbf16>
    %c6 = arith.constant 6 : index
    %c0_93 = arith.constant 0 : index
    %c0_94 = arith.constant 0 : index
    %83 = vector.load %arg4[%c6, %c0_93, %c0_94] : memref<9x2x4xbf16, #tpu.memory_space<vmem>>, vector<1x2x4xbf16>
    %84 = vector.shape_cast %83 : vector<1x2x4xbf16> to vector<2x4xbf16>
    %cst_95 = arith.constant dense<0.000000e+00> : vector<256x4xf32>
    %85 = tpu.matmul %82, %84, %cst_95 {dimension_numbers = #tpu.dot_dimension_numbers<[1], [0], [0], [1], [0, 0, 1, 1], [], []>} : vector<256x2xbf16>, vector<2x4xbf16>, vector<256x4xf32> -> vector<256x4xf32>
    %86 = arith.addf %81, %85 : vector<256x4xf32>
    %c0_96 = arith.constant 0 : index
    %c0_97 = arith.constant 0 : index
    %87 = vector.load %arg8[%c0_96, %c0_97] : memref<256x4xf32, #tpu.memory_space<vmem>>, vector<256x4xf32>
    tpu.vector_store %arg8[%c0_96, %c0_97], %86 {strides = array<i32>} : memref<256x4xf32, #tpu.memory_space<vmem>>, vector<256x4xf32>,
    %c2_98 = arith.constant 2 : index
    %c1_99 = arith.constant 1 : index
    %c0_100 = arith.constant 0 : index
    %88 = vector.load %arg7[%c2_98, %c1_99, %c0_100] : memref<18x18x2xf32, #tpu.memory_space<vmem>>, vector<16x16x2xf32>
    %89 = vector.shape_cast %88 : vector<16x16x2xf32> to vector<256x2xf32>
    %c0_101 = arith.constant 0 : index
    %c0_102 = arith.constant 0 : index
    %90 = vector.load %arg8[%c0_101, %c0_102] : memref<256x4xf32, #tpu.memory_space<vmem>>, vector<256x4xf32>
    %91 = arith.truncf %89 : vector<256x2xf32> to vector<256x2xbf16>
    %c7 = arith.constant 7 : index
    %c0_103 = arith.constant 0 : index
    %c0_104 = arith.constant 0 : index
    %92 = vector.load %arg4[%c7, %c0_103, %c0_104] : memref<9x2x4xbf16, #tpu.memory_space<vmem>>, vector<1x2x4xbf16>
    %93 = vector.shape_cast %92 : vector<1x2x4xbf16> to vector<2x4xbf16>
    %cst_105 = arith.constant dense<0.000000e+00> : vector<256x4xf32>
    %94 = tpu.matmul %91, %93, %cst_105 {dimension_numbers = #tpu.dot_dimension_numbers<[1], [0], [0], [1], [0, 0, 1, 1], [], []>} : vector<256x2xbf16>, vector<2x4xbf16>, vector<256x4xf32> -> vector<256x4xf32>
    %95 = arith.addf %90, %94 : vector<256x4xf32>
    %c0_106 = arith.constant 0 : index
    %c0_107 = arith.constant 0 : index
    %96 = vector.load %arg8[%c0_106, %c0_107] : memref<256x4xf32, #tpu.memory_space<vmem>>, vector<256x4xf32>
    tpu.vector_store %arg8[%c0_106, %c0_107], %95 {strides = array<i32>} : memref<256x4xf32, #tpu.memory_space<vmem>>, vector<256x4xf32>,
    %c2_108 = arith.constant 2 : index
    %c2_109 = arith.constant 2 : index
    %c0_110 = arith.constant 0 : index
    %97 = vector.load %arg7[%c2_108, %c2_109, %c0_110] : memref<18x18x2xf32, #tpu.memory_space<vmem>>, vector<16x16x2xf32>
    %98 = vector.shape_cast %97 : vector<16x16x2xf32> to vector<256x2xf32>
    %c0_111 = arith.constant 0 : index
    %c0_112 = arith.constant 0 : index
    %99 = vector.load %arg8[%c0_111, %c0_112] : memref<256x4xf32, #tpu.memory_space<vmem>>, vector<256x4xf32>
    %100 = arith.truncf %98 : vector<256x2xf32> to vector<256x2xbf16>
    %c8 = arith.constant 8 : index
    %c0_113 = arith.constant 0 : index
    %c0_114 = arith.constant 0 : index
    %101 = vector.load %arg4[%c8, %c0_113, %c0_114] : memref<9x2x4xbf16, #tpu.memory_space<vmem>>, vector<1x2x4xbf16>
    %102 = vector.shape_cast %101 : vector<1x2x4xbf16> to vector<2x4xbf16>
    %cst_115 = arith.constant dense<0.000000e+00> : vector<256x4xf32>
    %103 = tpu.matmul %100, %102, %cst_115 {dimension_numbers = #tpu.dot_dimension_numbers<[1], [0], [0], [1], [0, 0, 1, 1], [], []>} : vector<256x2xbf16>, vector<2x4xbf16>, vector<256x4xf32> -> vector<256x4xf32>
    %104 = arith.addf %99, %103 : vector<256x4xf32>
    %c0_116 = arith.constant 0 : index
    %c0_117 = arith.constant 0 : index
    %105 = vector.load %arg8[%c0_116, %c0_117] : memref<256x4xf32, #tpu.memory_space<vmem>>, vector<256x4xf32>
    tpu.vector_store %arg8[%c0_116, %c0_117], %104 {strides = array<i32>} : memref<256x4xf32, #tpu.memory_space<vmem>>, vector<256x4xf32>,
    %c0_118 = arith.constant 0 : index
    %c0_119 = arith.constant 0 : index
    %106 = vector.load %arg8[%c0_118, %c0_119] : memref<256x4xf32, #tpu.memory_space<vmem>>, vector<256x4xf32>
    %cst_120 = arith.constant dense<0.000000e+00> : vector<4xf32>
    %107 = vector.multi_reduction <add>, %106, %cst_120 [0] : vector<256x4xf32> to vector<4xf32>
    %108 = vector.shape_cast %107 : vector<4xf32> to vector<1x4xf32>
    %109 = arith.mulf %106, %106 : vector<256x4xf32>
    %cst_121 = arith.constant dense<0.000000e+00> : vector<4xf32>
    %110 = vector.multi_reduction <add>, %109, %cst_121 [0] : vector<256x4xf32> to vector<4xf32>
    %111 = vector.shape_cast %110 : vector<4xf32> to vector<1x4xf32>
    %112 = tpu.concatenate %108, %111 in 0 : vector<1x4xf32>, vector<1x4xf32> -> vector<2x4xf32>
    %113 = vector.shape_cast %112 : vector<2x4xf32> to vector<1x2x4xf32>
    %c0_122 = arith.constant 0 : index
    %c0_123 = arith.constant 0 : index
    %c0_124 = arith.constant 0 : index
    %114 = vector.load %arg6[%c0_122, %c0_123, %c0_124] : memref<1x2x4xf32, #tpu.memory_space<vmem>>, vector<1x2x4xf32>
    tpu.vector_store %arg6[%c0_122, %c0_123, %c0_124], %113 {strides = array<i32>} : memref<1x2x4xf32, #tpu.memory_space<vmem>>, vector<1x2x4xf32>,
    %115 = vector.shape_cast %106 : vector<256x4xf32> to vector<1x16x16x4xf32>
    %116 = arith.truncf %115 : vector<1x16x16x4xf32> to vector<1x16x16x4xbf16>
    %c0_125 = arith.constant 0 : index
    %c0_126 = arith.constant 0 : index
    %c0_127 = arith.constant 0 : index
    %c0_128 = arith.constant 0 : index
    %117 = vector.load %arg5[%c0_125, %c0_126, %c0_127, %c0_128] : memref<1x16x16x4xbf16, #tpu.memory_space<vmem>>, vector<1x16x16x4xbf16>
    tpu.vector_store %arg5[%c0_125, %c0_126, %c0_127, %c0_128], %116 {strides = array<i32>} : memref<1x16x16x4xbf16, #tpu.memory_space<vmem>>, vector<1x16x16x4xbf16>,
    return
  }
  func.func @transform_0(%arg0: i32) -> (i32, i32, i32, i32) {
    %c0_i32 = arith.constant 0 : i32
    %c0_i32_0 = arith.constant 0 : i32
    %c0_i32_1 = arith.constant 0 : i32
    %c0_i32_2 = arith.constant 0 : i32
    return %arg0, %c0_i32, %c0_i32_0, %c0_i32_1 : i32, i32, i32, i32
  }
  func.func @transform_1(%arg0: i32) -> (i32, i32) {
    %c0_i32 = arith.constant 0 : i32
    %c0_i32_0 = arith.constant 0 : i32
    %c0_i32_1 = arith.constant 0 : i32
    return %c0_i32, %c0_i32_0 : i32, i32
  }
  func.func @transform_2(%arg0: i32) -> (i32, i32) {
    %c0_i32 = arith.constant 0 : i32
    %c0_i32_0 = arith.constant 0 : i32
    %c0_i32_1 = arith.constant 0 : i32
    return %c0_i32, %c0_i32_0 : i32, i32
  }
  func.func @transform_3(%arg0: i32) -> (i32, i32, i32) {
    %c0_i32 = arith.constant 0 : i32
    %c0_i32_0 = arith.constant 0 : i32
    %c0_i32_1 = arith.constant 0 : i32
    %c0_i32_2 = arith.constant 0 : i32
    return %c0_i32, %c0_i32_0, %c0_i32_1 : i32, i32, i32
  }
  func.func @transform_4(%arg0: i32) -> (i32, i32, i32, i32) {
    %c0_i32 = arith.constant 0 : i32
    %c0_i32_0 = arith.constant 0 : i32
    %c0_i32_1 = arith.constant 0 : i32
    %c0_i32_2 = arith.constant 0 : i32
    return %arg0, %c0_i32, %c0_i32_0, %c0_i32_1 : i32, i32, i32, i32
  }
  func.func @transform_5(%arg0: i32) -> (i32, i32, i32) {
    %c0_i32 = arith.constant 0 : i32
    %c0_i32_0 = arith.constant 0 : i32
    %c0_i32_1 = arith.constant 0 : i32
    return %arg0, %c0_i32, %c0_i32_0 : i32, i32, i32
  }
}

module attributes {stable_mosaic.version = 11 : i64} {
  func.func @bn_residual_kernel(%arg0: i32, %arg1: i32, %arg2: memref<1x16x16x4xf32, #tpu.memory_space<vmem>>, %arg3: memref<1x16x16x4xbf16, #tpu.memory_space<vmem>>, %arg4: memref<1x4xf32, #tpu.memory_space<vmem>>, %arg5: memref<1x4xf32, #tpu.memory_space<vmem>>, %arg6: memref<1x16x16x4xf32, #tpu.memory_space<vmem>>) attributes {dimension_semantics = [#tpu.dimension_semantics<parallel>, #tpu.dimension_semantics<parallel>], iteration_bounds = array<i64: 2, 1>, scalar_prefetch = 0 : i64, scratch_operands = 0 : i64, tpu.core_type = #tpu.core_type<tc>, window_params = [{transform_indices = @transform_0, window_bounds = array<i64: 1, 16, 16, 4>}, {transform_indices = @transform_1, window_bounds = array<i64: 1, 16, 16, 4>}, {pipeline_mode = #tpu.pipeline_mode<synchronous>, transform_indices = @transform_2, window_bounds = array<i64: 1, 4>}, {pipeline_mode = #tpu.pipeline_mode<synchronous>, transform_indices = @transform_3, window_bounds = array<i64: 1, 4>}, {transform_indices = @transform_4, window_bounds = array<i64: 1, 16, 16, 4>}]} {
    %c0 = arith.constant 0 : index
    %c0_0 = arith.constant 0 : index
    %c0_1 = arith.constant 0 : index
    %c0_2 = arith.constant 0 : index
    %0 = vector.load %arg3[%c0, %c0_0, %c0_1, %c0_2] : memref<1x16x16x4xbf16, #tpu.memory_space<vmem>>, vector<1x16x16x4xbf16>
    %1 = arith.extf %0 : vector<1x16x16x4xbf16> to vector<1x16x16x4xf32>
    %c0_3 = arith.constant 0 : index
    %c0_4 = arith.constant 0 : index
    %2 = vector.load %arg4[%c0_3, %c0_4] : memref<1x4xf32, #tpu.memory_space<vmem>>, vector<1x4xf32>
    %3 = vector.shape_cast %2 : vector<1x4xf32> to vector<1x1x1x4xf32>
    %4 = vector.broadcast %3 : vector<1x1x1x4xf32> to vector<1x16x16x4xf32>
    %5 = arith.mulf %1, %4 : vector<1x16x16x4xf32>
    %c0_5 = arith.constant 0 : index
    %c0_6 = arith.constant 0 : index
    %6 = vector.load %arg5[%c0_5, %c0_6] : memref<1x4xf32, #tpu.memory_space<vmem>>, vector<1x4xf32>
    %7 = vector.shape_cast %6 : vector<1x4xf32> to vector<1x1x1x4xf32>
    %8 = vector.broadcast %7 : vector<1x1x1x4xf32> to vector<1x16x16x4xf32>
    %9 = arith.addf %5, %8 : vector<1x16x16x4xf32>
    %c0_7 = arith.constant 0 : index
    %c0_8 = arith.constant 0 : index
    %c0_9 = arith.constant 0 : index
    %c0_10 = arith.constant 0 : index
    %10 = vector.load %arg2[%c0_7, %c0_8, %c0_9, %c0_10] : memref<1x16x16x4xf32, #tpu.memory_space<vmem>>, vector<1x16x16x4xf32>
    %cst = arith.constant 0.000000e+00 : f32
    %11 = vector.broadcast %cst : f32 to vector<1x16x16x4xf32>
    %12 = arith.cmpf ogt, %9, %11 : vector<1x16x16x4xf32>
    %cst_11 = arith.constant 0.00999999977 : f32
    %13 = vector.broadcast %cst_11 : f32 to vector<1x16x16x4xf32>
    %14 = arith.mulf %13, %9 : vector<1x16x16x4xf32>
    %15 = arith.select %12, %9, %14 : vector<1x16x16x4xi1>, vector<1x16x16x4xf32>
    %16 = arith.addf %10, %15 : vector<1x16x16x4xf32>
    %c0_12 = arith.constant 0 : index
    %c0_13 = arith.constant 0 : index
    %c0_14 = arith.constant 0 : index
    %c0_15 = arith.constant 0 : index
    %17 = vector.load %arg6[%c0_12, %c0_13, %c0_14, %c0_15] : memref<1x16x16x4xf32, #tpu.memory_space<vmem>>, vector<1x16x16x4xf32>
    tpu.vector_store %arg6[%c0_12, %c0_13, %c0_14, %c0_15], %16 {strides = array<i32>} : memref<1x16x16x4xf32, #tpu.memory_space<vmem>>, vector<1x16x16x4xf32>,
    return
  }
  func.func @transform_0(%arg0: i32, %arg1: i32) -> (i32, i32, i32, i32) {
    %c0_i32 = arith.constant 0 : i32
    %c0_i32_0 = arith.constant 0 : i32
    %c0_i32_1 = arith.constant 0 : i32
    return %arg0, %arg1, %c0_i32, %c0_i32_0 : i32, i32, i32, i32
  }
  func.func @transform_1(%arg0: i32, %arg1: i32) -> (i32, i32, i32, i32) {
    %c0_i32 = arith.constant 0 : i32
    %c0_i32_0 = arith.constant 0 : i32
    %c0_i32_1 = arith.constant 0 : i32
    return %arg0, %arg1, %c0_i32, %c0_i32_0 : i32, i32, i32, i32
  }
  func.func @transform_2(%arg0: i32, %arg1: i32) -> (i32, i32) {
    %c0_i32 = arith.constant 0 : i32
    %c0_i32_0 = arith.constant 0 : i32
    %c0_i32_1 = arith.constant 0 : i32
    return %c0_i32, %c0_i32_0 : i32, i32
  }
  func.func @transform_3(%arg0: i32, %arg1: i32) -> (i32, i32) {
    %c0_i32 = arith.constant 0 : i32
    %c0_i32_0 = arith.constant 0 : i32
    %c0_i32_1 = arith.constant 0 : i32
    return %c0_i32, %c0_i32_0 : i32, i32
  }
  func.func @transform_4(%arg0: i32, %arg1: i32) -> (i32, i32, i32, i32) {
    %c0_i32 = arith.constant 0 : i32
    %c0_i32_0 = arith.constant 0 : i32
    %c0_i32_1 = arith.constant 0 : i32
    return %arg0, %arg1, %c0_i32, %c0_i32_0 : i32, i32, i32, i32
  }
}

</mosaic_0001>

<llo_original>
// kernel: residual_block_forward.3
$region0: #{residual_block_forward.3}
  #allocation0 [shape = 'u32[]', space=smem, size = 0x4, offset = 0x4, fixed_abs, tag = 'smem constant byte address 0x4 - core index']
  #allocation1 [shape = 'u32[72,128]{1,0:T(1,128)}', space=vmem, size = 0x9000, scoped, tag = 'internal scratch']
  %s0 = inlined_call_operand.vmem [shape: f32[2,16,16,4], index: 0, kind: input, shape index: {}]
  %s1 = inlined_call_operand.vmem [shape: bf16[4,2], index: 1, kind: input, shape index: {}]
  %s2 = inlined_call_operand.vmem [shape: bf16[2,16,16,2], index: 2, kind: output, shape index: {0}]
  %s3 = inlined_call_operand.vmem [shape: f32[2,1,2,2], index: 3, kind: output, shape index: {1}]
  %4 = xla_tuple %s2, %s3
  %s5 = sld [smem:[#allocation0]]
  $region49: #{residual_block_forward.3} parent=0
    _
  %s7 = ssub.s32 1, %s5
  %s8 = scalar_select 0, %s7, %s5
  loop: start=0, step=1, limit=4
  $region2: #{residual_block_forward.3} parent=0 // loop_pre_header
    _
  $region3: #{residual_block_forward.3} parent=0 // loop_header
    %s10 = sphi 0, %s14
    %p11 = scmp.ge.s32.totalorder %s10, 4
    %s17 = sphi 0, %s29
    %s18 = sphi 0, %s25
    %s19 = sphi 0, %s17
    %s20 = sphi 0, %s18
    %s21 = sphi 0, %s19
    %s22 = sphi 0, %s20
    %s34 = sphi 0, %s36
    %s37 = sphi 0, %s34
    %s38 = sphi 0, %s37
    %s54 = sphi 0, %s38
    %s58 = sphi 0, %s58
    %s60 = sphi 0, %s58
    %s61 = sphi 0, %s60
    %s75 = sphi 0, %s61
    %s83 = sphi 0, %s85
    %s86 = sphi 0, %s83
    %s87 = sphi 0, %s86
    %s103 = sphi 0, %s87
    %s111 = sphi 0, %s113
    %s114 = sphi 0, %s111
    %s115 = sphi 0, %s114
    %s131 = sphi 0, %s115
  $region4: #{residual_block_forward.3} parent=0 // loop_header_branch
    %13 = sbr.rel (%p11) target = $region8
  $region5: #{residual_block_forward.3} parent=0 // loop_body
    %s15 = ssub.s32 %s10, 1
    %s16 = ssub.s32 %s10, 2
    %s23 = sadd.s32 1, %s18
    %p24 = scmp.ge.s32.totalorder %s23, 1
    %s25 = scalar_select %p24, 0, %s23
    %s26 = sadd.s32 1, %s17
    %s27 = scalar_select %p24, %s26, %s17
    %p28 = scmp.ge.s32.totalorder %s27, 2
    %s29 = scalar_select %p28, 0, %s27
    %s30 = ssub.s32 %s17, %s29
    %s31 = ssub.s32 %s18, %s25
    %s32 = sor.u32 %s30, %s31
    %p33 = scmp.eq.s32.totalorder %s32, 0
    %s35 = sadd.s32 %s34, 1
    %s36 = scalar_select %p33, %s34, %s35
    %p39 = pneg %p33
    %p40 = scmp.eq.s32.totalorder %s10, 1
    %p41 = por %p39, %p40
    %p42 = scmp.ne.s32.totalorder %s34, %s37
    %p43 = scmp.eq.s32.totalorder %s10, 0
    %p44 = por %p42, %p43
    %p45 = scmp.ne.s32.totalorder %s34, %s37
    %p46 = scmp.eq.s32.totalorder %s15, 1
    %p47 = por %p45, %p46
    %p48 = scmp.ne.s32.totalorder %s37, %s38
    %p49 = scmp.eq.s32.totalorder %s15, 0
    %p50 = por %p48, %p49
    %p51 = scmp.ne.s32.totalorder %s37, %s38
    %p52 = scmp.eq.s32.totalorder %s16, 1
    %p53 = por %p51, %p52
    %p55 = scmp.ne.s32.totalorder %s38, %s54
    %p56 = scmp.eq.s32.totalorder %s16, 0
    %p57 = por %p55, %p56
    %s59 = sadd.s32 %s58, 1
    %p62 = scmp.eq.s32.totalorder %s10, 1
    %p63 = scmp.ne.s32.totalorder %s58, %s60
    %p64 = scmp.eq.s32.totalorder %s10, 0
    %p65 = por %p63, %p64
    %p66 = scmp.ne.s32.totalorder %s58, %s60
    %p67 = scmp.eq.s32.totalorder %s15, 1
    %p68 = por %p66, %p67
    %p69 = scmp.ne.s32.totalorder %s60, %s61
    %p70 = scmp.eq.s32.totalorder %s15, 0
    %p71 = por %p69, %p70
    %p72 = scmp.ne.s32.totalorder %s60, %s61
    %p73 = scmp.eq.s32.totalorder %s16, 1
    %p74 = por %p72, %p73
    %p76 = scmp.ne.s32.totalorder %s61, %s75
    %p77 = scmp.eq.s32.totalorder %s16, 0
    %p78 = por %p76, %p77
    %s79 = ssub.s32 %s17, %s29
    %s80 = ssub.s32 %s18, %s25
    %s81 = sor.u32 %s79, %s80
    %p82 = scmp.eq.s32.totalorder %s81, 0
    %s84 = sadd.s32 %s83, 1
    %s85 = scalar_select %p82, %s83, %s84
    %p88 = pneg %p82
    %p89 = scmp.eq.s32.totalorder %s10, 1
    %p90 = por %p88, %p89
    %p91 = scmp.ne.s32.totalorder %s83, %s86
    %p92 = scmp.eq.s32.totalorder %s10, 0
    %p93 = por %p91, %p92
    %p94 = scmp.ne.s32.totalorder %s83, %s86
    %p95 = scmp.eq.s32.totalorder %s15, 1
    %p96 = por %p94, %p95
    %p97 = scmp.ne.s32.totalorder %s86, %s87
    %p98 = scmp.eq.s32.totalorder %s15, 0
    %p99 = por %p97, %p98
    %p100 = scmp.ne.s32.totalorder %s86, %s87
    %p101 = scmp.eq.s32.totalorder %s16, 1
    %p102 = por %p100, %p101
    %p104 = scmp.ne.s32.totalorder %s87, %s103
    %p105 = scmp.eq.s32.totalorder %s16, 0
    %p106 = por %p104, %p105
    %s107 = ssub.s32 %s17, %s29
    %s108 = ssub.s32 %s18, %s25
    %s109 = sor.u32 %s107, %s108
    %p110 = scmp.eq.s32.totalorder %s109, 0
    %s112 = sadd.s32 %s111, 1
    %s113 = scalar_select %p110, %s111, %s112
    %p116 = pneg %p110
    %p117 = scmp.eq.s32.totalorder %s10, 1
    %p118 = por %p116, %p117
    %p119 = scmp.ne.s32.totalorder %s111, %s114
    %p120 = scmp.eq.s32.totalorder %s10, 0
    %p121 = por %p119, %p120
    %p122 = scmp.ne.s32.totalorder %s111, %s114
    %p123 = scmp.eq.s32.totalorder %s15, 1
    %p124 = por %p122, %p123
    %p125 = scmp.ne.s32.totalorder %s114, %s115
    %p126 = scmp.eq.s32.totalorder %s15, 0
    %p127 = por %p125, %p126
    %p128 = scmp.ne.s32.totalorder %s114, %s115
    %p129 = scmp.eq.s32.totalorder %s16, 1
    %p130 = por %p128, %p129
    %p132 = scmp.ne.s32.totalorder %s115, %s131
    %p133 = scmp.eq.s32.totalorder %s16, 0
    %p134 = por %p132, %p133
    %p135 = scmp.le.s32.totalorder 1, %s10
    %p136 = scmp.lt.s32.totalorder %s10, 3
    %p137 = pnand %p135, %p136
    %p138 = pneg %p137
    // Predicated region
    $region9: #{residual_block_forward.3} parent=5 // pred_check
      _
    $region10: #{residual_block_forward.3} parent=5 // pred_check_branch
      %140 = sbr.rel (%p137) target = $region12
    $region11: #{residual_block_forward.3} parent=5 // pred_region
      %s141 = ssub.s32 %s10, 1
      // Predicated region
      $region13: #{residual_block_forward.3} parent=11 // pred_check
        %p142 = pneg %p71
      $region14: #{residual_block_forward.3} parent=11 // pred_check_branch
        %144 = sbr.rel (%p142) target = $region16
      $region15: #{residual_block_forward.3} parent=11 // pred_region
        _
      $region16: #{residual_block_forward.3} parent=11 // pred_fallthru
        _
    $region12: #{residual_block_forward.3} parent=5 // pred_fallthru
      _
    %p145 = scmp.lt.s32.totalorder %s10, 2
    // Predicated region
    $region17: #{residual_block_forward.3} parent=5 // pred_check
      %p146 = pneg %p145
    $region18: #{residual_block_forward.3} parent=5 // pred_check_branch
      %148 = sbr.rel (%p146) target = $region20
    $region19: #{residual_block_forward.3} parent=5 // pred_region
      // Predicated region
      $region21: #{residual_block_forward.3} parent=19 // pred_check
        %p149 = pneg %p44
      $region22: #{residual_block_forward.3} parent=19 // pred_check_branch
        %151 = sbr.rel (%p149) target = $region24
      $region23: #{residual_block_forward.3} parent=19 // pred_region
        %s152 = smul.u32 16, %s18
        %p153 = scmp.lt.s32.totalorder %s17, 1
        %s154 = scalar_select %p153, %s17, 1
        %p155 = scmp.lt.s32.totalorder %s152, 15
        %s156 = scalar_select %p155, %s152, 15
        %s157 = smul.addr %s156, 2
        %s158 = smul.addr %s154, 32
        %s159 = sadd.s32 %s157, %s158
        %s160 = smul.addr %s159, 8
        %s161 = scalar_lea.vmem %s0, %s160
        %s162 = smul.u32 16, %s18
      $region24: #{residual_block_forward.3} parent=19 // pred_fallthru
        _
    $region20: #{residual_block_forward.3} parent=5 // pred_fallthru
      _
    %p163 = scmp.le.s32.totalorder 1, %s10
    %p164 = scmp.lt.s32.totalorder %s10, 3
    %p165 = pnand %p163, %p164
    %p166 = pneg %p165
    // Predicated region
    $region25: #{residual_block_forward.3} parent=5 // pred_check
      _
    $region26: #{residual_block_forward.3} parent=5 // pred_check_branch
      %168 = sbr.rel (%p165) target = $region28
    $region27: #{residual_block_forward.3} parent=5 // pred_region
      %s169 = ssub.s32 %s10, 1
      %s170 = smul.u32 16, %s20
      %p171 = scmp.lt.s32.totalorder %s19, 1
      %s172 = scalar_select %p171, %s19, 1
      %p173 = scmp.lt.s32.totalorder %s170, 15
      %s174 = scalar_select %p173, %s170, 15
      %s175 = smul.addr %s174, 2
      %s176 = smul.addr %s172, 32
      %s177 = sadd.s32 %s175, %s176
      %s178 = smul.addr %s177, 8
      %s179 = scalar_lea.vmem %s0, %s178
      %p180 = pneg %p50
      %p181 = pneg %p47
      %p182 = pneg %p71
      %p183 = pneg %p68
      %p184 = pneg %p99
      %p185 = pneg %p96
      %s186 = smul.u32 16, %s20
      %p187 = scmp.lt.s32.totalorder %s19, 1
      %s188 = scalar_select %p187, %s19, 1
      %p189 = scmp.lt.s32.totalorder %s186, 15
      %s190 = scalar_select %p189, %s186, 15
      %s191 = smul.addr %s190, 2
      %s192 = smul.addr %s188, 32
      %s193 = sadd.s32 %s191, %s192
      %s194 = smul.addr %s193, 4
      %s195 = scalar_lea.vmem %s2, %s194
      %p196 = pneg %p127
      %p197 = pneg %p124
      %p198 = scmp.lt.s32.totalorder %s19, 1
      %s199 = scalar_select %p198, %s19, 1
      %p200 = scmp.lt.s32.totalorder %s20, 0
      %s201 = scalar_select %p200, %s20, 0
      %s202 = sadd.s32 %s201, %s199
      %s203 = smul.addr %s202, 2
      %s204 = scalar_lea.vmem %s3, %s203
      %s205 = smul.u32 16, %s20
      %p206 = scmp.lt.s32.totalorder %s19, 1
      %s207 = scalar_select %p206, %s19, 1
      %p208 = scmp.lt.s32.totalorder %s205, 15
      %s209 = scalar_select %p208, %s205, 15
      %s210 = smul.addr %s209, 2
      %s211 = smul.addr %s207, 32
      %s212 = sadd.s32 %s210, %s211
      %s213 = smul.addr %s212, 8
      %s214 = scalar_lea.vmem %s0, %s213
      %s215 = smul.u32 16, %s20
      %s216 = smul.u32 16, %s20
      %p217 = scmp.lt.s32.totalorder %s19, 1
      %s218 = scalar_select %p217, %s19, 1
      %p219 = scmp.lt.s32.totalorder %s216, 15
      %s220 = scalar_select %p219, %s216, 15
      %s221 = smul.addr %s220, 2
      %s222 = smul.addr %s218, 32
      %s223 = sadd.s32 %s221, %s222
      %s224 = smul.addr %s223, 4
      %s225 = scalar_lea.vmem %s2, %s224
      %s226 = smul.u32 16, %s20
      %p227 = scmp.lt.s32.totalorder %s19, 1
      %s228 = scalar_select %p227, %s19, 1
      %p229 = scmp.lt.s32.totalorder %s20, 0
      %s230 = scalar_select %p229, %s20, 0
      %s231 = sadd.s32 %s230, %s228
      %s232 = smul.addr %s231, 2
      %s233 = scalar_lea.vmem %s3, %s232
      %v235 = vld [vmem:[%s214] sm:$0xff]
      %v236 = vld [vmem:[%s214 + $0x8] sm:$0xff]
      %v237 = vld [vmem:[%s214 + $0x10] sm:$0xff]
      %v238 = vld [vmem:[%s214 + $0x18] sm:$0xff]
      %v239 = vld [vmem:[%s214 + $0x20] sm:$0xff]
      %v240 = vld [vmem:[%s214 + $0x28] sm:$0xff]
      %v241 = vld [vmem:[%s214 + $0x30] sm:$0xff]
      %v242 = vld [vmem:[%s214 + $0x38] sm:$0xff]
      %v243 = vld [vmem:[%s214 + $0x40] sm:$0xff]
      %v244 = vld [vmem:[%s214 + $0x48] sm:$0xff]
      %v245 = vld [vmem:[%s214 + $0x50] sm:$0xff]
      %v246 = vld [vmem:[%s214 + $0x58] sm:$0xff]
      %v247 = vld [vmem:[%s214 + $0x60] sm:$0xff]
      %v248 = vld [vmem:[%s214 + $0x68] sm:$0xff]
      %v249 = vld [vmem:[%s214 + $0x70] sm:$0xff]
      %v250 = vld [vmem:[%s214 + $0x78] sm:$0xff]
      %v251 = vld [vmem:[%s214 + $0x80] sm:$0xff]
      %v252 = vld [vmem:[%s214 + $0x88] sm:$0xff]
      %v253 = vld [vmem:[%s214 + $0x90] sm:$0xff]
      %v254 = vld [vmem:[%s214 + $0x98] sm:$0xff]
      %v255 = vld [vmem:[%s214 + $0xa0] sm:$0xff]
      %v256 = vld [vmem:[%s214 + $0xa8] sm:$0xff]
      %v257 = vld [vmem:[%s214 + $0xb0] sm:$0xff]
      %v258 = vld [vmem:[%s214 + $0xb8] sm:$0xff]
      %v259 = vld [vmem:[%s214 + $0xc0] sm:$0xff]
      %v260 = vld [vmem:[%s214 + $0xc8] sm:$0xff]
      %v261 = vld [vmem:[%s214 + $0xd0] sm:$0xff]
      %v262 = vld [vmem:[%s214 + $0xd8] sm:$0xff]
      %v263 = vld [vmem:[%s214 + $0xe0] sm:$0xff]
      %v264 = vld [vmem:[%s214 + $0xe8] sm:$0xff]
      %v265 = vld [vmem:[%s214 + $0xf0] sm:$0xff]
      %v266 = vld [vmem:[%s214 + $0xf8] sm:$0xff]
      %v267 = vpack.c.bf16 %v236, %v235
      %v268 = vpack.c.bf16 %v238, %v237
      %v269 = vpack.c.bf16 %v240, %v239
      %v270 = vpack.c.bf16 %v242, %v241
      %v271 = vpack.c.bf16 %v244, %v243
      %v272 = vpack.c.bf16 %v246, %v245
      %v273 = vpack.c.bf16 %v248, %v247
      %v274 = vpack.c.bf16 %v250, %v249
      %v275 = vpack.c.bf16 %v252, %v251
      %v276 = vpack.c.bf16 %v254, %v253
      %v277 = vpack.c.bf16 %v256, %v255
      %v278 = vpack.c.bf16 %v258, %v257
      %v279 = vpack.c.bf16 %v260, %v259
      %v280 = vpack.c.bf16 %v262, %v261
      %v281 = vpack.c.bf16 %v264, %v263
      %v282 = vpack.c.bf16 %v266, %v265
      %v283 = vld [vmem:[%s1] sm:$0x3]
      %vm284 = vcmask 31744
      %v286 = vsel %vm284, %v267, 0
      %v289 = vsel %vm284, %v268, 0
      %v292 = vsel %vm284, %v269, 0
      %v295 = vsel %vm284, %v270, 0
      %v298 = vsel %vm284, %v271, 0
      %v301 = vsel %vm284, %v272, 0
      %v304 = vsel %vm284, %v273, 0
      %v307 = vsel %vm284, %v274, 0
      %v310 = vsel %vm284, %v275, 0
      %v313 = vsel %vm284, %v276, 0
      %v316 = vsel %vm284, %v277, 0
      %v319 = vsel %vm284, %v278, 0
      %v322 = vsel %vm284, %v279, 0
      %v325 = vsel %vm284, %v280, 0
      %v328 = vsel %vm284, %v281, 0
      %v331 = vsel %vm284, %v282, 0
      %vm333 = vcmask 1041408
      %v335 = vsel %vm333, %v283, 0
      %337 = vmatpush.bf16.msra.mxu0 0
      %338 = vmatpush.bf16.msra.mxu0 0
      %339 = vmatpush.bf16.msra.mxu0 0
      %340 = vmatpush.bf16.msra.mxu0 0
      %341 = vmatpush.bf16.msra.mxu0 0
      %342 = vmatpush.bf16.msra.mxu0 0
      %343 = vmatpush.bf16.msra.mxu0 0
      %344 = vmatpush.bf16.msra.mxu0 %v335
      %345 = vmatmul.bf16.gmra.mxu0 %v286
      %v346 = vpop.f32.mrf.mxu0
      %v347 = vadd.f32 0.0, %v346
      %v348 = vpop.f32.mrf.mxu0
      %v349 = vadd.f32 0.0, %v348
      %350 = vmatmul.bf16.gmra.mxu0 %v289
      %v351 = vpop.f32.mrf.mxu0
      %v352 = vadd.f32 0.0, %v351
      %v353 = vpop.f32.mrf.mxu0
      %v354 = vadd.f32 0.0, %v353
      %355 = vmatmul.bf16.gmra.mxu0 %v292
      %v356 = vpop.f32.mrf.mxu0
      %v357 = vadd.f32 0.0, %v356
      %v358 = vpop.f32.mrf.mxu0
      %v359 = vadd.f32 0.0, %v358
      %360 = vmatmul.bf16.gmra.mxu0 %v295
      %v361 = vpop.f32.mrf.mxu0
      %v362 = vadd.f32 0.0, %v361
      %v363 = vpop.f32.mrf.mxu0
      %v364 = vadd.f32 0.0, %v363
      %365 = vmatmul.bf16.gmra.mxu0 %v298
      %v366 = vpop.f32.mrf.mxu0
      %v367 = vadd.f32 0.0, %v366
      %v368 = vpop.f32.mrf.mxu0
      %v369 = vadd.f32 0.0, %v368
      %370 = vmatmul.bf16.gmra.mxu0 %v301
      %v371 = vpop.f32.mrf.mxu0
      %v372 = vadd.f32 0.0, %v371
      %v373 = vpop.f32.mrf.mxu0
      %v374 = vadd.f32 0.0, %v373
      %375 = vmatmul.bf16.gmra.mxu0 %v304
      %v376 = vpop.f32.mrf.mxu0
      %v377 = vadd.f32 0.0, %v376
      %v378 = vpop.f32.mrf.mxu0
      %v379 = vadd.f32 0.0, %v378
      %380 = vmatmul.bf16.gmra.mxu0 %v307
      %v381 = vpop.f32.mrf.mxu0
      %v382 = vadd.f32 0.0, %v381
      %v383 = vpop.f32.mrf.mxu0
      %v384 = vadd.f32 0.0, %v383
      %385 = vmatmul.bf16.gmra.mxu0 %v310
      %v386 = vpop.f32.mrf.mxu0
      %v387 = vadd.f32 0.0, %v386
      %v388 = vpop.f32.mrf.mxu0
      %v389 = vadd.f32 0.0, %v388
      %390 = vmatmul.bf16.gmra.mxu0 %v313
      %v391 = vpop.f32.mrf.mxu0
      %v392 = vadd.f32 0.0, %v391
      %v393 = vpop.f32.mrf.mxu0
      %v394 = vadd.f32 0.0, %v393
      %395 = vmatmul.bf16.gmra.mxu0 %v316
      %v396 = vpop.f32.mrf.mxu0
      %v397 = vadd.f32 0.0, %v396
      %v398 = vpop.f32.mrf.mxu0
      %v399 = vadd.f32 0.0, %v398
      %400 = vmatmul.bf16.gmra.mxu0 %v319
      %v401 = vpop.f32.mrf.mxu0
      %v402 = vadd.f32 0.0, %v401
      %v403 = vpop.f32.mrf.mxu0
      %v404 = vadd.f32 0.0, %v403
      %405 = vmatmul.bf16.gmra.mxu0 %v322
      %v406 = vpop.f32.mrf.mxu0
      %v407 = vadd.f32 0.0, %v406
      %v408 = vpop.f32.mrf.mxu0
      %v409 = vadd.f32 0.0, %v408
      %410 = vmatmul.bf16.gmra.mxu0 %v325
      %v411 = vpop.f32.mrf.mxu0
      %v412 = vadd.f32 0.0, %v411
      %v413 = vpop.f32.mrf.mxu0
      %v414 = vadd.f32 0.0, %v413
      %415 = vmatmul.bf16.gmra.mxu0 %v328
      %v416 = vpop.f32.mrf.mxu0
      %v417 = vadd.f32 0.0, %v416
      %v418 = vpop.f32.mrf.mxu0
      %v419 = vadd.f32 0.0, %v418
      %420 = vmatmul.bf16.gmra.mxu0 %v331
      %v421 = vpop.f32.mrf.mxu0
      %v422 = vadd.f32 0.0, %v421
      %v423 = vpop.f32.mrf.mxu0
      %v424 = vadd.f32 0.0, %v423
      %425 = vdwg.mxu0
      %vm426 = vcmask 15360
      %v427 = vsel %vm426, %v347, 0.0
      %v428 = vsel %vm426, %v349, 0.0
      %v429 = vadd.f32 %v427, %v428
      %v430 = vsel %vm426, %v352, 0.0
      %v431 = vadd.f32 %v429, %v430
      %v432 = vsel %vm426, %v354, 0.0
      %v433 = vadd.f32 %v431, %v432
      %v434 = vsel %vm426, %v357, 0.0
      %v435 = vadd.f32 %v433, %v434
      %v436 = vsel %vm426, %v359, 0.0
      %v437 = vadd.f32 %v435, %v436
      %v438 = vsel %vm426, %v362, 0.0
      %v439 = vadd.f32 %v437, %v438
      %v440 = vsel %vm426, %v364, 0.0
      %v441 = vadd.f32 %v439, %v440
      %v442 = vsel %vm426, %v367, 0.0
      %v443 = vadd.f32 %v441, %v442
      %v444 = vsel %vm426, %v369, 0.0
      %v445 = vadd.f32 %v443, %v444
      %v446 = vsel %vm426, %v372, 0.0
      %v447 = vadd.f32 %v445, %v446
      %v448 = vsel %vm426, %v374, 0.0
      %v449 = vadd.f32 %v447, %v448
      %v450 = vsel %vm426, %v377, 0.0
      %v451 = vadd.f32 %v449, %v450
      %v452 = vsel %vm426, %v379, 0.0
      %v453 = vadd.f32 %v451, %v452
      %v454 = vsel %vm426, %v382, 0.0
      %v455 = vadd.f32 %v453, %v454
      %v456 = vsel %vm426, %v384, 0.0
      %v457 = vadd.f32 %v455, %v456
      %v458 = vsel %vm426, %v387, 0.0
      %v459 = vadd.f32 %v457, %v458
      %v460 = vsel %vm426, %v389, 0.0
      %v461 = vadd.f32 %v459, %v460
      %v462 = vsel %vm426, %v392, 0.0
      %v463 = vadd.f32 %v461, %v462
      %v464 = vsel %vm426, %v394, 0.0
      %v465 = vadd.f32 %v463, %v464
      %v466 = vsel %vm426, %v397, 0.0
      %v467 = vadd.f32 %v465, %v466
      %v468 = vsel %vm426, %v399, 0.0
      %v469 = vadd.f32 %v467, %v468
      %v470 = vsel %vm426, %v402, 0.0
      %v471 = vadd.f32 %v469, %v470
      %v472 = vsel %vm426, %v404, 0.0
      %v473 = vadd.f32 %v471, %v472
      %v474 = vsel %vm426, %v407, 0.0
      %v475 = vadd.f32 %v473, %v474
      %v476 = vsel %vm426, %v409, 0.0
      %v477 = vadd.f32 %v475, %v476
      %v478 = vsel %vm426, %v412, 0.0
      %v479 = vadd.f32 %v477, %v478
      %v480 = vsel %vm426, %v414, 0.0
      %v481 = vadd.f32 %v479, %v480
      %v482 = vsel %vm426, %v417, 0.0
      %v483 = vadd.f32 %v481, %v482
      %v484 = vsel %vm426, %v419, 0.0
      %v485 = vadd.f32 %v483, %v484
      %v486 = vsel %vm426, %v422, 0.0
      %v487 = vadd.f32 %v485, %v486
      %v488 = vsel %vm426, %v424, 0.0
      %v489 = vadd.f32 %v487, %v488
      %v490 = vrot.slane %v489, 4
      %v491 = vadd.f32 %v489, %v490
      %v492 = vrot.slane %v491, 2
      %v493 = vadd.f32 %v491, %v492
      %v494 = vrot.slane %v493, 1
      %v495 = vadd.f32 %v493, %v494
      %v496 = vmul.f32 %v347, %v347
      %v497 = vmul.f32 %v349, %v349
      %v498 = vmul.f32 %v352, %v352
      %v499 = vmul.f32 %v354, %v354
      %v500 = vmul.f32 %v357, %v357
      %v501 = vmul.f32 %v359, %v359
      %v502 = vmul.f32 %v362, %v362
      %v503 = vmul.f32 %v364, %v364
      %v504 = vmul.f32 %v367, %v367
      %v505 = vmul.f32 %v369, %v369
      %v506 = vmul.f32 %v372, %v372
      %v507 = vmul.f32 %v374, %v374
      %v508 = vmul.f32 %v377, %v377
      %v509 = vmul.f32 %v379, %v379
      %v510 = vmul.f32 %v382, %v382
      %v511 = vmul.f32 %v384, %v384
      %v512 = vmul.f32 %v387, %v387
      %v513 = vmul.f32 %v389, %v389
      %v514 = vmul.f32 %v392, %v392
      %v515 = vmul.f32 %v394, %v394
      %v516 = vmul.f32 %v397, %v397
      %v517 = vmul.f32 %v399, %v399
      %v518 = vmul.f32 %v402, %v402
      %v519 = vmul.f32 %v404, %v404
      %v520 = vmul.f32 %v407, %v407
      %v521 = vmul.f32 %v409, %v409
      %v522 = vmul.f32 %v412, %v412
      %v523 = vmul.f32 %v414, %v414
      %v524 = vmul.f32 %v417, %v417
      %v525 = vmul.f32 %v419, %v419
      %v526 = vmul.f32 %v422, %v422
      %v527 = vmul.f32 %v424, %v424
      %v528 = vsel %vm426, %v496, 0.0
      %v529 = vsel %vm426, %v497, 0.0
      %v530 = vadd.f32 %v528, %v529
      %v531 = vsel %vm426, %v498, 0.0
      %v532 = vadd.f32 %v530, %v531
      %v533 = vsel %vm426, %v499, 0.0
      %v534 = vadd.f32 %v532, %v533
      %v535 = vsel %vm426, %v500, 0.0
      %v536 = vadd.f32 %v534, %v535
      %v537 = vsel %vm426, %v501, 0.0
      %v538 = vadd.f32 %v536, %v537
      %v539 = vsel %vm426, %v502, 0.0
      %v540 = vadd.f32 %v538, %v539
      %v541 = vsel %vm426, %v503, 0.0
      %v542 = vadd.f32 %v540, %v541
      %v543 = vsel %vm426, %v504, 0.0
      %v544 = vadd.f32 %v542, %v543
      %v545 = vsel %vm426, %v505, 0.0
      %v546 = vadd.f32 %v544, %v545
      %v547 = vsel %vm426, %v506, 0.0
      %v548 = vadd.f32 %v546, %v547
      %v549 = vsel %vm426, %v507, 0.0
      %v550 = vadd.f32 %v548, %v549
      %v551 = vsel %vm426, %v508, 0.0
      %v552 = vadd.f32 %v550, %v551
      %v553 = vsel %vm426, %v509, 0.0
      %v554 = vadd.f32 %v552, %v553
      %v555 = vsel %vm426, %v510, 0.0
      %v556 = vadd.f32 %v554, %v555
      %v557 = vsel %vm426, %v511, 0.0
      %v558 = vadd.f32 %v556, %v557
      %v559 = vsel %vm426, %v512, 0.0
      %v560 = vadd.f32 %v558, %v559
      %v561 = vsel %vm426, %v513, 0.0
      %v562 = vadd.f32 %v560, %v561
      %v563 = vsel %vm426, %v514, 0.0
      %v564 = vadd.f32 %v562, %v563
      %v565 = vsel %vm426, %v515, 0.0
      %v566 = vadd.f32 %v564, %v565
      %v567 = vsel %vm426, %v516, 0.0
      %v568 = vadd.f32 %v566, %v567
      %v569 = vsel %vm426, %v517, 0.0
      %v570 = vadd.f32 %v568, %v569
      %v571 = vsel %vm426, %v518, 0.0
      %v572 = vadd.f32 %v570, %v571
      %v573 = vsel %vm426, %v519, 0.0
      %v574 = vadd.f32 %v572, %v573
      %v575 = vsel %vm426, %v520, 0.0
      %v576 = vadd.f32 %v574, %v575
      %v577 = vsel %vm426, %v521, 0.0
      %v578 = vadd.f32 %v576, %v577
      %v579 = vsel %vm426, %v522, 0.0
      %v580 = vadd.f32 %v578, %v579
      %v581 = vsel %vm426, %v523, 0.0
      %v582 = vadd.f32 %v580, %v581
      %v583 = vsel %vm426, %v524, 0.0
      %v584 = vadd.f32 %v582, %v583
      %v585 = vsel %vm426, %v525, 0.0
      %v586 = vadd.f32 %v584, %v585
      %v587 = vsel %vm426, %v526, 0.0
      %v588 = vadd.f32 %v586, %v587
      %v589 = vsel %vm426, %v527, 0.0
      %v590 = vadd.f32 %v588, %v589
      %v591 = vrot.slane %v590, 4
      %v592 = vadd.f32 %v590, %v591
      %v593 = vrot.slane %v592, 2
      %v594 = vadd.f32 %v592, %v593
      %v595 = vrot.slane %v594, 1
      %v596 = vadd.f32 %v594, %v595
      %vm597 = vcmask 1040384
      %v598 = vsel %vm597, %v495, %v596
      %vm599 = vcmask 9216
      %600 = vst.msk [vmem:[%s233] sm:$0x3] %vm599, %v598
      %v601 = vpack.c.bf16 %v347, %v347
      %v602 = vpack.c.bf16 %v349, %v349
      %v603 = vpack.c.bf16 %v352, %v352
      %v604 = vpack.c.bf16 %v354, %v354
      %v605 = vpack.c.bf16 %v357, %v357
      %v606 = vpack.c.bf16 %v359, %v359
      %v607 = vpack.c.bf16 %v362, %v362
      %v608 = vpack.c.bf16 %v364, %v364
      %v609 = vpack.c.bf16 %v367, %v367
      %v610 = vpack.c.bf16 %v369, %v369
      %v611 = vpack.c.bf16 %v372, %v372
      %v612 = vpack.c.bf16 %v374, %v374
      %v613 = vpack.c.bf16 %v377, %v377
      %v614 = vpack.c.bf16 %v379, %v379
      %v615 = vpack.c.bf16 %v382, %v382
      %v616 = vpack.c.bf16 %v384, %v384
      %v617 = vpack.c.bf16 %v387, %v387
      %v618 = vpack.c.bf16 %v389, %v389
      %v619 = vpack.c.bf16 %v392, %v392
      %v620 = vpack.c.bf16 %v394, %v394
      %v621 = vpack.c.bf16 %v397, %v397
      %v622 = vpack.c.bf16 %v399, %v399
      %v623 = vpack.c.bf16 %v402, %v402
      %v624 = vpack.c.bf16 %v404, %v404
      %v625 = vpack.c.bf16 %v407, %v407
      %v626 = vpack.c.bf16 %v409, %v409
      %v627 = vpack.c.bf16 %v412, %v412
      %v628 = vpack.c.bf16 %v414, %v414
      %v629 = vpack.c.bf16 %v417, %v417
      %v630 = vpack.c.bf16 %v419, %v419
      %v631 = vpack.c.bf16 %v422, %v422
      %v632 = vpack.c.bf16 %v424, %v424
      %vm633 = vcmask 11264
      %634 = vst.msk [vmem:[%s225] sm:$0xf] %vm633, %v601
      %635 = vst.msk [vmem:[%s225 + $0x4] sm:$0xf] %vm633, %v602
      %636 = vst.msk [vmem:[%s225 + $0x8] sm:$0xf] %vm633, %v603
      %637 = vst.msk [vmem:[%s225 + $0xc] sm:$0xf] %vm633, %v604
      %638 = vst.msk [vmem:[%s225 + $0x10] sm:$0xf] %vm633, %v605
      %639 = vst.msk [vmem:[%s225 + $0x14] sm:$0xf] %vm633, %v606
      %640 = vst.msk [vmem:[%s225 + $0x18] sm:$0xf] %vm633, %v607
      %641 = vst.msk [vmem:[%s225 + $0x1c] sm:$0xf] %vm633, %v608
      %642 = vst.msk [vmem:[%s225 + $0x20] sm:$0xf] %vm633, %v609
      %643 = vst.msk [vmem:[%s225 + $0x24] sm:$0xf] %vm633, %v610
      %644 = vst.msk [vmem:[%s225 + $0x28] sm:$0xf] %vm633, %v611
      %645 = vst.msk [vmem:[%s225 + $0x2c] sm:$0xf] %vm633, %v612
      %646 = vst.msk [vmem:[%s225 + $0x30] sm:$0xf] %vm633, %v613
      %647 = vst.msk [vmem:[%s225 + $0x34] sm:$0xf] %vm633, %v614
      %648 = vst.msk [vmem:[%s225 + $0x38] sm:$0xf] %vm633, %v615
      %649 = vst.msk [vmem:[%s225 + $0x3c] sm:$0xf] %vm633, %v616
      %650 = vst.msk [vmem:[%s225 + $0x40] sm:$0xf] %vm633, %v617
      %651 = vst.msk [vmem:[%s225 + $0x44] sm:$0xf] %vm633, %v618
      %652 = vst.msk [vmem:[%s225 + $0x48] sm:$0xf] %vm633, %v619
      %653 = vst.msk [vmem:[%s225 + $0x4c] sm:$0xf] %vm633, %v620
      %654 = vst.msk [vmem:[%s225 + $0x50] sm:$0xf] %vm633, %v621
      %655 = vst.msk [vmem:[%s225 + $0x54] sm:$0xf] %vm633, %v622
      %656 = vst.msk [vmem:[%s225 + $0x58] sm:$0xf] %vm633, %v623
      %657 = vst.msk [vmem:[%s225 + $0x5c] sm:$0xf] %vm633, %v624
      %658 = vst.msk [vmem:[%s225 + $0x60] sm:$0xf] %vm633, %v625
      %659 = vst.msk [vmem:[%s225 + $0x64] sm:$0xf] %vm633, %v626
      %660 = vst.msk [vmem:[%s225 + $0x68] sm:$0xf] %vm633, %v627
      %661 = vst.msk [vmem:[%s225 + $0x6c] sm:$0xf] %vm633, %v628
      %662 = vst.msk [vmem:[%s225 + $0x70] sm:$0xf] %vm633, %v629
      %663 = vst.msk [vmem:[%s225 + $0x74] sm:$0xf] %vm633, %v630
      %664 = vst.msk [vmem:[%s225 + $0x78] sm:$0xf] %vm633, %v631
      %665 = vst.msk [vmem:[%s225 + $0x7c] sm:$0xf] %vm633, %v632
      %s666 = smul.u32 16, %s20
      %p667 = scmp.lt.s32.totalorder %s19, 1
      %s668 = scalar_select %p667, %s19, 1
      %p669 = scmp.lt.s32.totalorder %s666, 15
      %s670 = scalar_select %p669, %s666, 15
      %s671 = smul.addr %s670, 2
      %s672 = smul.addr %s668, 32
      %s673 = sadd.s32 %s671, %s672
      %s674 = smul.addr %s673, 4
      %s675 = scalar_lea.vmem %s2, %s674
      %p676 = scmp.lt.s32.totalorder %s19, 1
      %s677 = scalar_select %p676, %s19, 1
      %p678 = scmp.lt.s32.totalorder %s20, 0
      %s679 = scalar_select %p678, %s20, 0
      %s680 = sadd.s32 %s679, %s677
      %s681 = smul.addr %s680, 2
      %s682 = scalar_lea.vmem %s3, %s681
      // Predicated region
      $region29: #{residual_block_forward.3} parent=27 // pred_check
        %p683 = pneg %p96
      $region30: #{residual_block_forward.3} parent=27 // pred_check_branch
        %685 = sbr.rel (%p683) target = $region32
      $region31: #{residual_block_forward.3} parent=27 // pred_region
        %s686 = smul.u32 16, %s20
      $region32: #{residual_block_forward.3} parent=27 // pred_fallthru
        _
      // Predicated region
      $region33: #{residual_block_forward.3} parent=27 // pred_check
        %p687 = pneg %p124
      $region34: #{residual_block_forward.3} parent=27 // pred_check_branch
        %689 = sbr.rel (%p687) target = $region36
      $region35: #{residual_block_forward.3} parent=27 // pred_region
        _
      $region36: #{residual_block_forward.3} parent=27 // pred_fallthru
        _
    $region28: #{residual_block_forward.3} parent=5 // pred_fallthru
      _
    %p690 = scmp.le.s32.totalorder 2, %s10
    // Predicated region
    $region37: #{residual_block_forward.3} parent=5 // pred_check
      %p691 = pneg %p690
    $region38: #{residual_block_forward.3} parent=5 // pred_check_branch
      %693 = sbr.rel (%p691) target = $region40
    $region39: #{residual_block_forward.3} parent=5 // pred_region
      %s694 = ssub.s32 %s10, 2
      // Predicated region
      $region41: #{residual_block_forward.3} parent=39 // pred_check
        %p695 = pneg %p102
      $region42: #{residual_block_forward.3} parent=39 // pred_check_branch
        %697 = sbr.rel (%p695) target = $region44
      $region43: #{residual_block_forward.3} parent=39 // pred_region
        %s698 = smul.u32 16, %s22
        %p699 = scmp.lt.s32.totalorder %s21, 1
        %s700 = scalar_select %p699, %s21, 1
        %p701 = scmp.lt.s32.totalorder %s698, 15
        %s702 = scalar_select %p701, %s698, 15
        %s703 = smul.addr %s702, 2
        %s704 = smul.addr %s700, 32
        %s705 = sadd.s32 %s703, %s704
        %s706 = smul.addr %s705, 4
        %s707 = scalar_lea.vmem %s2, %s706
      $region44: #{residual_block_forward.3} parent=39 // pred_fallthru
        _
      // Predicated region
      $region45: #{residual_block_forward.3} parent=39 // pred_check
        %p708 = pneg %p130
      $region46: #{residual_block_forward.3} parent=39 // pred_check_branch
        %710 = sbr.rel (%p708) target = $region48
      $region47: #{residual_block_forward.3} parent=39 // pred_region
        %p711 = scmp.lt.s32.totalorder %s21, 1
        %s712 = scalar_select %p711, %s21, 1
        %p713 = scmp.lt.s32.totalorder %s22, 0
        %s714 = scalar_select %p713, %s22, 0
        %s715 = sadd.s32 %s714, %s712
        %s716 = smul.addr %s715, 2
        %s717 = scalar_lea.vmem %s3, %s716
      $region48: #{residual_block_forward.3} parent=39 // pred_fallthru
        _
    $region40: #{residual_block_forward.3} parent=5 // pred_fallthru
      _
  $region6: #{residual_block_forward.3} parent=0 // loop_footer
    %s14 = sadd.s32 1, %s10
  $region7: #{residual_block_forward.3} parent=0 // loop_footer_branch
    %9 = sbr.rel target = $region3
  $region8: #{residual_block_forward.3} parent=0 // loop_exit
    _

// kernel: residual_block_forward.5
$region0: #{residual_block_forward.5}
  #allocation0 [shape = 'u32[]', space=smem, size = 0x4, offset = 0x4, fixed_abs, tag = 'smem constant byte address 0x4 - core index']
  #allocation1 [shape = 'u32[72,128]{1,0:T(1,128)}', space=vmem, size = 0x9000, scoped, tag = 'internal scratch']
  %s0 = inlined_call_operand.vmem [shape: f32[2,16,16,4], index: 0, kind: input, shape index: {}]
  %s1 = inlined_call_operand.vmem [shape: bf16[2,16,16,4], index: 1, kind: input, shape index: {}]
  %s2 = inlined_call_operand.vmem [shape: f32[1,4], index: 2, kind: input, shape index: {}]
  %s3 = inlined_call_operand.vmem [shape: f32[1,4], index: 3, kind: input, shape index: {}]
  %s4 = inlined_call_operand.vmem [shape: f32[2,16,16,4], index: 4, kind: output, shape index: {}]
  %s5 = sld [smem:[#allocation0]]
  $region49: #{residual_block_forward.5} parent=0
    _
  %s7 = ssub.s32 1, %s5
  %s8 = scalar_select 0, %s7, %s5
  loop: start=0, step=1, limit=4
  $region2: #{residual_block_forward.5} parent=0 // loop_pre_header
    _
  $region3: #{residual_block_forward.5} parent=0 // loop_header
    %s10 = sphi 0, %s14
    %p11 = scmp.ge.s32.totalorder %s10, 4
    %s17 = sphi 0, %s29
    %s18 = sphi 0, %s25
    %s19 = sphi 0, %s17
    %s20 = sphi 0, %s18
    %s21 = sphi 0, %s19
    %s22 = sphi 0, %s20
    %s34 = sphi 0, %s36
    %s37 = sphi 0, %s34
    %s38 = sphi 0, %s37
    %s54 = sphi 0, %s38
    %s62 = sphi 0, %s64
    %s65 = sphi 0, %s62
    %s66 = sphi 0, %s65
    %s82 = sphi 0, %s66
    %s86 = sphi 0, %s86
    %s88 = sphi 0, %s86
    %s89 = sphi 0, %s88
    %s103 = sphi 0, %s89
    %s107 = sphi 0, %s107
    %s109 = sphi 0, %s107
    %s110 = sphi 0, %s109
    %s124 = sphi 0, %s110
    %s132 = sphi 0, %s134
    %s135 = sphi 0, %s132
    %s136 = sphi 0, %s135
    %s152 = sphi 0, %s136
  $region4: #{residual_block_forward.5} parent=0 // loop_header_branch
    %13 = sbr.rel (%p11) target = $region8
  $region5: #{residual_block_forward.5} parent=0 // loop_body
    %s15 = ssub.s32 %s10, 1
    %s16 = ssub.s32 %s10, 2
    %s23 = sadd.s32 1, %s18
    %p24 = scmp.ge.s32.totalorder %s23, 1
    %s25 = scalar_select %p24, 0, %s23
    %s26 = sadd.s32 1, %s17
    %s27 = scalar_select %p24, %s26, %s17
    %p28 = scmp.ge.s32.totalorder %s27, 2
    %s29 = scalar_select %p28, 0, %s27
    %s30 = ssub.s32 %s17, %s29
    %s31 = ssub.s32 %s18, %s25
    %s32 = sor.u32 %s30, %s31
    %p33 = scmp.eq.s32.totalorder %s32, 0
    %s35 = sadd.s32 %s34, 1
    %s36 = scalar_select %p33, %s34, %s35
    %p39 = pneg %p33
    %p40 = scmp.eq.s32.totalorder %s10, 1
    %p41 = por %p39, %p40
    %p42 = scmp.ne.s32.totalorder %s34, %s37
    %p43 = scmp.eq.s32.totalorder %s10, 0
    %p44 = por %p42, %p43
    %p45 = scmp.ne.s32.totalorder %s34, %s37
    %p46 = scmp.eq.s32.totalorder %s15, 1
    %p47 = por %p45, %p46
    %p48 = scmp.ne.s32.totalorder %s37, %s38
    %p49 = scmp.eq.s32.totalorder %s15, 0
    %p50 = por %p48, %p49
    %p51 = scmp.ne.s32.totalorder %s37, %s38
    %p52 = scmp.eq.s32.totalorder %s16, 1
    %p53 = por %p51, %p52
    %p55 = scmp.ne.s32.totalorder %s38, %s54
    %p56 = scmp.eq.s32.totalorder %s16, 0
    %p57 = por %p55, %p56
    %s58 = ssub.s32 %s17, %s29
    %s59 = ssub.s32 %s18, %s25
    %s60 = sor.u32 %s58, %s59
    %p61 = scmp.eq.s32.totalorder %s60, 0
    %s63 = sadd.s32 %s62, 1
    %s64 = scalar_select %p61, %s62, %s63
    %p67 = pneg %p61
    %p68 = scmp.eq.s32.totalorder %s10, 1
    %p69 = por %p67, %p68
    %p70 = scmp.ne.s32.totalorder %s62, %s65
    %p71 = scmp.eq.s32.totalorder %s10, 0
    %p72 = por %p70, %p71
    %p73 = scmp.ne.s32.totalorder %s62, %s65
    %p74 = scmp.eq.s32.totalorder %s15, 1
    %p75 = por %p73, %p74
    %p76 = scmp.ne.s32.totalorder %s65, %s66
    %p77 = scmp.eq.s32.totalorder %s15, 0
    %p78 = por %p76, %p77
    %p79 = scmp.ne.s32.totalorder %s65, %s66
    %p80 = scmp.eq.s32.totalorder %s16, 1
    %p81 = por %p79, %p80
    %p83 = scmp.ne.s32.totalorder %s66, %s82
    %p84 = scmp.eq.s32.totalorder %s16, 0
    %p85 = por %p83, %p84
    %s87 = sadd.s32 %s86, 1
    %p90 = scmp.eq.s32.totalorder %s10, 1
    %p91 = scmp.ne.s32.totalorder %s86, %s88
    %p92 = scmp.eq.s32.totalorder %s10, 0
    %p93 = por %p91, %p92
    %p94 = scmp.ne.s32.totalorder %s86, %s88
    %p95 = scmp.eq.s32.totalorder %s15, 1
    %p96 = por %p94, %p95
    %p97 = scmp.ne.s32.totalorder %s88, %s89
    %p98 = scmp.eq.s32.totalorder %s15, 0
    %p99 = por %p97, %p98
    %p100 = scmp.ne.s32.totalorder %s88, %s89
    %p101 = scmp.eq.s32.totalorder %s16, 1
    %p102 = por %p100, %p101
    %p104 = scmp.ne.s32.totalorder %s89, %s103
    %p105 = scmp.eq.s32.totalorder %s16, 0
    %p106 = por %p104, %p105
    %s108 = sadd.s32 %s107, 1
    %p111 = scmp.eq.s32.totalorder %s10, 1
    %p112 = scmp.ne.s32.totalorder %s107, %s109
    %p113 = scmp.eq.s32.totalorder %s10, 0
    %p114 = por %p112, %p113
    %p115 = scmp.ne.s32.totalorder %s107, %s109
    %p116 = scmp.eq.s32.totalorder %s15, 1
    %p117 = por %p115, %p116
    %p118 = scmp.ne.s32.totalorder %s109, %s110
    %p119 = scmp.eq.s32.totalorder %s15, 0
    %p120 = por %p118, %p119
    %p121 = scmp.ne.s32.totalorder %s109, %s110
    %p122 = scmp.eq.s32.totalorder %s16, 1
    %p123 = por %p121, %p122
    %p125 = scmp.ne.s32.totalorder %s110, %s124
    %p126 = scmp.eq.s32.totalorder %s16, 0
    %p127 = por %p125, %p126
    %s128 = ssub.s32 %s17, %s29
    %s129 = ssub.s32 %s18, %s25
    %s130 = sor.u32 %s128, %s129
    %p131 = scmp.eq.s32.totalorder %s130, 0
    %s133 = sadd.s32 %s132, 1
    %s134 = scalar_select %p131, %s132, %s133
    %p137 = pneg %p131
    %p138 = scmp.eq.s32.totalorder %s10, 1
    %p139 = por %p137, %p138
    %p140 = scmp.ne.s32.totalorder %s132, %s135
    %p141 = scmp.eq.s32.totalorder %s10, 0
    %p142 = por %p140, %p141
    %p143 = scmp.ne.s32.totalorder %s132, %s135
    %p144 = scmp.eq.s32.totalorder %s15, 1
    %p145 = por %p143, %p144
    %p146 = scmp.ne.s32.totalorder %s135, %s136
    %p147 = scmp.eq.s32.totalorder %s15, 0
    %p148 = por %p146, %p147
    %p149 = scmp.ne.s32.totalorder %s135, %s136
    %p150 = scmp.eq.s32.totalorder %s16, 1
    %p151 = por %p149, %p150
    %p153 = scmp.ne.s32.totalorder %s136, %s152
    %p154 = scmp.eq.s32.totalorder %s16, 0
    %p155 = por %p153, %p154
    %p156 = scmp.le.s32.totalorder 1, %s10
    %p157 = scmp.lt.s32.totalorder %s10, 3
    %p158 = pnand %p156, %p157
    %p159 = pneg %p158
    // Predicated region
    $region9: #{residual_block_forward.5} parent=5 // pred_check
      _
    $region10: #{residual_block_forward.5} parent=5 // pred_check_branch
      %161 = sbr.rel (%p158) target = $region12
    $region11: #{residual_block_forward.5} parent=5 // pred_region
      %s162 = ssub.s32 %s10, 1
      // Predicated region
      $region13: #{residual_block_forward.5} parent=11 // pred_check
        %p163 = pneg %p99
      $region14: #{residual_block_forward.5} parent=11 // pred_check_branch
        %165 = sbr.rel (%p163) target = $region16
      $region15: #{residual_block_forward.5} parent=11 // pred_region
        _
      $region16: #{residual_block_forward.5} parent=11 // pred_fallthru
        _
      // Predicated region
      $region17: #{residual_block_forward.5} parent=11 // pred_check
        %p166 = pneg %p120
      $region18: #{residual_block_forward.5} parent=11 // pred_check_branch
        %168 = sbr.rel (%p166) target = $region20
      $region19: #{residual_block_forward.5} parent=11 // pred_region
        _
      $region20: #{residual_block_forward.5} parent=11 // pred_fallthru
        _
    $region12: #{residual_block_forward.5} parent=5 // pred_fallthru
      _
    %p169 = scmp.lt.s32.totalorder %s10, 2
    // Predicated region
    $region21: #{residual_block_forward.5} parent=5 // pred_check
      %p170 = pneg %p169
    $region22: #{residual_block_forward.5} parent=5 // pred_check_branch
      %172 = sbr.rel (%p170) target = $region24
    $region23: #{residual_block_forward.5} parent=5 // pred_region
      // Predicated region
      $region25: #{residual_block_forward.5} parent=23 // pred_check
        %p173 = pneg %p44
      $region26: #{residual_block_forward.5} parent=23 // pred_check_branch
        %175 = sbr.rel (%p173) target = $region28
      $region27: #{residual_block_forward.5} parent=23 // pred_region
        %s176 = smul.u32 16, %s18
        %p177 = scmp.lt.s32.totalorder %s17, 1
        %s178 = scalar_select %p177, %s17, 1
        %p179 = scmp.lt.s32.totalorder %s176, 15
        %s180 = scalar_select %p179, %s176, 15
        %s181 = smul.addr %s180, 2
        %s182 = smul.addr %s178, 32
        %s183 = sadd.s32 %s181, %s182
        %s184 = smul.addr %s183, 8
        %s185 = scalar_lea.vmem %s0, %s184
        %s186 = smul.u32 16, %s18
      $region28: #{residual_block_forward.5} parent=23 // pred_fallthru
        _
      // Predicated region
      $region29: #{residual_block_forward.5} parent=23 // pred_check
        %p187 = pneg %p72
      $region30: #{residual_block_forward.5} parent=23 // pred_check_branch
        %189 = sbr.rel (%p187) target = $region32
      $region31: #{residual_block_forward.5} parent=23 // pred_region
        %s190 = smul.u32 16, %s18
        %p191 = scmp.lt.s32.totalorder %s17, 1
        %s192 = scalar_select %p191, %s17, 1
        %p193 = scmp.lt.s32.totalorder %s190, 15
        %s194 = scalar_select %p193, %s190, 15
        %s195 = smul.addr %s194, 2
        %s196 = smul.addr %s192, 32
        %s197 = sadd.s32 %s195, %s196
        %s198 = smul.addr %s197, 4
        %s199 = scalar_lea.vmem %s1, %s198
        %s200 = smul.u32 16, %s18
      $region32: #{residual_block_forward.5} parent=23 // pred_fallthru
        _
    $region24: #{residual_block_forward.5} parent=5 // pred_fallthru
      _
    %p201 = scmp.le.s32.totalorder 1, %s10
    %p202 = scmp.lt.s32.totalorder %s10, 3
    %p203 = pnand %p201, %p202
    %p204 = pneg %p203
    // Predicated region
    $region33: #{residual_block_forward.5} parent=5 // pred_check
      _
    $region34: #{residual_block_forward.5} parent=5 // pred_check_branch
      %206 = sbr.rel (%p203) target = $region36
    $region35: #{residual_block_forward.5} parent=5 // pred_region
      %s207 = ssub.s32 %s10, 1
      %s208 = smul.u32 16, %s20
      %p209 = scmp.lt.s32.totalorder %s19, 1
      %s210 = scalar_select %p209, %s19, 1
      %p211 = scmp.lt.s32.totalorder %s208, 15
      %s212 = scalar_select %p211, %s208, 15
      %s213 = smul.addr %s212, 2
      %s214 = smul.addr %s210, 32
      %s215 = sadd.s32 %s213, %s214
      %s216 = smul.addr %s215, 8
      %s217 = scalar_lea.vmem %s0, %s216
      %p218 = pneg %p50
      %p219 = pneg %p47
      %s220 = smul.u32 16, %s20
      %p221 = scmp.lt.s32.totalorder %s19, 1
      %s222 = scalar_select %p221, %s19, 1
      %p223 = scmp.lt.s32.totalorder %s220, 15
      %s224 = scalar_select %p223, %s220, 15
      %s225 = smul.addr %s224, 2
      %s226 = smul.addr %s222, 32
      %s227 = sadd.s32 %s225, %s226
      %s228 = smul.addr %s227, 4
      %s229 = scalar_lea.vmem %s1, %s228
      %p230 = pneg %p78
      %p231 = pneg %p75
      %p232 = pneg %p99
      %p233 = pneg %p96
      %p234 = pneg %p120
      %p235 = pneg %p117
      %p236 = pneg %p148
      %p237 = pneg %p145
      %s238 = smul.u32 16, %s20
      %p239 = scmp.lt.s32.totalorder %s19, 1
      %s240 = scalar_select %p239, %s19, 1
      %p241 = scmp.lt.s32.totalorder %s238, 15
      %s242 = scalar_select %p241, %s238, 15
      %s243 = smul.addr %s242, 2
      %s244 = smul.addr %s240, 32
      %s245 = sadd.s32 %s243, %s244
      %s246 = smul.addr %s245, 8
      %s247 = scalar_lea.vmem %s4, %s246
      %s248 = smul.u32 16, %s20
      %p249 = scmp.lt.s32.totalorder %s19, 1
      %s250 = scalar_select %p249, %s19, 1
      %p251 = scmp.lt.s32.totalorder %s248, 15
      %s252 = scalar_select %p251, %s248, 15
      %s253 = smul.addr %s252, 2
      %s254 = smul.addr %s250, 32
      %s255 = sadd.s32 %s253, %s254
      %s256 = smul.addr %s255, 8
      %s257 = scalar_lea.vmem %s0, %s256
      %s258 = smul.u32 16, %s20
      %s259 = smul.u32 16, %s20
      %p260 = scmp.lt.s32.totalorder %s19, 1
      %s261 = scalar_select %p260, %s19, 1
      %p262 = scmp.lt.s32.totalorder %s259, 15
      %s263 = scalar_select %p262, %s259, 15
      %s264 = smul.addr %s263, 2
      %s265 = smul.addr %s261, 32
      %s266 = sadd.s32 %s264, %s265
      %s267 = smul.addr %s266, 4
      %s268 = scalar_lea.vmem %s1, %s267
      %s269 = smul.u32 16, %s20
      %s270 = smul.u32 16, %s20
      %p271 = scmp.lt.s32.totalorder %s19, 1
      %s272 = scalar_select %p271, %s19, 1
      %p273 = scmp.lt.s32.totalorder %s270, 15
      %s274 = scalar_select %p273, %s270, 15
      %s275 = smul.addr %s274, 2
      %s276 = smul.addr %s272, 32
      %s277 = sadd.s32 %s275, %s276
      %s278 = smul.addr %s277, 8
      %s279 = scalar_lea.vmem %s4, %s278
      %s280 = smul.u32 16, %s20
      %v281 = vld [vmem:[%s268] sm:$0xf]
      %v282 = vld [vmem:[%s268 + $0x4] sm:$0xf]
      %v283 = vld [vmem:[%s268 + $0x8] sm:$0xf]
      %v284 = vld [vmem:[%s268 + $0xc] sm:$0xf]
      %v285 = vld [vmem:[%s268 + $0x10] sm:$0xf]
      %v286 = vld [vmem:[%s268 + $0x14] sm:$0xf]
      %v287 = vld [vmem:[%s268 + $0x18] sm:$0xf]
      %v288 = vld [vmem:[%s268 + $0x1c] sm:$0xf]
      %v289 = vld [vmem:[%s268 + $0x20] sm:$0xf]
      %v290 = vld [vmem:[%s268 + $0x24] sm:$0xf]
      %v291 = vld [vmem:[%s268 + $0x28] sm:$0xf]
      %v292 = vld [vmem:[%s268 + $0x2c] sm:$0xf]
      %v293 = vld [vmem:[%s268 + $0x30] sm:$0xf]
      %v294 = vld [vmem:[%s268 + $0x34] sm:$0xf]
      %v295 = vld [vmem:[%s268 + $0x38] sm:$0xf]
      %v296 = vld [vmem:[%s268 + $0x3c] sm:$0xf]
      %v297 = vld [vmem:[%s268 + $0x40] sm:$0xf]
      %v298 = vld [vmem:[%s268 + $0x44] sm:$0xf]
      %v299 = vld [vmem:[%s268 + $0x48] sm:$0xf]
      %v300 = vld [vmem:[%s268 + $0x4c] sm:$0xf]
      %v301 = vld [vmem:[%s268 + $0x50] sm:$0xf]
      %v302 = vld [vmem:[%s268 + $0x54] sm:$0xf]
      %v303 = vld [vmem:[%s268 + $0x58] sm:$0xf]
      %v304 = vld [vmem:[%s268 + $0x5c] sm:$0xf]
      %v305 = vld [vmem:[%s268 + $0x60] sm:$0xf]
      %v306 = vld [vmem:[%s268 + $0x64] sm:$0xf]
      %v307 = vld [vmem:[%s268 + $0x68] sm:$0xf]
      %v308 = vld [vmem:[%s268 + $0x6c] sm:$0xf]
      %v309 = vld [vmem:[%s268 + $0x70] sm:$0xf]
      %v310 = vld [vmem:[%s268 + $0x74] sm:$0xf]
      %v311 = vld [vmem:[%s268 + $0x78] sm:$0xf]
      %v312 = vld [vmem:[%s268 + $0x7c] sm:$0xf]
      %v313 = vunpack.c.l.bf16 %v281
      %v314 = vunpack.c.l.bf16 %v282
      %v315 = vunpack.c.l.bf16 %v283
      %v316 = vunpack.c.l.bf16 %v284
      %v317 = vunpack.c.l.bf16 %v285
      %v318 = vunpack.c.l.bf16 %v286
      %v319 = vunpack.c.l.bf16 %v287
      %v320 = vunpack.c.l.bf16 %v288
      %v321 = vunpack.c.l.bf16 %v289
      %v322 = vunpack.c.l.bf16 %v290
      %v323 = vunpack.c.l.bf16 %v291
      %v324 = vunpack.c.l.bf16 %v292
      %v325 = vunpack.c.l.bf16 %v293
      %v326 = vunpack.c.l.bf16 %v294
      %v327 = vunpack.c.l.bf16 %v295
      %v328 = vunpack.c.l.bf16 %v296
      %v329 = vunpack.c.l.bf16 %v297
      %v330 = vunpack.c.l.bf16 %v298
      %v331 = vunpack.c.l.bf16 %v299
      %v332 = vunpack.c.l.bf16 %v300
      %v333 = vunpack.c.l.bf16 %v301
      %v334 = vunpack.c.l.bf16 %v302
      %v335 = vunpack.c.l.bf16 %v303
      %v336 = vunpack.c.l.bf16 %v304
      %v337 = vunpack.c.l.bf16 %v305
      %v338 = vunpack.c.l.bf16 %v306
      %v339 = vunpack.c.l.bf16 %v307
      %v340 = vunpack.c.l.bf16 %v308
      %v341 = vunpack.c.l.bf16 %v309
      %v342 = vunpack.c.l.bf16 %v310
      %v343 = vunpack.c.l.bf16 %v311
      %v344 = vunpack.c.l.bf16 %v312
      %v345 = vld [vmem:[%s2] sm:$0x1]
      %v347 = vperm.slane %v345, 0
      %v349 = vmul.f32 %v313, %v347
      %v350 = vmul.f32 %v314, %v347
      %v351 = vmul.f32 %v315, %v347
      %v352 = vmul.f32 %v316, %v347
      %v353 = vmul.f32 %v317, %v347
      %v354 = vmul.f32 %v318, %v347
      %v355 = vmul.f32 %v319, %v347
      %v356 = vmul.f32 %v320, %v347
      %v357 = vmul.f32 %v321, %v347
      %v358 = vmul.f32 %v322, %v347
      %v359 = vmul.f32 %v323, %v347
      %v360 = vmul.f32 %v324, %v347
      %v361 = vmul.f32 %v325, %v347
      %v362 = vmul.f32 %v326, %v347
      %v363 = vmul.f32 %v327, %v347
      %v364 = vmul.f32 %v328, %v347
      %v365 = vmul.f32 %v329, %v347
      %v366 = vmul.f32 %v330, %v347
      %v367 = vmul.f32 %v331, %v347
      %v368 = vmul.f32 %v332, %v347
      %v369 = vmul.f32 %v333, %v347
      %v370 = vmul.f32 %v334, %v347
      %v371 = vmul.f32 %v335, %v347
      %v372 = vmul.f32 %v336, %v347
      %v373 = vmul.f32 %v337, %v347
      %v374 = vmul.f32 %v338, %v347
      %v375 = vmul.f32 %v339, %v347
      %v376 = vmul.f32 %v340, %v347
      %v377 = vmul.f32 %v341, %v347
      %v378 = vmul.f32 %v342, %v347
      %v379 = vmul.f32 %v343, %v347
      %v380 = vmul.f32 %v344, %v347
      %v381 = vld [vmem:[%s3] sm:$0x1]
      %v383 = vperm.slane %v381, 0
      %v385 = vadd.f32 %v349, %v383
      %v386 = vadd.f32 %v350, %v383
      %v387 = vadd.f32 %v351, %v383
      %v388 = vadd.f32 %v352, %v383
      %v389 = vadd.f32 %v353, %v383
      %v390 = vadd.f32 %v354, %v383
      %v391 = vadd.f32 %v355, %v383
      %v392 = vadd.f32 %v356, %v383
      %v393 = vadd.f32 %v357, %v383
      %v394 = vadd.f32 %v358, %v383
      %v395 = vadd.f32 %v359, %v383
      %v396 = vadd.f32 %v360, %v383
      %v397 = vadd.f32 %v361, %v383
      %v398 = vadd.f32 %v362, %v383
      %v399 = vadd.f32 %v363, %v383
      %v400 = vadd.f32 %v364, %v383
      %v401 = vadd.f32 %v365, %v383
      %v402 = vadd.f32 %v366, %v383
      %v403 = vadd.f32 %v367, %v383
      %v404 = vadd.f32 %v368, %v383
      %v405 = vadd.f32 %v369, %v383
      %v406 = vadd.f32 %v370, %v383
      %v407 = vadd.f32 %v371, %v383
      %v408 = vadd.f32 %v372, %v383
      %v409 = vadd.f32 %v373, %v383
      %v410 = vadd.f32 %v374, %v383
      %v411 = vadd.f32 %v375, %v383
      %v412 = vadd.f32 %v376, %v383
      %v413 = vadd.f32 %v377, %v383
      %v414 = vadd.f32 %v378, %v383
      %v415 = vadd.f32 %v379, %v383
      %v416 = vadd.f32 %v380, %v383
      %v417 = vld [vmem:[%s257] sm:$0xff]
      %v418 = vld [vmem:[%s257 + $0x8] sm:$0xff]
      %v419 = vld [vmem:[%s257 + $0x10] sm:$0xff]
      %v420 = vld [vmem:[%s257 + $0x18] sm:$0xff]
      %v421 = vld [vmem:[%s257 + $0x20] sm:$0xff]
      %v422 = vld [vmem:[%s257 + $0x28] sm:$0xff]
      %v423 = vld [vmem:[%s257 + $0x30] sm:$0xff]
      %v424 = vld [vmem:[%s257 + $0x38] sm:$0xff]
      %v425 = vld [vmem:[%s257 + $0x40] sm:$0xff]
      %v426 = vld [vmem:[%s257 + $0x48] sm:$0xff]
      %v427 = vld [vmem:[%s257 + $0x50] sm:$0xff]
      %v428 = vld [vmem:[%s257 + $0x58] sm:$0xff]
      %v429 = vld [vmem:[%s257 + $0x60] sm:$0xff]
      %v430 = vld [vmem:[%s257 + $0x68] sm:$0xff]
      %v431 = vld [vmem:[%s257 + $0x70] sm:$0xff]
      %v432 = vld [vmem:[%s257 + $0x78] sm:$0xff]
      %v433 = vld [vmem:[%s257 + $0x80] sm:$0xff]
      %v434 = vld [vmem:[%s257 + $0x88] sm:$0xff]
      %v435 = vld [vmem:[%s257 + $0x90] sm:$0xff]
      %v436 = vld [vmem:[%s257 + $0x98] sm:$0xff]
      %v437 = vld [vmem:[%s257 + $0xa0] sm:$0xff]
      %v438 = vld [vmem:[%s257 + $0xa8] sm:$0xff]
      %v439 = vld [vmem:[%s257 + $0xb0] sm:$0xff]
      %v440 = vld [vmem:[%s257 + $0xb8] sm:$0xff]
      %v441 = vld [vmem:[%s257 + $0xc0] sm:$0xff]
      %v442 = vld [vmem:[%s257 + $0xc8] sm:$0xff]
      %v443 = vld [vmem:[%s257 + $0xd0] sm:$0xff]
      %v444 = vld [vmem:[%s257 + $0xd8] sm:$0xff]
      %v445 = vld [vmem:[%s257 + $0xe0] sm:$0xff]
      %v446 = vld [vmem:[%s257 + $0xe8] sm:$0xff]
      %v447 = vld [vmem:[%s257 + $0xf0] sm:$0xff]
      %v448 = vld [vmem:[%s257 + $0xf8] sm:$0xff]
      %vm449 = vcmp.gt.f32.partialorder %v385, 0.0
      %vm450 = vcmp.gt.f32.partialorder %v386, 0.0
      %vm451 = vcmp.gt.f32.partialorder %v387, 0.0
      %vm452 = vcmp.gt.f32.partialorder %v388, 0.0
      %vm453 = vcmp.gt.f32.partialorder %v389, 0.0
      %vm454 = vcmp.gt.f32.partialorder %v390, 0.0
      %vm455 = vcmp.gt.f32.partialorder %v391, 0.0
      %vm456 = vcmp.gt.f32.partialorder %v392, 0.0
      %vm457 = vcmp.gt.f32.partialorder %v393, 0.0
      %vm458 = vcmp.gt.f32.partialorder %v394, 0.0
      %vm459 = vcmp.gt.f32.partialorder %v395, 0.0
      %vm460 = vcmp.gt.f32.partialorder %v396, 0.0
      %vm461 = vcmp.gt.f32.partialorder %v397, 0.0
      %vm462 = vcmp.gt.f32.partialorder %v398, 0.0
      %vm463 = vcmp.gt.f32.partialorder %v399, 0.0
      %vm464 = vcmp.gt.f32.partialorder %v400, 0.0
      %vm465 = vcmp.gt.f32.partialorder %v401, 0.0
      %vm466 = vcmp.gt.f32.partialorder %v402, 0.0
      %vm467 = vcmp.gt.f32.partialorder %v403, 0.0
      %vm468 = vcmp.gt.f32.partialorder %v404, 0.0
      %vm469 = vcmp.gt.f32.partialorder %v405, 0.0
      %vm470 = vcmp.gt.f32.partialorder %v406, 0.0
      %vm471 = vcmp.gt.f32.partialorder %v407, 0.0
      %vm472 = vcmp.gt.f32.partialorder %v408, 0.0
      %vm473 = vcmp.gt.f32.partialorder %v409, 0.0
      %vm474 = vcmp.gt.f32.partialorder %v410, 0.0
      %vm475 = vcmp.gt.f32.partialorder %v411, 0.0
      %vm476 = vcmp.gt.f32.partialorder %v412, 0.0
      %vm477 = vcmp.gt.f32.partialorder %v413, 0.0
      %vm478 = vcmp.gt.f32.partialorder %v414, 0.0
      %vm479 = vcmp.gt.f32.partialorder %v415, 0.0
      %vm480 = vcmp.gt.f32.partialorder %v416, 0.0
      %v481 = vmul.f32 %v385, 0.01
      %v482 = vmul.f32 %v386, 0.01
      %v483 = vmul.f32 %v387, 0.01
      %v484 = vmul.f32 %v388, 0.01
      %v485 = vmul.f32 %v389, 0.01
      %v486 = vmul.f32 %v390, 0.01
      %v487 = vmul.f32 %v391, 0.01
      %v488 = vmul.f32 %v392, 0.01
      %v489 = vmul.f32 %v393, 0.01
      %v490 = vmul.f32 %v394, 0.01
      %v491 = vmul.f32 %v395, 0.01
      %v492 = vmul.f32 %v396, 0.01
      %v493 = vmul.f32 %v397, 0.01
      %v494 = vmul.f32 %v398, 0.01
      %v495 = vmul.f32 %v399, 0.01
      %v496 = vmul.f32 %v400, 0.01
      %v497 = vmul.f32 %v401, 0.01
      %v498 = vmul.f32 %v402, 0.01
      %v499 = vmul.f32 %v403, 0.01
      %v500 = vmul.f32 %v404, 0.01
      %v501 = vmul.f32 %v405, 0.01
      %v502 = vmul.f32 %v406, 0.01
      %v503 = vmul.f32 %v407, 0.01
      %v504 = vmul.f32 %v408, 0.01
      %v505 = vmul.f32 %v409, 0.01
      %v506 = vmul.f32 %v410, 0.01
      %v507 = vmul.f32 %v411, 0.01
      %v508 = vmul.f32 %v412, 0.01
      %v509 = vmul.f32 %v413, 0.01
      %v510 = vmul.f32 %v414, 0.01
      %v511 = vmul.f32 %v415, 0.01
      %v512 = vmul.f32 %v416, 0.01
      %v513 = vsel %vm449, %v385, %v481
      %v514 = vsel %vm450, %v386, %v482
      %v515 = vsel %vm451, %v387, %v483
      %v516 = vsel %vm452, %v388, %v484
      %v517 = vsel %vm453, %v389, %v485
      %v518 = vsel %vm454, %v390, %v486
      %v519 = vsel %vm455, %v391, %v487
      %v520 = vsel %vm456, %v392, %v488
      %v521 = vsel %vm457, %v393, %v489
      %v522 = vsel %vm458, %v394, %v490
      %v523 = vsel %vm459, %v395, %v491
      %v524 = vsel %vm460, %v396, %v492
      %v525 = vsel %vm461, %v397, %v493
      %v526 = vsel %vm462, %v398, %v494
      %v527 = vsel %vm463, %v399, %v495
      %v528 = vsel %vm464, %v400, %v496
      %v529 = vsel %vm465, %v401, %v497
      %v530 = vsel %vm466, %v402, %v498
      %v531 = vsel %vm467, %v403, %v499
      %v532 = vsel %vm468, %v404, %v500
      %v533 = vsel %vm469, %v405, %v501
      %v534 = vsel %vm470, %v406, %v502
      %v535 = vsel %vm471, %v407, %v503
      %v536 = vsel %vm472, %v408, %v504
      %v537 = vsel %vm473, %v409, %v505
      %v538 = vsel %vm474, %v410, %v506
      %v539 = vsel %vm475, %v411, %v507
      %v540 = vsel %vm476, %v412, %v508
      %v541 = vsel %vm477, %v413, %v509
      %v542 = vsel %vm478, %v414, %v510
      %v543 = vsel %vm479, %v415, %v511
      %v544 = vsel %vm480, %v416, %v512
      %v545 = vadd.f32 %v417, %v513
      %v546 = vadd.f32 %v418, %v514
      %v547 = vadd.f32 %v419, %v515
      %v548 = vadd.f32 %v420, %v516
      %v549 = vadd.f32 %v421, %v517
      %v550 = vadd.f32 %v422, %v518
      %v551 = vadd.f32 %v423, %v519
      %v552 = vadd.f32 %v424, %v520
      %v553 = vadd.f32 %v425, %v521
      %v554 = vadd.f32 %v426, %v522
      %v555 = vadd.f32 %v427, %v523
      %v556 = vadd.f32 %v428, %v524
      %v557 = vadd.f32 %v429, %v525
      %v558 = vadd.f32 %v430, %v526
      %v559 = vadd.f32 %v431, %v527
      %v560 = vadd.f32 %v432, %v528
      %v561 = vadd.f32 %v433, %v529
      %v562 = vadd.f32 %v434, %v530
      %v563 = vadd.f32 %v435, %v531
      %v564 = vadd.f32 %v436, %v532
      %v565 = vadd.f32 %v437, %v533
      %v566 = vadd.f32 %v438, %v534
      %v567 = vadd.f32 %v439, %v535
      %v568 = vadd.f32 %v440, %v536
      %v569 = vadd.f32 %v441, %v537
      %v570 = vadd.f32 %v442, %v538
      %v571 = vadd.f32 %v443, %v539
      %v572 = vadd.f32 %v444, %v540
      %v573 = vadd.f32 %v445, %v541
      %v574 = vadd.f32 %v446, %v542
      %v575 = vadd.f32 %v447, %v543
      %v576 = vadd.f32 %v448, %v544
      %vm577 = vcmask 31744
      %578 = vst.msk [vmem:[%s279] sm:$0xff] %vm577, %v545
      %579 = vst.msk [vmem:[%s279 + $0x8] sm:$0xff] %vm577, %v546
      %580 = vst.msk [vmem:[%s279 + $0x10] sm:$0xff] %vm577, %v547
      %581 = vst.msk [vmem:[%s279 + $0x18] sm:$0xff] %vm577, %v548
      %582 = vst.msk [vmem:[%s279 + $0x20] sm:$0xff] %vm577, %v549
      %583 = vst.msk [vmem:[%s279 + $0x28] sm:$0xff] %vm577, %v550
      %584 = vst.msk [vmem:[%s279 + $0x30] sm:$0xff] %vm577, %v551
      %585 = vst.msk [vmem:[%s279 + $0x38] sm:$0xff] %vm577, %v552
      %586 = vst.msk [vmem:[%s279 + $0x40] sm:$0xff] %vm577, %v553
      %587 = vst.msk [vmem:[%s279 + $0x48] sm:$0xff] %vm577, %v554
      %588 = vst.msk [vmem:[%s279 + $0x50] sm:$0xff] %vm577, %v555
      %589 = vst.msk [vmem:[%s279 + $0x58] sm:$0xff] %vm577, %v556
      %590 = vst.msk [vmem:[%s279 + $0x60] sm:$0xff] %vm577, %v557
      %591 = vst.msk [vmem:[%s279 + $0x68] sm:$0xff] %vm577, %v558
      %592 = vst.msk [vmem:[%s279 + $0x70] sm:$0xff] %vm577, %v559
      %593 = vst.msk [vmem:[%s279 + $0x78] sm:$0xff] %vm577, %v560
      %594 = vst.msk [vmem:[%s279 + $0x80] sm:$0xff] %vm577, %v561
      %595 = vst.msk [vmem:[%s279 + $0x88] sm:$0xff] %vm577, %v562
      %596 = vst.msk [vmem:[%s279 + $0x90] sm:$0xff] %vm577, %v563
      %597 = vst.msk [vmem:[%s279 + $0x98] sm:$0xff] %vm577, %v564
      %598 = vst.msk [vmem:[%s279 + $0xa0] sm:$0xff] %vm577, %v565
      %599 = vst.msk [vmem:[%s279 + $0xa8] sm:$0xff] %vm577, %v566
      %600 = vst.msk [vmem:[%s279 + $0xb0] sm:$0xff] %vm577, %v567
      %601 = vst.msk [vmem:[%s279 + $0xb8] sm:$0xff] %vm577, %v568
      %602 = vst.msk [vmem:[%s279 + $0xc0] sm:$0xff] %vm577, %v569
      %603 = vst.msk [vmem:[%s279 + $0xc8] sm:$0xff] %vm577, %v570
      %604 = vst.msk [vmem:[%s279 + $0xd0] sm:$0xff] %vm577, %v571
      %605 = vst.msk [vmem:[%s279 + $0xd8] sm:$0xff] %vm577, %v572
      %606 = vst.msk [vmem:[%s279 + $0xe0] sm:$0xff] %vm577, %v573
      %607 = vst.msk [vmem:[%s279 + $0xe8] sm:$0xff] %vm577, %v574
      %608 = vst.msk [vmem:[%s279 + $0xf0] sm:$0xff] %vm577, %v575
      %609 = vst.msk [vmem:[%s279 + $0xf8] sm:$0xff] %vm577, %v576
      %s610 = smul.u32 16, %s20
      %p611 = scmp.lt.s32.totalorder %s19, 1
      %s612 = scalar_select %p611, %s19, 1
      %p613 = scmp.lt.s32.totalorder %s610, 15
      %s614 = scalar_select %p613, %s610, 15
      %s615 = smul.addr %s614, 2
      %s616 = smul.addr %s612, 32
      %s617 = sadd.s32 %s615, %s616
      %s618 = smul.addr %s617, 8
      %s619 = scalar_lea.vmem %s4, %s618
      // Predicated region
      $region37: #{residual_block_forward.5} parent=35 // pred_check
        %p620 = pneg %p145
      $region38: #{residual_block_forward.5} parent=35 // pred_check_branch
        %622 = sbr.rel (%p620) target = $region40
      $region39: #{residual_block_forward.5} parent=35 // pred_region
        %s623 = smul.u32 16, %s20
      $region40: #{residual_block_forward.5} parent=35 // pred_fallthru
        _
    $region36: #{residual_block_forward.5} parent=5 // pred_fallthru
      _
    %p624 = scmp.le.s32.totalorder 2, %s10
    // Predicated region
    $region41: #{residual_block_forward.5} parent=5 // pred_check
      %p625 = pneg %p624
    $region42: #{residual_block_forward.5} parent=5 // pred_check_branch
      %627 = sbr.rel (%p625) target = $region44
    $region43: #{residual_block_forward.5} parent=5 // pred_region
      %s628 = ssub.s32 %s10, 2
      // Predicated region
      $region45: #{residual_block_forward.5} parent=43 // pred_check
        %p629 = pneg %p151
      $region46: #{residual_block_forward.5} parent=43 // pred_check_branch
        %631 = sbr.rel (%p629) target = $region48
      $region47: #{residual_block_forward.5} parent=43 // pred_region
        %s632 = smul.u32 16, %s22
        %p633 = scmp.lt.s32.totalorder %s21, 1
        %s634 = scalar_select %p633, %s21, 1
        %p635 = scmp.lt.s32.totalorder %s632, 15
        %s636 = scalar_select %p635, %s632, 15
        %s637 = smul.addr %s636, 2
        %s638 = smul.addr %s634, 32
        %s639 = sadd.s32 %s637, %s638
        %s640 = smul.addr %s639, 8
        %s641 = scalar_lea.vmem %s4, %s640
      $region48: #{residual_block_forward.5} parent=43 // pred_fallthru
        _
    $region44: #{residual_block_forward.5} parent=5 // pred_fallthru
      _
  $region6: #{residual_block_forward.5} parent=0 // loop_footer
    %s14 = sadd.s32 1, %s10
  $region7: #{residual_block_forward.5} parent=0 // loop_footer_branch
    %9 = sbr.rel target = $region3
  $region8: #{residual_block_forward.5} parent=0 // loop_exit
    _

// kernel: residual_block_forward.4
$region0: #{residual_block_forward.4}
  #allocation0 [shape = 'u32[]', space=smem, size = 0x4, offset = 0x4, fixed_abs, tag = 'smem constant byte address 0x4 - core index']
  #allocation1 [shape = 'u32[72,128]{1,0:T(1,128)}', space=vmem, size = 0x9000, scoped, tag = 'internal scratch']
  #allocation2 [shape = 'f32[18,18,2]{2,1,0:T(8,128)}', space=vmem, size = 0x36000, scoped, tag = 'scratch operand']
  #allocation3 [shape = 'f32[256,4]{1,0:T(8,128)}', space=vmem, size = 0x20000, scoped, tag = 'scratch operand']
  %s0 = inlined_call_operand.vmem [shape: bf16[2,16,16,2], index: 0, kind: input, shape index: {}]
  %s1 = inlined_call_operand.vmem [shape: f32[1,2], index: 1, kind: input, shape index: {}]
  %s2 = inlined_call_operand.vmem [shape: f32[1,2], index: 2, kind: input, shape index: {}]
  %s3 = inlined_call_operand.vmem [shape: bf16[9,2,4], index: 3, kind: input, shape index: {}]
  %s4 = inlined_call_operand.vmem [shape: bf16[2,16,16,4], index: 4, kind: output, shape index: {0}]
  %s5 = inlined_call_operand.vmem [shape: f32[2,2,4], index: 5, kind: output, shape index: {1}]
  %6 = xla_tuple %s4, %s5
  %s7 = sld [smem:[#allocation0]]
  $region57: #{residual_block_forward.4} parent=0
    _
  %s9 = ssub.s32 1, %s7
  %s10 = scalar_select 0, %s9, %s7
  loop: start=0, step=1, limit=4
  $region2: #{residual_block_forward.4} parent=0 // loop_pre_header
    _
  $region3: #{residual_block_forward.4} parent=0 // loop_header
    %s12 = sphi 0, %s16
    %p13 = scmp.ge.s32.totalorder %s12, 4
    %s22 = sphi 0, %s24
    %s25 = sphi 0, %s22
    %s26 = sphi 0, %s25
    %s42 = sphi 0, %s26
    %s46 = sphi 0, %s46
    %s48 = sphi 0, %s46
    %s49 = sphi 0, %s48
    %s63 = sphi 0, %s49
    %s67 = sphi 0, %s67
    %s69 = sphi 0, %s67
    %s70 = sphi 0, %s69
    %s84 = sphi 0, %s70
    %s88 = sphi 0, %s88
    %s90 = sphi 0, %s88
    %s91 = sphi 0, %s90
    %s105 = sphi 0, %s91
    %s111 = sphi 0, %s113
    %s114 = sphi 0, %s111
    %s115 = sphi 0, %s114
    %s131 = sphi 0, %s115
    %s137 = sphi 0, %s139
    %s140 = sphi 0, %s137
    %s141 = sphi 0, %s140
    %s157 = sphi 0, %s141
  $region4: #{residual_block_forward.4} parent=0 // loop_header_branch
    %15 = sbr.rel (%p13) target = $region8
  $region5: #{residual_block_forward.4} parent=0 // loop_body
    %s17 = ssub.s32 %s12, 1
    %s18 = ssub.s32 %s12, 2
    %s19 = sadd.s32 %s12, 1
    %s20 = ssub.s32 %s12, %s19
    %p21 = scmp.eq.s32.totalorder %s20, 0
    %s23 = sadd.s32 %s22, 1
    %s24 = scalar_select %p21, %s22, %s23
    %p27 = pneg %p21
    %p28 = scmp.eq.s32.totalorder %s12, 1
    %p29 = por %p27, %p28
    %p30 = scmp.ne.s32.totalorder %s22, %s25
    %p31 = scmp.eq.s32.totalorder %s12, 0
    %p32 = por %p30, %p31
    %p33 = scmp.ne.s32.totalorder %s22, %s25
    %p34 = scmp.eq.s32.totalorder %s17, 1
    %p35 = por %p33, %p34
    %p36 = scmp.ne.s32.totalorder %s25, %s26
    %p37 = scmp.eq.s32.totalorder %s17, 0
    %p38 = por %p36, %p37
    %p39 = scmp.ne.s32.totalorder %s25, %s26
    %p40 = scmp.eq.s32.totalorder %s18, 1
    %p41 = por %p39, %p40
    %p43 = scmp.ne.s32.totalorder %s26, %s42
    %p44 = scmp.eq.s32.totalorder %s18, 0
    %p45 = por %p43, %p44
    %s47 = sadd.s32 %s46, 1
    %p50 = scmp.eq.s32.totalorder %s12, 1
    %p51 = scmp.ne.s32.totalorder %s46, %s48
    %p52 = scmp.eq.s32.totalorder %s12, 0
    %p53 = por %p51, %p52
    %p54 = scmp.ne.s32.totalorder %s46, %s48
    %p55 = scmp.eq.s32.totalorder %s17, 1
    %p56 = por %p54, %p55
    %p57 = scmp.ne.s32.totalorder %s48, %s49
    %p58 = scmp.eq.s32.totalorder %s17, 0
    %p59 = por %p57, %p58
    %p60 = scmp.ne.s32.totalorder %s48, %s49
    %p61 = scmp.eq.s32.totalorder %s18, 1
    %p62 = por %p60, %p61
    %p64 = scmp.ne.s32.totalorder %s49, %s63
    %p65 = scmp.eq.s32.totalorder %s18, 0
    %p66 = por %p64, %p65
    %s68 = sadd.s32 %s67, 1
    %p71 = scmp.eq.s32.totalorder %s12, 1
    %p72 = scmp.ne.s32.totalorder %s67, %s69
    %p73 = scmp.eq.s32.totalorder %s12, 0
    %p74 = por %p72, %p73
    %p75 = scmp.ne.s32.totalorder %s67, %s69
    %p76 = scmp.eq.s32.totalorder %s17, 1
    %p77 = por %p75, %p76
    %p78 = scmp.ne.s32.totalorder %s69, %s70
    %p79 = scmp.eq.s32.totalorder %s17, 0
    %p80 = por %p78, %p79
    %p81 = scmp.ne.s32.totalorder %s69, %s70
    %p82 = scmp.eq.s32.totalorder %s18, 1
    %p83 = por %p81, %p82
    %p85 = scmp.ne.s32.totalorder %s70, %s84
    %p86 = scmp.eq.s32.totalorder %s18, 0
    %p87 = por %p85, %p86
    %s89 = sadd.s32 %s88, 1
    %p92 = scmp.eq.s32.totalorder %s12, 1
    %p93 = scmp.ne.s32.totalorder %s88, %s90
    %p94 = scmp.eq.s32.totalorder %s12, 0
    %p95 = por %p93, %p94
    %p96 = scmp.ne.s32.totalorder %s88, %s90
    %p97 = scmp.eq.s32.totalorder %s17, 1
    %p98 = por %p96, %p97
    %p99 = scmp.ne.s32.totalorder %s90, %s91
    %p100 = scmp.eq.s32.totalorder %s17, 0
    %p101 = por %p99, %p100
    %p102 = scmp.ne.s32.totalorder %s90, %s91
    %p103 = scmp.eq.s32.totalorder %s18, 1
    %p104 = por %p102, %p103
    %p106 = scmp.ne.s32.totalorder %s91, %s105
    %p107 = scmp.eq.s32.totalorder %s18, 0
    %p108 = por %p106, %p107
    %s109 = ssub.s32 %s12, %s19
    %p110 = scmp.eq.s32.totalorder %s109, 0
    %s112 = sadd.s32 %s111, 1
    %s113 = scalar_select %p110, %s111, %s112
    %p116 = pneg %p110
    %p117 = scmp.eq.s32.totalorder %s12, 1
    %p118 = por %p116, %p117
    %p119 = scmp.ne.s32.totalorder %s111, %s114
    %p120 = scmp.eq.s32.totalorder %s12, 0
    %p121 = por %p119, %p120
    %p122 = scmp.ne.s32.totalorder %s111, %s114
    %p123 = scmp.eq.s32.totalorder %s17, 1
    %p124 = por %p122, %p123
    %p125 = scmp.ne.s32.totalorder %s114, %s115
    %p126 = scmp.eq.s32.totalorder %s17, 0
    %p127 = por %p125, %p126
    %p128 = scmp.ne.s32.totalorder %s114, %s115
    %p129 = scmp.eq.s32.totalorder %s18, 1
    %p130 = por %p128, %p129
    %p132 = scmp.ne.s32.totalorder %s115, %s131
    %p133 = scmp.eq.s32.totalorder %s18, 0
    %p134 = por %p132, %p133
    %s135 = ssub.s32 %s12, %s19
    %p136 = scmp.eq.s32.totalorder %s135, 0
    %s138 = sadd.s32 %s137, 1
    %s139 = scalar_select %p136, %s137, %s138
    %p142 = pneg %p136
    %p143 = scmp.eq.s32.totalorder %s12, 1
    %p144 = por %p142, %p143
    %p145 = scmp.ne.s32.totalorder %s137, %s140
    %p146 = scmp.eq.s32.totalorder %s12, 0
    %p147 = por %p145, %p146
    %p148 = scmp.ne.s32.totalorder %s137, %s140
    %p149 = scmp.eq.s32.totalorder %s17, 1
    %p150 = por %p148, %p149
    %p151 = scmp.ne.s32.totalorder %s140, %s141
    %p152 = scmp.eq.s32.totalorder %s17, 0
    %p153 = por %p151, %p152
    %p154 = scmp.ne.s32.totalorder %s140, %s141
    %p155 = scmp.eq.s32.totalorder %s18, 1
    %p156 = por %p154, %p155
    %p158 = scmp.ne.s32.totalorder %s141, %s157
    %p159 = scmp.eq.s32.totalorder %s18, 0
    %p160 = por %p158, %p159
    %p161 = scmp.le.s32.totalorder 1, %s12
    %p162 = scmp.lt.s32.totalorder %s12, 3
    %p163 = pnand %p161, %p162
    %p164 = pneg %p163
    // Predicated region
    $region9: #{residual_block_forward.4} parent=5 // pred_check
      _
    $region10: #{residual_block_forward.4} parent=5 // pred_check_branch
      %166 = sbr.rel (%p163) target = $region12
    $region11: #{residual_block_forward.4} parent=5 // pred_region
      %s167 = ssub.s32 %s12, 1
      // Predicated region
      $region13: #{residual_block_forward.4} parent=11 // pred_check
        %p168 = pneg %p59
      $region14: #{residual_block_forward.4} parent=11 // pred_check_branch
        %170 = sbr.rel (%p168) target = $region16
      $region15: #{residual_block_forward.4} parent=11 // pred_region
        _
      $region16: #{residual_block_forward.4} parent=11 // pred_fallthru
        _
      // Predicated region
      $region17: #{residual_block_forward.4} parent=11 // pred_check
        %p171 = pneg %p80
      $region18: #{residual_block_forward.4} parent=11 // pred_check_branch
        %173 = sbr.rel (%p171) target = $region20
      $region19: #{residual_block_forward.4} parent=11 // pred_region
        _
      $region20: #{residual_block_forward.4} parent=11 // pred_fallthru
        _
      // Predicated region
      $region21: #{residual_block_forward.4} parent=11 // pred_check
        %p174 = pneg %p101
      $region22: #{residual_block_forward.4} parent=11 // pred_check_branch
        %176 = sbr.rel (%p174) target = $region24
      $region23: #{residual_block_forward.4} parent=11 // pred_region
        _
      $region24: #{residual_block_forward.4} parent=11 // pred_fallthru
        _
    $region12: #{residual_block_forward.4} parent=5 // pred_fallthru
      _
    %p177 = scmp.lt.s32.totalorder %s12, 2
    // Predicated region
    $region25: #{residual_block_forward.4} parent=5 // pred_check
      %p178 = pneg %p177
    $region26: #{residual_block_forward.4} parent=5 // pred_check_branch
      %180 = sbr.rel (%p178) target = $region28
    $region27: #{residual_block_forward.4} parent=5 // pred_region
      // Predicated region
      $region29: #{residual_block_forward.4} parent=27 // pred_check
        %p181 = pneg %p32
      $region30: #{residual_block_forward.4} parent=27 // pred_check_branch
        %183 = sbr.rel (%p181) target = $region32
      $region31: #{residual_block_forward.4} parent=27 // pred_region
        %p184 = scmp.lt.s32.totalorder %s12, 1
        %s185 = scalar_select %p184, %s12, 1
        %s186 = smul.addr %s185, 32
        %s187 = smul.addr %s186, 4
        %s188 = scalar_lea.vmem %s0, %s187
      $region32: #{residual_block_forward.4} parent=27 // pred_fallthru
        _
    $region28: #{residual_block_forward.4} parent=5 // pred_fallthru
      _
    %p189 = scmp.le.s32.totalorder 1, %s12
    %p190 = scmp.lt.s32.totalorder %s12, 3
    %p191 = pnand %p189, %p190
    %p192 = pneg %p191
    // Predicated region
    $region33: #{residual_block_forward.4} parent=5 // pred_check
      _
    $region34: #{residual_block_forward.4} parent=5 // pred_check_branch
      %194 = sbr.rel (%p191) target = $region36
    $region35: #{residual_block_forward.4} parent=5 // pred_region
      %s195 = ssub.s32 %s12, 1
      %p196 = scmp.lt.s32.totalorder %s17, 1
      %s197 = scalar_select %p196, %s17, 1
      %s198 = smul.addr %s197, 32
      %s199 = smul.addr %s198, 4
      %s200 = scalar_lea.vmem %s0, %s199
      %p201 = pneg %p38
      %p202 = pneg %p35
      %p203 = pneg %p59
      %p204 = pneg %p56
      %p205 = pneg %p80
      %p206 = pneg %p77
      %p207 = pneg %p101
      %p208 = pneg %p98
      %p209 = pneg %p127
      %p210 = pneg %p124
      %p211 = scmp.lt.s32.totalorder %s17, 1
      %s212 = scalar_select %p211, %s17, 1
      %s213 = smul.addr %s212, 32
      %s214 = smul.addr %s213, 4
      %s215 = scalar_lea.vmem %s4, %s214
      %p216 = pneg %p153
      %p217 = pneg %p150
      %p218 = scmp.lt.s32.totalorder %s17, 1
      %s219 = scalar_select %p218, %s17, 1
      %s220 = smul.addr %s219, 2
      %s221 = scalar_lea.vmem %s5, %s220
      %p222 = scmp.lt.s32.totalorder %s17, 1
      %s223 = scalar_select %p222, %s17, 1
      %s224 = smul.addr %s223, 32
      %s225 = smul.addr %s224, 4
      %s226 = scalar_lea.vmem %s0, %s225
      %p227 = scmp.lt.s32.totalorder %s17, 1
      %s228 = scalar_select %p227, %s17, 1
      %s229 = smul.addr %s228, 32
      %s230 = smul.addr %s229, 4
      %s231 = scalar_lea.vmem %s4, %s230
      %p232 = scmp.lt.s32.totalorder %s17, 1
      %s233 = scalar_select %p232, %s17, 1
      %s234 = smul.addr %s233, 2
      %s235 = scalar_lea.vmem %s5, %s234
      %v237 = vld [vmem:[%s226] sm:$0xf]
      %v238 = vld [vmem:[%s226 + $0x4] sm:$0xf]
      %v239 = vld [vmem:[%s226 + $0x8] sm:$0xf]
      %v240 = vld [vmem:[%s226 + $0xc] sm:$0xf]
      %v241 = vld [vmem:[%s226 + $0x10] sm:$0xf]
      %v242 = vld [vmem:[%s226 + $0x14] sm:$0xf]
      %v243 = vld [vmem:[%s226 + $0x18] sm:$0xf]
      %v244 = vld [vmem:[%s226 + $0x1c] sm:$0xf]
      %v245 = vld [vmem:[%s226 + $0x20] sm:$0xf]
      %v246 = vld [vmem:[%s226 + $0x24] sm:$0xf]
      %v247 = vld [vmem:[%s226 + $0x28] sm:$0xf]
      %v248 = vld [vmem:[%s226 + $0x2c] sm:$0xf]
      %v249 = vld [vmem:[%s226 + $0x30] sm:$0xf]
      %v250 = vld [vmem:[%s226 + $0x34] sm:$0xf]
      %v251 = vld [vmem:[%s226 + $0x38] sm:$0xf]
      %v252 = vld [vmem:[%s226 + $0x3c] sm:$0xf]
      %v253 = vld [vmem:[%s226 + $0x40] sm:$0xf]
      %v254 = vld [vmem:[%s226 + $0x44] sm:$0xf]
      %v255 = vld [vmem:[%s226 + $0x48] sm:$0xf]
      %v256 = vld [vmem:[%s226 + $0x4c] sm:$0xf]
      %v257 = vld [vmem:[%s226 + $0x50] sm:$0xf]
      %v258 = vld [vmem:[%s226 + $0x54] sm:$0xf]
      %v259 = vld [vmem:[%s226 + $0x58] sm:$0xf]
      %v260 = vld [vmem:[%s226 + $0x5c] sm:$0xf]
      %v261 = vld [vmem:[%s226 + $0x60] sm:$0xf]
      %v262 = vld [vmem:[%s226 + $0x64] sm:$0xf]
      %v263 = vld [vmem:[%s226 + $0x68] sm:$0xf]
      %v264 = vld [vmem:[%s226 + $0x6c] sm:$0xf]
      %v265 = vld [vmem:[%s226 + $0x70] sm:$0xf]
      %v266 = vld [vmem:[%s226 + $0x74] sm:$0xf]
      %v267 = vld [vmem:[%s226 + $0x78] sm:$0xf]
      %v268 = vld [vmem:[%s226 + $0x7c] sm:$0xf]
      %v269 = vunpack.c.l.bf16 %v237
      %v270 = vunpack.c.l.bf16 %v238
      %v271 = vunpack.c.l.bf16 %v239
      %v272 = vunpack.c.l.bf16 %v240
      %v273 = vunpack.c.l.bf16 %v241
      %v274 = vunpack.c.l.bf16 %v242
      %v275 = vunpack.c.l.bf16 %v243
      %v276 = vunpack.c.l.bf16 %v244
      %v277 = vunpack.c.l.bf16 %v245
      %v278 = vunpack.c.l.bf16 %v246
      %v279 = vunpack.c.l.bf16 %v247
      %v280 = vunpack.c.l.bf16 %v248
      %v281 = vunpack.c.l.bf16 %v249
      %v282 = vunpack.c.l.bf16 %v250
      %v283 = vunpack.c.l.bf16 %v251
      %v284 = vunpack.c.l.bf16 %v252
      %v285 = vunpack.c.l.bf16 %v253
      %v286 = vunpack.c.l.bf16 %v254
      %v287 = vunpack.c.l.bf16 %v255
      %v288 = vunpack.c.l.bf16 %v256
      %v289 = vunpack.c.l.bf16 %v257
      %v290 = vunpack.c.l.bf16 %v258
      %v291 = vunpack.c.l.bf16 %v259
      %v292 = vunpack.c.l.bf16 %v260
      %v293 = vunpack.c.l.bf16 %v261
      %v294 = vunpack.c.l.bf16 %v262
      %v295 = vunpack.c.l.bf16 %v263
      %v296 = vunpack.c.l.bf16 %v264
      %v297 = vunpack.c.l.bf16 %v265
      %v298 = vunpack.c.l.bf16 %v266
      %v299 = vunpack.c.l.bf16 %v267
      %v300 = vunpack.c.l.bf16 %v268
      %v301 = vld [vmem:[%s1] sm:$0x1]
      %v303 = vperm.slane %v301, 0
      %v305 = vmul.f32 %v269, %v303
      %v306 = vmul.f32 %v270, %v303
      %v307 = vmul.f32 %v271, %v303
      %v308 = vmul.f32 %v272, %v303
      %v309 = vmul.f32 %v273, %v303
      %v310 = vmul.f32 %v274, %v303
      %v311 = vmul.f32 %v275, %v303
      %v312 = vmul.f32 %v276, %v303
      %v313 = vmul.f32 %v277, %v303
      %v314 = vmul.f32 %v278, %v303
      %v315 = vmul.f32 %v279, %v303
      %v316 = vmul.f32 %v280, %v303
      %v317 = vmul.f32 %v281, %v303
      %v318 = vmul.f32 %v282, %v303
      %v319 = vmul.f32 %v283, %v303
      %v320 = vmul.f32 %v284, %v303
      %v321 = vmul.f32 %v285, %v303
      %v322 = vmul.f32 %v286, %v303
      %v323 = vmul.f32 %v287, %v303
      %v324 = vmul.f32 %v288, %v303
      %v325 = vmul.f32 %v289, %v303
      %v326 = vmul.f32 %v290, %v303
      %v327 = vmul.f32 %v291, %v303
      %v328 = vmul.f32 %v292, %v303
      %v329 = vmul.f32 %v293, %v303
      %v330 = vmul.f32 %v294, %v303
      %v331 = vmul.f32 %v295, %v303
      %v332 = vmul.f32 %v296, %v303
      %v333 = vmul.f32 %v297, %v303
      %v334 = vmul.f32 %v298, %v303
      %v335 = vmul.f32 %v299, %v303
      %v336 = vmul.f32 %v300, %v303
      %v337 = vld [vmem:[%s2] sm:$0x1]
      %v339 = vperm.slane %v337, 0
      %v341 = vadd.f32 %v305, %v339
      %v342 = vadd.f32 %v306, %v339
      %v343 = vadd.f32 %v307, %v339
      %v344 = vadd.f32 %v308, %v339
      %v345 = vadd.f32 %v309, %v339
      %v346 = vadd.f32 %v310, %v339
      %v347 = vadd.f32 %v311, %v339
      %v348 = vadd.f32 %v312, %v339
      %v349 = vadd.f32 %v313, %v339
      %v350 = vadd.f32 %v314, %v339
      %v351 = vadd.f32 %v315, %v339
      %v352 = vadd.f32 %v316, %v339
      %v353 = vadd.f32 %v317, %v339
      %v354 = vadd.f32 %v318, %v339
      %v355 = vadd.f32 %v319, %v339
      %v356 = vadd.f32 %v320, %v339
      %v357 = vadd.f32 %v321, %v339
      %v358 = vadd.f32 %v322, %v339
      %v359 = vadd.f32 %v323, %v339
      %v360 = vadd.f32 %v324, %v339
      %v361 = vadd.f32 %v325, %v339
      %v362 = vadd.f32 %v326, %v339
      %v363 = vadd.f32 %v327, %v339
      %v364 = vadd.f32 %v328, %v339
      %v365 = vadd.f32 %v329, %v339
      %v366 = vadd.f32 %v330, %v339
      %v367 = vadd.f32 %v331, %v339
      %v368 = vadd.f32 %v332, %v339
      %v369 = vadd.f32 %v333, %v339
      %v370 = vadd.f32 %v334, %v339
      %v371 = vadd.f32 %v335, %v339
      %v372 = vadd.f32 %v336, %v339
      %vm373 = vcmp.gt.f32.partialorder %v341, 0.0
      %vm374 = vcmp.gt.f32.partialorder %v342, 0.0
      %vm375 = vcmp.gt.f32.partialorder %v343, 0.0
      %vm376 = vcmp.gt.f32.partialorder %v344, 0.0
      %vm377 = vcmp.gt.f32.partialorder %v345, 0.0
      %vm378 = vcmp.gt.f32.partialorder %v346, 0.0
      %vm379 = vcmp.gt.f32.partialorder %v347, 0.0
      %vm380 = vcmp.gt.f32.partialorder %v348, 0.0
      %vm381 = vcmp.gt.f32.partialorder %v349, 0.0
      %vm382 = vcmp.gt.f32.partialorder %v350, 0.0
      %vm383 = vcmp.gt.f32.partialorder %v351, 0.0
      %vm384 = vcmp.gt.f32.partialorder %v352, 0.0
      %vm385 = vcmp.gt.f32.partialorder %v353, 0.0
      %vm386 = vcmp.gt.f32.partialorder %v354, 0.0
      %vm387 = vcmp.gt.f32.partialorder %v355, 0.0
      %vm388 = vcmp.gt.f32.partialorder %v356, 0.0
      %vm389 = vcmp.gt.f32.partialorder %v357, 0.0
      %vm390 = vcmp.gt.f32.partialorder %v358, 0.0
      %vm391 = vcmp.gt.f32.partialorder %v359, 0.0
      %vm392 = vcmp.gt.f32.partialorder %v360, 0.0
      %vm393 = vcmp.gt.f32.partialorder %v361, 0.0
      %vm394 = vcmp.gt.f32.partialorder %v362, 0.0
      %vm395 = vcmp.gt.f32.partialorder %v363, 0.0
      %vm396 = vcmp.gt.f32.partialorder %v364, 0.0
      %vm397 = vcmp.gt.f32.partialorder %v365, 0.0
      %vm398 = vcmp.gt.f32.partialorder %v366, 0.0
      %vm399 = vcmp.gt.f32.partialorder %v367, 0.0
      %vm400 = vcmp.gt.f32.partialorder %v368, 0.0
      %vm401 = vcmp.gt.f32.partialorder %v369, 0.0
      %vm402 = vcmp.gt.f32.partialorder %v370, 0.0
      %vm403 = vcmp.gt.f32.partialorder %v371, 0.0
      %vm404 = vcmp.gt.f32.partialorder %v372, 0.0
      %v405 = vmul.f32 %v341, 0.01
      %v406 = vmul.f32 %v342, 0.01
      %v407 = vmul.f32 %v343, 0.01
      %v408 = vmul.f32 %v344, 0.01
      %v409 = vmul.f32 %v345, 0.01
      %v410 = vmul.f32 %v346, 0.01
      %v411 = vmul.f32 %v347, 0.01
      %v412 = vmul.f32 %v348, 0.01
      %v413 = vmul.f32 %v349, 0.01
      %v414 = vmul.f32 %v350, 0.01
      %v415 = vmul.f32 %v351, 0.01
      %v416 = vmul.f32 %v352, 0.01
      %v417 = vmul.f32 %v353, 0.01
      %v418 = vmul.f32 %v354, 0.01
      %v419 = vmul.f32 %v355, 0.01
      %v420 = vmul.f32 %v356, 0.01
      %v421 = vmul.f32 %v357, 0.01
      %v422 = vmul.f32 %v358, 0.01
      %v423 = vmul.f32 %v359, 0.01
      %v424 = vmul.f32 %v360, 0.01
      %v425 = vmul.f32 %v361, 0.01
      %v426 = vmul.f32 %v362, 0.01
      %v427 = vmul.f32 %v363, 0.01
      %v428 = vmul.f32 %v364, 0.01
      %v429 = vmul.f32 %v365, 0.01
      %v430 = vmul.f32 %v366, 0.01
      %v431 = vmul.f32 %v367, 0.01
      %v432 = vmul.f32 %v368, 0.01
      %v433 = vmul.f32 %v369, 0.01
      %v434 = vmul.f32 %v370, 0.01
      %v435 = vmul.f32 %v371, 0.01
      %v436 = vmul.f32 %v372, 0.01
      %v437 = vsel %vm373, %v341, %v405
      %v438 = vsel %vm374, %v342, %v406
      %v439 = vsel %vm375, %v343, %v407
      %v440 = vsel %vm376, %v344, %v408
      %v441 = vsel %vm377, %v345, %v409
      %v442 = vsel %vm378, %v346, %v410
      %v443 = vsel %vm379, %v347, %v411
      %v444 = vsel %vm380, %v348, %v412
      %v445 = vsel %vm381, %v349, %v413
      %v446 = vsel %vm382, %v350, %v414
      %v447 = vsel %vm383, %v351, %v415
      %v448 = vsel %vm384, %v352, %v416
      %v449 = vsel %vm385, %v353, %v417
      %v450 = vsel %vm386, %v354, %v418
      %v451 = vsel %vm387, %v355, %v419
      %v452 = vsel %vm388, %v356, %v420
      %v453 = vsel %vm389, %v357, %v421
      %v454 = vsel %vm390, %v358, %v422
      %v455 = vsel %vm391, %v359, %v423
      %v456 = vsel %vm392, %v360, %v424
      %v457 = vsel %vm393, %v361, %v425
      %v458 = vsel %vm394, %v362, %v426
      %v459 = vsel %vm395, %v363, %v427
      %v460 = vsel %vm396, %v364, %v428
      %v461 = vsel %vm397, %v365, %v429
      %v462 = vsel %vm398, %v366, %v430
      %v463 = vsel %vm399, %v367, %v431
      %v464 = vsel %vm400, %v368, %v432
      %v465 = vsel %vm401, %v369, %v433
      %v466 = vsel %vm402, %v370, %v434
      %v467 = vsel %vm403, %v371, %v435
      %v468 = vsel %vm404, %v372, %v436
      %vm469 = vcmask 15360
      %470 = vst.msk [vmem:[#allocation2] sm:$0xff] %vm469, 0.0
      %471 = vst.msk [vmem:[#allocation2 + $0x8] sm:$0xff] %vm469, 0.0
      %vm472 = vcmask 9216
      %473 = vst.msk [vmem:[#allocation2 + $0x10] sm:$0x3] %vm472, 0.0
      %s474 = scalar_lea.vmem [#allocation2], 408
      %475 = vst.msk [vmem:[%s474] sm:$0xff] %vm469, 0.0
      %476 = vst.msk [vmem:[%s474 + $0x8] sm:$0xff] %vm469, 0.0
      %477 = vst.msk [vmem:[%s474 + $0x10] sm:$0x3] %vm472, 0.0
      %vm478 = vcmask 8192
      %479 = vst.msk [vmem:[#allocation2] sm:$0x1] %vm478, 0.0
      %480 = vst.msk [vmem:[#allocation2 + $0x18] sm:$0x1] %vm478, 0.0
      %481 = vst.msk [vmem:[#allocation2 + $0x30] sm:$0x1] %vm478, 0.0
      %482 = vst.msk [vmem:[#allocation2 + $0x48] sm:$0x1] %vm478, 0.0
      %483 = vst.msk [vmem:[#allocation2 + $0x60] sm:$0x1] %vm478, 0.0
      %484 = vst.msk [vmem:[#allocation2 + $0x78] sm:$0x1] %vm478, 0.0
      %485 = vst.msk [vmem:[#allocation2 + $0x90] sm:$0x1] %vm478, 0.0
      %486 = vst.msk [vmem:[#allocation2 + $0xa8] sm:$0x1] %vm478, 0.0
      %487 = vst.msk [vmem:[#allocation2 + $0xc0] sm:$0x1] %vm478, 0.0
      %488 = vst.msk [vmem:[#allocation2 + $0xd8] sm:$0x1] %vm478, 0.0
      %489 = vst.msk [vmem:[#allocation2 + $0xf0] sm:$0x1] %vm478, 0.0
      %490 = vst.msk [vmem:[#allocation2 + $0x108] sm:$0x1] %vm478, 0.0
      %491 = vst.msk [vmem:[#allocation2 + $0x120] sm:$0x1] %vm478, 0.0
      %492 = vst.msk [vmem:[#allocation2 + $0x138] sm:$0x1] %vm478, 0.0
      %493 = vst.msk [vmem:[#allocation2 + $0x150] sm:$0x1] %vm478, 0.0
      %494 = vst.msk [vmem:[#allocation2 + $0x168] sm:$0x1] %vm478, 0.0
      %495 = vst.msk [vmem:[#allocation2 + $0x180] sm:$0x1] %vm478, 0.0
      %496 = vst.msk [vmem:[#allocation2 + $0x198] sm:$0x1] %vm478, 0.0
      %497 = vst.msk [vmem:[#allocation2 + $0x11] sm:$0x1] %vm478, 0.0
      %498 = vst.msk [vmem:[#allocation2 + $0x29] sm:$0x1] %vm478, 0.0
      %499 = vst.msk [vmem:[#allocation2 + $0x41] sm:$0x1] %vm478, 0.0
      %500 = vst.msk [vmem:[#allocation2 + $0x59] sm:$0x1] %vm478, 0.0
      %501 = vst.msk [vmem:[#allocation2 + $0x71] sm:$0x1] %vm478, 0.0
      %502 = vst.msk [vmem:[#allocation2 + $0x89] sm:$0x1] %vm478, 0.0
      %503 = vst.msk [vmem:[#allocation2 + $0xa1] sm:$0x1] %vm478, 0.0
      %504 = vst.msk [vmem:[#allocation2 + $0xb9] sm:$0x1] %vm478, 0.0
      %505 = vst.msk [vmem:[#allocation2 + $0xd1] sm:$0x1] %vm478, 0.0
      %506 = vst.msk [vmem:[#allocation2 + $0xe9] sm:$0x1] %vm478, 0.0
      %507 = vst.msk [vmem:[#allocation2 + $0x101] sm:$0x1] %vm478, 0.0
      %508 = vst.msk [vmem:[#allocation2 + $0x119] sm:$0x1] %vm478, 0.0
      %509 = vst.msk [vmem:[#allocation2 + $0x131] sm:$0x1] %vm478, 0.0
      %510 = vst.msk [vmem:[#allocation2 + $0x149] sm:$0x1] %vm478, 0.0
      %511 = vst.msk [vmem:[#allocation2 + $0x161] sm:$0x1] %vm478, 0.0
      %512 = vst.msk [vmem:[#allocation2 + $0x179] sm:$0x1] %vm478, 0.0
      %513 = vst.msk [vmem:[#allocation2 + $0x191] sm:$0x1] %vm478, 0.0
      %514 = vst.msk [vmem:[#allocation2 + $0x1a9] sm:$0x1] %vm478, 0.0
      %s515 = scalar_lea.vmem [#allocation2], 24
      %516 = vst.msk [vmem:[%s515 + $0x1] sm:$0xff] %vm469, %v437
      %517 = vst.msk [vmem:[%s515 + $0x9] sm:$0xff] %vm469, %v438
      %518 = vst.msk [vmem:[%s515 + $0x19] sm:$0xff] %vm469, %v439
      %519 = vst.msk [vmem:[%s515 + $0x21] sm:$0xff] %vm469, %v440
      %520 = vst.msk [vmem:[%s515 + $0x31] sm:$0xff] %vm469, %v441
      %521 = vst.msk [vmem:[%s515 + $0x39] sm:$0xff] %vm469, %v442
      %522 = vst.msk [vmem:[%s515 + $0x49] sm:$0xff] %vm469, %v443
      %523 = vst.msk [vmem:[%s515 + $0x51] sm:$0xff] %vm469, %v444
      %524 = vst.msk [vmem:[%s515 + $0x61] sm:$0xff] %vm469, %v445
      %525 = vst.msk [vmem:[%s515 + $0x69] sm:$0xff] %vm469, %v446
      %526 = vst.msk [vmem:[%s515 + $0x79] sm:$0xff] %vm469, %v447
      %527 = vst.msk [vmem:[%s515 + $0x81] sm:$0xff] %vm469, %v448
      %528 = vst.msk [vmem:[%s515 + $0x91] sm:$0xff] %vm469, %v449
      %529 = vst.msk [vmem:[%s515 + $0x99] sm:$0xff] %vm469, %v450
      %530 = vst.msk [vmem:[%s515 + $0xa9] sm:$0xff] %vm469, %v451
      %531 = vst.msk [vmem:[%s515 + $0xb1] sm:$0xff] %vm469, %v452
      %532 = vst.msk [vmem:[%s515 + $0xc1] sm:$0xff] %vm469, %v453
      %533 = vst.msk [vmem:[%s515 + $0xc9] sm:$0xff] %vm469, %v454
      %534 = vst.msk [vmem:[%s515 + $0xd9] sm:$0xff] %vm469, %v455
      %535 = vst.msk [vmem:[%s515 + $0xe1] sm:$0xff] %vm469, %v456
      %536 = vst.msk [vmem:[%s515 + $0xf1] sm:$0xff] %vm469, %v457
      %537 = vst.msk [vmem:[%s515 + $0xf9] sm:$0xff] %vm469, %v458
      %538 = vst.msk [vmem:[%s515 + $0x109] sm:$0xff] %vm469, %v459
      %539 = vst.msk [vmem:[%s515 + $0x111] sm:$0xff] %vm469, %v460
      %540 = vst.msk [vmem:[%s515 + $0x121] sm:$0xff] %vm469, %v461
      %541 = vst.msk [vmem:[%s515 + $0x129] sm:$0xff] %vm469, %v462
      %542 = vst.msk [vmem:[%s515 + $0x139] sm:$0xff] %vm469, %v463
      %543 = vst.msk [vmem:[%s515 + $0x141] sm:$0xff] %vm469, %v464
      %544 = vst.msk [vmem:[%s515 + $0x151] sm:$0xff] %vm469, %v465
      %545 = vst.msk [vmem:[%s515 + $0x159] sm:$0xff] %vm469, %v466
      %546 = vst.msk [vmem:[%s515 + $0x169] sm:$0xff] %vm469, %v467
      %547 = vst.msk [vmem:[%s515 + $0x171] sm:$0xff] %vm469, %v468
      %vm548 = vcmask 31744
      %549 = vst.msk [vmem:[#allocation3] sm:$0xff] %vm548, 0.0
      %550 = vst.msk [vmem:[#allocation3 + $0x8] sm:$0xff] %vm548, 0.0
      %551 = vst.msk [vmem:[#allocation3 + $0x10] sm:$0xff] %vm548, 0.0
      %552 = vst.msk [vmem:[#allocation3 + $0x18] sm:$0xff] %vm548, 0.0
      %553 = vst.msk [vmem:[#allocation3 + $0x20] sm:$0xff] %vm548, 0.0
      %554 = vst.msk [vmem:[#allocation3 + $0x28] sm:$0xff] %vm548, 0.0
      %555 = vst.msk [vmem:[#allocation3 + $0x30] sm:$0xff] %vm548, 0.0
      %556 = vst.msk [vmem:[#allocation3 + $0x38] sm:$0xff] %vm548, 0.0
      %557 = vst.msk [vmem:[#allocation3 + $0x40] sm:$0xff] %vm548, 0.0
      %558 = vst.msk [vmem:[#allocation3 + $0x48] sm:$0xff] %vm548, 0.0
      %559 = vst.msk [vmem:[#allocation3 + $0x50] sm:$0xff] %vm548, 0.0
      %560 = vst.msk [vmem:[#allocation3 + $0x58] sm:$0xff] %vm548, 0.0
      %561 = vst.msk [vmem:[#allocation3 + $0x60] sm:$0xff] %vm548, 0.0
      %562 = vst.msk [vmem:[#allocation3 + $0x68] sm:$0xff] %vm548, 0.0
      %563 = vst.msk [vmem:[#allocation3 + $0x70] sm:$0xff] %vm548, 0.0
      %564 = vst.msk [vmem:[#allocation3 + $0x78] sm:$0xff] %vm548, 0.0
      %565 = vst.msk [vmem:[#allocation3 + $0x80] sm:$0xff] %vm548, 0.0
      %566 = vst.msk [vmem:[#allocation3 + $0x88] sm:$0xff] %vm548, 0.0
      %567 = vst.msk [vmem:[#allocation3 + $0x90] sm:$0xff] %vm548, 0.0
      %568 = vst.msk [vmem:[#allocation3 + $0x98] sm:$0xff] %vm548, 0.0
      %569 = vst.msk [vmem:[#allocation3 + $0xa0] sm:$0xff] %vm548, 0.0
      %570 = vst.msk [vmem:[#allocation3 + $0xa8] sm:$0xff] %vm548, 0.0
      %571 = vst.msk [vmem:[#allocation3 + $0xb0] sm:$0xff] %vm548, 0.0
      %572 = vst.msk [vmem:[#allocation3 + $0xb8] sm:$0xff] %vm548, 0.0
      %573 = vst.msk [vmem:[#allocation3 + $0xc0] sm:$0xff] %vm548, 0.0
      %574 = vst.msk [vmem:[#allocation3 + $0xc8] sm:$0xff] %vm548, 0.0
      %575 = vst.msk [vmem:[#allocation3 + $0xd0] sm:$0xff] %vm548, 0.0
      %576 = vst.msk [vmem:[#allocation3 + $0xd8] sm:$0xff] %vm548, 0.0
      %577 = vst.msk [vmem:[#allocation3 + $0xe0] sm:$0xff] %vm548, 0.0
      %578 = vst.msk [vmem:[#allocation3 + $0xe8] sm:$0xff] %vm548, 0.0
      %579 = vst.msk [vmem:[#allocation3 + $0xf0] sm:$0xff] %vm548, 0.0
      %580 = vst.msk [vmem:[#allocation3 + $0xf8] sm:$0xff] %vm548, 0.0
      %v581 = vld [vmem:[#allocation2] sm:$0xff]
      %v582 = vld [vmem:[#allocation2 + $0x8] sm:$0xff]
      %v583 = vld [vmem:[#allocation2 + $0x18] sm:$0xff]
      %v584 = vld [vmem:[#allocation2 + $0x20] sm:$0xff]
      %v585 = vld [vmem:[#allocation2 + $0x30] sm:$0xff]
      %v586 = vld [vmem:[#allocation2 + $0x38] sm:$0xff]
      %v587 = vld [vmem:[#allocation2 + $0x48] sm:$0xff]
      %v588 = vld [vmem:[#allocation2 + $0x50] sm:$0xff]
      %v589 = vld [vmem:[#allocation2 + $0x60] sm:$0xff]
      %v590 = vld [vmem:[#allocation2 + $0x68] sm:$0xff]
      %v591 = vld [vmem:[#allocation2 + $0x78] sm:$0xff]
      %v592 = vld [vmem:[#allocation2 + $0x80] sm:$0xff]
      %v593 = vld [vmem:[#allocation2 + $0x90] sm:$0xff]
      %v594 = vld [vmem:[#allocation2 + $0x98] sm:$0xff]
      %v595 = vld [vmem:[#allocation2 + $0xa8] sm:$0xff]
      %v596 = vld [vmem:[#allocation2 + $0xb0] sm:$0xff]
      %v597 = vld [vmem:[#allocation2 + $0xc0] sm:$0xff]
      %v598 = vld [vmem:[#allocation2 + $0xc8] sm:$0xff]
      %v599 = vld [vmem:[#allocation2 + $0xd8] sm:$0xff]
      %v600 = vld [vmem:[#allocation2 + $0xe0] sm:$0xff]
      %v601 = vld [vmem:[#allocation2 + $0xf0] sm:$0xff]
      %v602 = vld [vmem:[#allocation2 + $0xf8] sm:$0xff]
      %v603 = vld [vmem:[#allocation2 + $0x108] sm:$0xff]
      %v604 = vld [vmem:[#allocation2 + $0x110] sm:$0xff]
      %v605 = vld [vmem:[#allocation2 + $0x120] sm:$0xff]
      %v606 = vld [vmem:[#allocation2 + $0x128] sm:$0xff]
      %v607 = vld [vmem:[#allocation2 + $0x138] sm:$0xff]
      %v608 = vld [vmem:[#allocation2 + $0x140] sm:$0xff]
      %v609 = vld [vmem:[#allocation2 + $0x150] sm:$0xff]
      %v610 = vld [vmem:[#allocation2 + $0x158] sm:$0xff]
      %v611 = vld [vmem:[#allocation2 + $0x168] sm:$0xff]
      %v612 = vld [vmem:[#allocation2 + $0x170] sm:$0xff]
      %v613 = vld [vmem:[#allocation3] sm:$0xff]
      %v614 = vld [vmem:[#allocation3 + $0x8] sm:$0xff]
      %v615 = vld [vmem:[#allocation3 + $0x10] sm:$0xff]
      %v616 = vld [vmem:[#allocation3 + $0x18] sm:$0xff]
      %v617 = vld [vmem:[#allocation3 + $0x20] sm:$0xff]
      %v618 = vld [vmem:[#allocation3 + $0x28] sm:$0xff]
      %v619 = vld [vmem:[#allocation3 + $0x30] sm:$0xff]
      %v620 = vld [vmem:[#allocation3 + $0x38] sm:$0xff]
      %v621 = vld [vmem:[#allocation3 + $0x40] sm:$0xff]
      %v622 = vld [vmem:[#allocation3 + $0x48] sm:$0xff]
      %v623 = vld [vmem:[#allocation3 + $0x50] sm:$0xff]
      %v624 = vld [vmem:[#allocation3 + $0x58] sm:$0xff]
      %v625 = vld [vmem:[#allocation3 + $0x60] sm:$0xff]
      %v626 = vld [vmem:[#allocation3 + $0x68] sm:$0xff]
      %v627 = vld [vmem:[#allocation3 + $0x70] sm:$0xff]
      %v628 = vld [vmem:[#allocation3 + $0x78] sm:$0xff]
      %v629 = vld [vmem:[#allocation3 + $0x80] sm:$0xff]
      %v630 = vld [vmem:[#allocation3 + $0x88] sm:$0xff]
      %v631 = vld [vmem:[#allocation3 + $0x90] sm:$0xff]
      %v632 = vld [vmem:[#allocation3 + $0x98] sm:$0xff]
      %v633 = vld [vmem:[#allocation3 + $0xa0] sm:$0xff]
      %v634 = vld [vmem:[#allocation3 + $0xa8] sm:$0xff]
      %v635 = vld [vmem:[#allocation3 + $0xb0] sm:$0xff]
      %v636 = vld [vmem:[#allocation3 + $0xb8] sm:$0xff]
      %v637 = vld [vmem:[#allocation3 + $0xc0] sm:$0xff]
      %v638 = vld [vmem:[#allocation3 + $0xc8] sm:$0xff]
      %v639 = vld [vmem:[#allocation3 + $0xd0] sm:$0xff]
      %v640 = vld [vmem:[#allocation3 + $0xd8] sm:$0xff]
      %v641 = vld [vmem:[#allocation3 + $0xe0] sm:$0xff]
      %v642 = vld [vmem:[#allocation3 + $0xe8] sm:$0xff]
      %v643 = vld [vmem:[#allocation3 + $0xf0] sm:$0xff]
      %v644 = vld [vmem:[#allocation3 + $0xf8] sm:$0xff]
      %v645 = vpack.c.bf16 %v582, %v581
      %v646 = vpack.c.bf16 %v584, %v583
      %v647 = vpack.c.bf16 %v586, %v585
      %v648 = vpack.c.bf16 %v588, %v587
      %v649 = vpack.c.bf16 %v590, %v589
      %v650 = vpack.c.bf16 %v592, %v591
      %v651 = vpack.c.bf16 %v594, %v593
      %v652 = vpack.c.bf16 %v596, %v595
      %v653 = vpack.c.bf16 %v598, %v597
      %v654 = vpack.c.bf16 %v600, %v599
      %v655 = vpack.c.bf16 %v602, %v601
      %v656 = vpack.c.bf16 %v604, %v603
      %v657 = vpack.c.bf16 %v606, %v605
      %v658 = vpack.c.bf16 %v608, %v607
      %v659 = vpack.c.bf16 %v610, %v609
      %v660 = vpack.c.bf16 %v612, %v611
      %v661 = vld [vmem:[%s3] sm:$0x1]
      %v663 = vsel %vm469, %v645, 0
      %v666 = vsel %vm469, %v646, 0
      %v669 = vsel %vm469, %v647, 0
      %v672 = vsel %vm469, %v648, 0
      %v675 = vsel %vm469, %v649, 0
      %v678 = vsel %vm469, %v650, 0
      %v681 = vsel %vm469, %v651, 0
      %v684 = vsel %vm469, %v652, 0
      %v687 = vsel %vm469, %v653, 0
      %v690 = vsel %vm469, %v654, 0
      %v693 = vsel %vm469, %v655, 0
      %v696 = vsel %vm469, %v656, 0
      %v699 = vsel %vm469, %v657, 0
      %v702 = vsel %vm469, %v658, 0
      %v705 = vsel %vm469, %v659, 0
      %v708 = vsel %vm469, %v660, 0
      %vm710 = vcmask 1040384
      %v712 = vsel %vm710, %v661, 0
      %714 = vmatpush.bf16.msra.mxu0 0
      %715 = vmatpush.bf16.msra.mxu0 0
      %716 = vmatpush.bf16.msra.mxu0 0
      %717 = vmatpush.bf16.msra.mxu0 0
      %718 = vmatpush.bf16.msra.mxu0 0
      %719 = vmatpush.bf16.msra.mxu0 0
      %720 = vmatpush.bf16.msra.mxu0 0
      %721 = vmatpush.bf16.msra.mxu0 %v712
      %722 = vmatmul.bf16.gmra.mxu0 %v663
      %v723 = vpop.f32.mrf.mxu0
      %v724 = vadd.f32 0.0, %v723
      %v725 = vpop.f32.mrf.mxu0
      %v726 = vadd.f32 0.0, %v725
      %727 = vmatmul.bf16.gmra.mxu0 %v666
      %v728 = vpop.f32.mrf.mxu0
      %v729 = vadd.f32 0.0, %v728
      %v730 = vpop.f32.mrf.mxu0
      %v731 = vadd.f32 0.0, %v730
      %732 = vmatmul.bf16.gmra.mxu0 %v669
      %v733 = vpop.f32.mrf.mxu0
      %v734 = vadd.f32 0.0, %v733
      %v735 = vpop.f32.mrf.mxu0
      %v736 = vadd.f32 0.0, %v735
      %737 = vmatmul.bf16.gmra.mxu0 %v672
      %v738 = vpop.f32.mrf.mxu0
      %v739 = vadd.f32 0.0, %v738
      %v740 = vpop.f32.mrf.mxu0
      %v741 = vadd.f32 0.0, %v740
      %742 = vmatmul.bf16.gmra.mxu0 %v675
      %v743 = vpop.f32.mrf.mxu0
      %v744 = vadd.f32 0.0, %v743
      %v745 = vpop.f32.mrf.mxu0
      %v746 = vadd.f32 0.0, %v745
      %747 = vmatmul.bf16.gmra.mxu0 %v678
      %v748 = vpop.f32.mrf.mxu0
      %v749 = vadd.f32 0.0, %v748
      %v750 = vpop.f32.mrf.mxu0
      %v751 = vadd.f32 0.0, %v750
      %752 = vmatmul.bf16.gmra.mxu0 %v681
      %v753 = vpop.f32.mrf.mxu0
      %v754 = vadd.f32 0.0, %v753
      %v755 = vpop.f32.mrf.mxu0
      %v756 = vadd.f32 0.0, %v755
      %757 = vmatmul.bf16.gmra.mxu0 %v684
      %v758 = vpop.f32.mrf.mxu0
      %v759 = vadd.f32 0.0, %v758
      %v760 = vpop.f32.mrf.mxu0
      %v761 = vadd.f32 0.0, %v760
      %762 = vmatmul.bf16.gmra.mxu0 %v687
      %v763 = vpop.f32.mrf.mxu0
      %v764 = vadd.f32 0.0, %v763
      %v765 = vpop.f32.mrf.mxu0
      %v766 = vadd.f32 0.0, %v765
      %767 = vmatmul.bf16.gmra.mxu0 %v690
      %v768 = vpop.f32.mrf.mxu0
      %v769 = vadd.f32 0.0, %v768
      %v770 = vpop.f32.mrf.mxu0
      %v771 = vadd.f32 0.0, %v770
      %772 = vmatmul.bf16.gmra.mxu0 %v693
      %v773 = vpop.f32.mrf.mxu0
      %v774 = vadd.f32 0.0, %v773
      %v775 = vpop.f32.mrf.mxu0
      %v776 = vadd.f32 0.0, %v775
      %777 = vmatmul.bf16.gmra.mxu0 %v696
      %v778 = vpop.f32.mrf.mxu0
      %v779 = vadd.f32 0.0, %v778
      %v780 = vpop.f32.mrf.mxu0
      %v781 = vadd.f32 0.0, %v780
      %782 = vmatmul.bf16.gmra.mxu0 %v699
      %v783 = vpop.f32.mrf.mxu0
      %v784 = vadd.f32 0.0, %v783
      %v785 = vpop.f32.mrf.mxu0
      %v786 = vadd.f32 0.0, %v785
      %787 = vmatmul.bf16.gmra.mxu0 %v702
      %v788 = vpop.f32.mrf.mxu0
      %v789 = vadd.f32 0.0, %v788
      %v790 = vpop.f32.mrf.mxu0
      %v791 = vadd.f32 0.0, %v790
      %792 = vmatmul.bf16.gmra.mxu0 %v705
      %v793 = vpop.f32.mrf.mxu0
      %v794 = vadd.f32 0.0, %v793
      %v795 = vpop.f32.mrf.mxu0
      %v796 = vadd.f32 0.0, %v795
      %797 = vmatmul.bf16.gmra.mxu0 %v708
      %v798 = vpop.f32.mrf.mxu0
      %v799 = vadd.f32 0.0, %v798
      %v800 = vpop.f32.mrf.mxu0
      %v801 = vadd.f32 0.0, %v800
      %802 = vdwg.mxu0
      %v803 = vadd.f32 %v613, %v724
      %v804 = vadd.f32 %v614, %v726
      %v805 = vadd.f32 %v615, %v729
      %v806 = vadd.f32 %v616, %v731
      %v807 = vadd.f32 %v617, %v734
      %v808 = vadd.f32 %v618, %v736
      %v809 = vadd.f32 %v619, %v739
      %v810 = vadd.f32 %v620, %v741
      %v811 = vadd.f32 %v621, %v744
      %v812 = vadd.f32 %v622, %v746
      %v813 = vadd.f32 %v623, %v749
      %v814 = vadd.f32 %v624, %v751
      %v815 = vadd.f32 %v625, %v754
      %v816 = vadd.f32 %v626, %v756
      %v817 = vadd.f32 %v627, %v759
      %v818 = vadd.f32 %v628, %v761
      %v819 = vadd.f32 %v629, %v764
      %v820 = vadd.f32 %v630, %v766
      %v821 = vadd.f32 %v631, %v769
      %v822 = vadd.f32 %v632, %v771
      %v823 = vadd.f32 %v633, %v774
      %v824 = vadd.f32 %v634, %v776
      %v825 = vadd.f32 %v635, %v779
      %v826 = vadd.f32 %v636, %v781
      %v827 = vadd.f32 %v637, %v784
      %v828 = vadd.f32 %v638, %v786
      %v829 = vadd.f32 %v639, %v789
      %v830 = vadd.f32 %v640, %v791
      %v831 = vadd.f32 %v641, %v794
      %v832 = vadd.f32 %v642, %v796
      %v833 = vadd.f32 %v643, %v799
      %v834 = vadd.f32 %v644, %v801
      %835 = vst.msk [vmem:[#allocation3] sm:$0xff] %vm548, %v803
      %836 = vst.msk [vmem:[#allocation3 + $0x8] sm:$0xff] %vm548, %v804
      %837 = vst.msk [vmem:[#allocation3 + $0x10] sm:$0xff] %vm548, %v805
      %838 = vst.msk [vmem:[#allocation3 + $0x18] sm:$0xff] %vm548, %v806
      %839 = vst.msk [vmem:[#allocation3 + $0x20] sm:$0xff] %vm548, %v807
      %840 = vst.msk [vmem:[#allocation3 + $0x28] sm:$0xff] %vm548, %v808
      %841 = vst.msk [vmem:[#allocation3 + $0x30] sm:$0xff] %vm548, %v809
      %842 = vst.msk [vmem:[#allocation3 + $0x38] sm:$0xff] %vm548, %v810
      %843 = vst.msk [vmem:[#allocation3 + $0x40] sm:$0xff] %vm548, %v811
      %844 = vst.msk [vmem:[#allocation3 + $0x48] sm:$0xff] %vm548, %v812
      %845 = vst.msk [vmem:[#allocation3 + $0x50] sm:$0xff] %vm548, %v813
      %846 = vst.msk [vmem:[#allocation3 + $0x58] sm:$0xff] %vm548, %v814
      %847 = vst.msk [vmem:[#allocation3 + $0x60] sm:$0xff] %vm548, %v815
      %848 = vst.msk [vmem:[#allocation3 + $0x68] sm:$0xff] %vm548, %v816
      %849 = vst.msk [vmem:[#allocation3 + $0x70] sm:$0xff] %vm548, %v817
      %850 = vst.msk [vmem:[#allocation3 + $0x78] sm:$0xff] %vm548, %v818
      %851 = vst.msk [vmem:[#allocation3 + $0x80] sm:$0xff] %vm548, %v819
      %852 = vst.msk [vmem:[#allocation3 + $0x88] sm:$0xff] %vm548, %v820
      %853 = vst.msk [vmem:[#allocation3 + $0x90] sm:$0xff] %vm548, %v821
      %854 = vst.msk [vmem:[#allocation3 + $0x98] sm:$0xff] %vm548, %v822
      %855 = vst.msk [vmem:[#allocation3 + $0xa0] sm:$0xff] %vm548, %v823
      %856 = vst.msk [vmem:[#allocation3 + $0xa8] sm:$0xff] %vm548, %v824
      %857 = vst.msk [vmem:[#allocation3 + $0xb0] sm:$0xff] %vm548, %v825
      %858 = vst.msk [vmem:[#allocation3 + $0xb8] sm:$0xff] %vm548, %v826
      %859 = vst.msk [vmem:[#allocation3 + $0xc0] sm:$0xff] %vm548, %v827
      %860 = vst.msk [vmem:[#allocation3 + $0xc8] sm:$0xff] %vm548, %v828
      %861 = vst.msk [vmem:[#allocation3 + $0xd0] sm:$0xff] %vm548, %v829
      %862 = vst.msk [vmem:[#allocation3 + $0xd8] sm:$0xff] %vm548, %v830
      %863 = vst.msk [vmem:[#allocation3 + $0xe0] sm:$0xff] %vm548, %v831
      %864 = vst.msk [vmem:[#allocation3 + $0xe8] sm:$0xff] %vm548, %v832
      %865 = vst.msk [vmem:[#allocation3 + $0xf0] sm:$0xff] %vm548, %v833
      %866 = vst.msk [vmem:[#allocation3 + $0xf8] sm:$0xff] %vm548, %v834
      %v867 = vld [vmem:[#allocation2 + $0x1] sm:$0xff]
      %v868 = vld [vmem:[#allocation2 + $0x9] sm:$0xff]
      %v869 = vld [vmem:[#allocation2 + $0x19] sm:$0xff]
      %v870 = vld [vmem:[#allocation2 + $0x21] sm:$0xff]
      %v871 = vld [vmem:[#allocation2 + $0x31] sm:$0xff]
      %v872 = vld [vmem:[#allocation2 + $0x39] sm:$0xff]
      %v873 = vld [vmem:[#allocation2 + $0x49] sm:$0xff]
      %v874 = vld [vmem:[#allocation2 + $0x51] sm:$0xff]
      %v875 = vld [vmem:[#allocation2 + $0x61] sm:$0xff]
      %v876 = vld [vmem:[#allocation2 + $0x69] sm:$0xff]
      %v877 = vld [vmem:[#allocation2 + $0x79] sm:$0xff]
      %v878 = vld [vmem:[#allocation2 + $0x81] sm:$0xff]
      %v879 = vld [vmem:[#allocation2 + $0x91] sm:$0xff]
      %v880 = vld [vmem:[#allocation2 + $0x99] sm:$0xff]
      %v881 = vld [vmem:[#allocation2 + $0xa9] sm:$0xff]
      %v882 = vld [vmem:[#allocation2 + $0xb1] sm:$0xff]
      %v883 = vld [vmem:[#allocation2 + $0xc1] sm:$0xff]
      %v884 = vld [vmem:[#allocation2 + $0xc9] sm:$0xff]
      %v885 = vld [vmem:[#allocation2 + $0xd9] sm:$0xff]
      %v886 = vld [vmem:[#allocation2 + $0xe1] sm:$0xff]
      %v887 = vld [vmem:[#allocation2 + $0xf1] sm:$0xff]
      %v888 = vld [vmem:[#allocation2 + $0xf9] sm:$0xff]
      %v889 = vld [vmem:[#allocation2 + $0x109] sm:$0xff]
      %v890 = vld [vmem:[#allocation2 + $0x111] sm:$0xff]
      %v891 = vld [vmem:[#allocation2 + $0x121] sm:$0xff]
      %v892 = vld [vmem:[#allocation2 + $0x129] sm:$0xff]
      %v893 = vld [vmem:[#allocation2 + $0x139] sm:$0xff]
      %v894 = vld [vmem:[#allocation2 + $0x141] sm:$0xff]
      %v895 = vld [vmem:[#allocation2 + $0x151] sm:$0xff]
      %v896 = vld [vmem:[#allocation2 + $0x159] sm:$0xff]
      %v897 = vld [vmem:[#allocation2 + $0x169] sm:$0xff]
      %v898 = vld [vmem:[#allocation2 + $0x171] sm:$0xff]
      %v899 = vld [vmem:[#allocation3] sm:$0xff]
      %v900 = vld [vmem:[#allocation3 + $0x8] sm:$0xff]
      %v901 = vld [vmem:[#allocation3 + $0x10] sm:$0xff]
      %v902 = vld [vmem:[#allocation3 + $0x18] sm:$0xff]
      %v903 = vld [vmem:[#allocation3 + $0x20] sm:$0xff]
      %v904 = vld [vmem:[#allocation3 + $0x28] sm:$0xff]
      %v905 = vld [vmem:[#allocation3 + $0x30] sm:$0xff]
      %v906 = vld [vmem:[#allocation3 + $0x38] sm:$0xff]
      %v907 = vld [vmem:[#allocation3 + $0x40] sm:$0xff]
      %v908 = vld [vmem:[#allocation3 + $0x48] sm:$0xff]
      %v909 = vld [vmem:[#allocation3 + $0x50] sm:$0xff]
      %v910 = vld [vmem:[#allocation3 + $0x58] sm:$0xff]
      %v911 = vld [vmem:[#allocation3 + $0x60] sm:$0xff]
      %v912 = vld [vmem:[#allocation3 + $0x68] sm:$0xff]
      %v913 = vld [vmem:[#allocation3 + $0x70] sm:$0xff]
      %v914 = vld [vmem:[#allocation3 + $0x78] sm:$0xff]
      %v915 = vld [vmem:[#allocation3 + $0x80] sm:$0xff]
      %v916 = vld [vmem:[#allocation3 + $0x88] sm:$0xff]
      %v917 = vld [vmem:[#allocation3 + $0x90] sm:$0xff]
      %v918 = vld [vmem:[#allocation3 + $0x98] sm:$0xff]
      %v919 = vld [vmem:[#allocation3 + $0xa0] sm:$0xff]
      %v920 = vld [vmem:[#allocation3 + $0xa8] sm:$0xff]
      %v921 = vld [vmem:[#allocation3 + $0xb0] sm:$0xff]
      %v922 = vld [vmem:[#allocation3 + $0xb8] sm:$0xff]
      %v923 = vld [vmem:[#allocation3 + $0xc0] sm:$0xff]
      %v924 = vld [vmem:[#allocation3 + $0xc8] sm:$0xff]
      %v925 = vld [vmem:[#allocation3 + $0xd0] sm:$0xff]
      %v926 = vld [vmem:[#allocation3 + $0xd8] sm:$0xff]
      %v927 = vld [vmem:[#allocation3 + $0xe0] sm:$0xff]
      %v928 = vld [vmem:[#allocation3 + $0xe8] sm:$0xff]
      %v929 = vld [vmem:[#allocation3 + $0xf0] sm:$0xff]
      %v930 = vld [vmem:[#allocation3 + $0xf8] sm:$0xff]
      %v931 = vpack.c.bf16 %v868, %v867
      %v932 = vpack.c.bf16 %v870, %v869
      %v933 = vpack.c.bf16 %v872, %v871
      %v934 = vpack.c.bf16 %v874, %v873
      %v935 = vpack.c.bf16 %v876, %v875
      %v936 = vpack.c.bf16 %v878, %v877
      %v937 = vpack.c.bf16 %v880, %v879
      %v938 = vpack.c.bf16 %v882, %v881
      %v939 = vpack.c.bf16 %v884, %v883
      %v940 = vpack.c.bf16 %v886, %v885
      %v941 = vpack.c.bf16 %v888, %v887
      %v942 = vpack.c.bf16 %v890, %v889
      %v943 = vpack.c.bf16 %v892, %v891
      %v944 = vpack.c.bf16 %v894, %v893
      %v945 = vpack.c.bf16 %v896, %v895
      %v946 = vpack.c.bf16 %v898, %v897
      %s947 = scalar_lea.vmem %s3, 1
      %v948 = vld [vmem:[%s947] sm:$0x1]
      %v950 = vsel %vm469, %v931, 0
      %v953 = vsel %vm469, %v932, 0
      %v956 = vsel %vm469, %v933, 0
      %v959 = vsel %vm469, %v934, 0
      %v962 = vsel %vm469, %v935, 0
      %v965 = vsel %vm469, %v936, 0
      %v968 = vsel %vm469, %v937, 0
      %v971 = vsel %vm469, %v938, 0
      %v974 = vsel %vm469, %v939, 0
      %v977 = vsel %vm469, %v940, 0
      %v980 = vsel %vm469, %v941, 0
      %v983 = vsel %vm469, %v942, 0
      %v986 = vsel %vm469, %v943, 0
      %v989 = vsel %vm469, %v944, 0
      %v992 = vsel %vm469, %v945, 0
      %v995 = vsel %vm469, %v946, 0
      %v998 = vsel %vm710, %v948, 0
      %1000 = vmatpush.bf16.msra.mxu0 0
      %1001 = vmatpush.bf16.msra.mxu0 0
      %1002 = vmatpush.bf16.msra.mxu0 0
      %1003 = vmatpush.bf16.msra.mxu0 0
      %1004 = vmatpush.bf16.msra.mxu0 0
      %1005 = vmatpush.bf16.msra.mxu0 0
      %1006 = vmatpush.bf16.msra.mxu0 0
      %1007 = vmatpush.bf16.msra.mxu0 %v998
      %1008 = vmatmul.bf16.gmra.mxu0 %v950
      %v1009 = vpop.f32.mrf.mxu0
      %v1010 = vadd.f32 0.0, %v1009
      %v1011 = vpop.f32.mrf.mxu0
      %v1012 = vadd.f32 0.0, %v1011
      %1013 = vmatmul.bf16.gmra.mxu0 %v953
      %v1014 = vpop.f32.mrf.mxu0
      %v1015 = vadd.f32 0.0, %v1014
      %v1016 = vpop.f32.mrf.mxu0
      %v1017 = vadd.f32 0.0, %v1016
      %1018 = vmatmul.bf16.gmra.mxu0 %v956
      %v1019 = vpop.f32.mrf.mxu0
      %v1020 = vadd.f32 0.0, %v1019
      %v1021 = vpop.f32.mrf.mxu0
      %v1022 = vadd.f32 0.0, %v1021
      %1023 = vmatmul.bf16.gmra.mxu0 %v959
      %v1024 = vpop.f32.mrf.mxu0
      %v1025 = vadd.f32 0.0, %v1024
      %v1026 = vpop.f32.mrf.mxu0
      %v1027 = vadd.f32 0.0, %v1026
      %1028 = vmatmul.bf16.gmra.mxu0 %v962
      %v1029 = vpop.f32.mrf.mxu0
      %v1030 = vadd.f32 0.0, %v1029
      %v1031 = vpop.f32.mrf.mxu0
      %v1032 = vadd.f32 0.0, %v1031
      %1033 = vmatmul.bf16.gmra.mxu0 %v965
      %v1034 = vpop.f32.mrf.mxu0
      %v1035 = vadd.f32 0.0, %v1034
      %v1036 = vpop.f32.mrf.mxu0
      %v1037 = vadd.f32 0.0, %v1036
      %1038 = vmatmul.bf16.gmra.mxu0 %v968
      %v1039 = vpop.f32.mrf.mxu0
      %v1040 = vadd.f32 0.0, %v1039
      %v1041 = vpop.f32.mrf.mxu0
      %v1042 = vadd.f32 0.0, %v1041
      %1043 = vmatmul.bf16.gmra.mxu0 %v971
      %v1044 = vpop.f32.mrf.mxu0
      %v1045 = vadd.f32 0.0, %v1044
      %v1046 = vpop.f32.mrf.mxu0
      %v1047 = vadd.f32 0.0, %v1046
      %1048 = vmatmul.bf16.gmra.mxu0 %v974
      %v1049 = vpop.f32.mrf.mxu0
      %v1050 = vadd.f32 0.0, %v1049
      %v1051 = vpop.f32.mrf.mxu0
      %v1052 = vadd.f32 0.0, %v1051
      %1053 = vmatmul.bf16.gmra.mxu0 %v977
      %v1054 = vpop.f32.mrf.mxu0
      %v1055 = vadd.f32 0.0, %v1054
      %v1056 = vpop.f32.mrf.mxu0
      %v1057 = vadd.f32 0.0, %v1056
      %1058 = vmatmul.bf16.gmra.mxu0 %v980
      %v1059 = vpop.f32.mrf.mxu0
      %v1060 = vadd.f32 0.0, %v1059
      %v1061 = vpop.f32.mrf.mxu0
      %v1062 = vadd.f32 0.0, %v1061
      %1063 = vmatmul.bf16.gmra.mxu0 %v983
      %v1064 = vpop.f32.mrf.mxu0
      %v1065 = vadd.f32 0.0, %v1064
      %v1066 = vpop.f32.mrf.mxu0
      %v1067 = vadd.f32 0.0, %v1066
      %1068 = vmatmul.bf16.gmra.mxu0 %v986
      %v1069 = vpop.f32.mrf.mxu0
      %v1070 = vadd.f32 0.0, %v1069
      %v1071 = vpop.f32.mrf.mxu0
      %v1072 = vadd.f32 0.0, %v1071
      %1073 = vmatmul.bf16.gmra.mxu0 %v989
      %v1074 = vpop.f32.mrf.mxu0
      %v1075 = vadd.f32 0.0, %v1074
      %v1076 = vpop.f32.mrf.mxu0
      %v1077 = vadd.f32 0.0, %v1076
      %1078 = vmatmul.bf16.gmra.mxu0 %v992
      %v1079 = vpop.f32.mrf.mxu0
      %v1080 = vadd.f32 0.0, %v1079
      %v1081 = vpop.f32.mrf.mxu0
      %v1082 = vadd.f32 0.0, %v1081
      %1083 = vmatmul.bf16.gmra.mxu0 %v995
      %v1084 = vpop.f32.mrf.mxu0
      %v1085 = vadd.f32 0.0, %v1084
      %v1086 = vpop.f32.mrf.mxu0
      %v1087 = vadd.f32 0.0, %v1086
      %1088 = vdwg.mxu0
      %v1089 = vadd.f32 %v899, %v1010
      %v1090 = vadd.f32 %v900, %v1012
      %v1091 = vadd.f32 %v901, %v1015
      %v1092 = vadd.f32 %v902, %v1017
      %v1093 = vadd.f32 %v903, %v1020
      %v1094 = vadd.f32 %v904, %v1022
      %v1095 = vadd.f32 %v905, %v1025
      %v1096 = vadd.f32 %v906, %v1027
      %v1097 = vadd.f32 %v907, %v1030
      %v1098 = vadd.f32 %v908, %v1032
      %v1099 = vadd.f32 %v909, %v1035
      %v1100 = vadd.f32 %v910, %v1037
      %v1101 = vadd.f32 %v911, %v1040
      %v1102 = vadd.f32 %v912, %v1042
      %v1103 = vadd.f32 %v913, %v1045
      %v1104 = vadd.f32 %v914, %v1047
      %v1105 = vadd.f32 %v915, %v1050
      %v1106 = vadd.f32 %v916, %v1052
      %v1107 = vadd.f32 %v917, %v1055
      %v1108 = vadd.f32 %v918, %v1057
      %v1109 = vadd.f32 %v919, %v1060
      %v1110 = vadd.f32 %v920, %v1062
      %v1111 = vadd.f32 %v921, %v1065
      %v1112 = vadd.f32 %v922, %v1067
      %v1113 = vadd.f32 %v923, %v1070
      %v1114 = vadd.f32 %v924, %v1072
      %v1115 = vadd.f32 %v925, %v1075
      %v1116 = vadd.f32 %v926, %v1077
      %v1117 = vadd.f32 %v927, %v1080
      %v1118 = vadd.f32 %v928, %v1082
      %v1119 = vadd.f32 %v929, %v1085
      %v1120 = vadd.f32 %v930, %v1087
      %1121 = vst.msk [vmem:[#allocation3] sm:$0xff] %vm548, %v1089
      %1122 = vst.msk [vmem:[#allocation3 + $0x8] sm:$0xff] %vm548, %v1090
      %1123 = vst.msk [vmem:[#allocation3 + $0x10] sm:$0xff] %vm548, %v1091
      %1124 = vst.msk [vmem:[#allocation3 + $0x18] sm:$0xff] %vm548, %v1092
      %1125 = vst.msk [vmem:[#allocation3 + $0x20] sm:$0xff] %vm548, %v1093
      %1126 = vst.msk [vmem:[#allocation3 + $0x28] sm:$0xff] %vm548, %v1094
      %1127 = vst.msk [vmem:[#allocation3 + $0x30] sm:$0xff] %vm548, %v1095
      %1128 = vst.msk [vmem:[#allocation3 + $0x38] sm:$0xff] %vm548, %v1096
      %1129 = vst.msk [vmem:[#allocation3 + $0x40] sm:$0xff] %vm548, %v1097
      %1130 = vst.msk [vmem:[#allocation3 + $0x48] sm:$0xff] %vm548, %v1098
      %1131 = vst.msk [vmem:[#allocation3 + $0x50] sm:$0xff] %vm548, %v1099
      %1132 = vst.msk [vmem:[#allocation3 + $0x58] sm:$0xff] %vm548, %v1100
      %1133 = vst.msk [vmem:[#allocation3 + $0x60] sm:$0xff] %vm548, %v1101
      %1134 = vst.msk [vmem:[#allocation3 + $0x68] sm:$0xff] %vm548, %v1102
      %1135 = vst.msk [vmem:[#allocation3 + $0x70] sm:$0xff] %vm548, %v1103
      %1136 = vst.msk [vmem:[#allocation3 + $0x78] sm:$0xff] %vm548, %v1104
      %1137 = vst.msk [vmem:[#allocation3 + $0x80] sm:$0xff] %vm548, %v1105
      %1138 = vst.msk [vmem:[#allocation3 + $0x88] sm:$0xff] %vm548, %v1106
      %1139 = vst.msk [vmem:[#allocation3 + $0x90] sm:$0xff] %vm548, %v1107
      %1140 = vst.msk [vmem:[#allocation3 + $0x98] sm:$0xff] %vm548, %v1108
      %1141 = vst.msk [vmem:[#allocation3 + $0xa0] sm:$0xff] %vm548, %v1109
      %1142 = vst.msk [vmem:[#allocation3 + $0xa8] sm:$0xff] %vm548, %v1110
      %1143 = vst.msk [vmem:[#allocation3 + $0xb0] sm:$0xff] %vm548, %v1111
      %1144 = vst.msk [vmem:[#allocation3 + $0xb8] sm:$0xff] %vm548, %v1112
      %1145 = vst.msk [vmem:[#allocation3 + $0xc0] sm:$0xff] %vm548, %v1113
      %1146 = vst.msk [vmem:[#allocation3 + $0xc8] sm:$0xff] %vm548, %v1114
      %1147 = vst.msk [vmem:[#allocation3 + $0xd0] sm:$0xff] %vm548, %v1115
      %1148 = vst.msk [vmem:[#allocation3 + $0xd8] sm:$0xff] %vm548, %v1116
      %1149 = vst.msk [vmem:[#allocation3 + $0xe0] sm:$0xff] %vm548, %v1117
      %1150 = vst.msk [vmem:[#allocation3 + $0xe8] sm:$0xff] %vm548, %v1118
      %1151 = vst.msk [vmem:[#allocation3 + $0xf0] sm:$0xff] %vm548, %v1119
      %1152 = vst.msk [vmem:[#allocation3 + $0xf8] sm:$0xff] %vm548, %v1120
      %v1153 = vld [vmem:[#allocation2 + $0x2] sm:$0xff]
      %v1154 = vld [vmem:[#allocation2 + $0xa] sm:$0xff]
      %v1155 = vld [vmem:[#allocation2 + $0x1a] sm:$0xff]
      %v1156 = vld [vmem:[#allocation2 + $0x22] sm:$0xff]
      %v1157 = vld [vmem:[#allocation2 + $0x32] sm:$0xff]
      %v1158 = vld [vmem:[#allocation2 + $0x3a] sm:$0xff]
      %v1159 = vld [vmem:[#allocation2 + $0x4a] sm:$0xff]
      %v1160 = vld [vmem:[#allocation2 + $0x52] sm:$0xff]
      %v1161 = vld [vmem:[#allocation2 + $0x62] sm:$0xff]
      %v1162 = vld [vmem:[#allocation2 + $0x6a] sm:$0xff]
      %v1163 = vld [vmem:[#allocation2 + $0x7a] sm:$0xff]
      %v1164 = vld [vmem:[#allocation2 + $0x82] sm:$0xff]
      %v1165 = vld [vmem:[#allocation2 + $0x92] sm:$0xff]
      %v1166 = vld [vmem:[#allocation2 + $0x9a] sm:$0xff]
      %v1167 = vld [vmem:[#allocation2 + $0xaa] sm:$0xff]
      %v1168 = vld [vmem:[#allocation2 + $0xb2] sm:$0xff]
      %v1169 = vld [vmem:[#allocation2 + $0xc2] sm:$0xff]
      %v1170 = vld [vmem:[#allocation2 + $0xca] sm:$0xff]
      %v1171 = vld [vmem:[#allocation2 + $0xda] sm:$0xff]
      %v1172 = vld [vmem:[#allocation2 + $0xe2] sm:$0xff]
      %v1173 = vld [vmem:[#allocation2 + $0xf2] sm:$0xff]
      %v1174 = vld [vmem:[#allocation2 + $0xfa] sm:$0xff]
      %v1175 = vld [vmem:[#allocation2 + $0x10a] sm:$0xff]
      %v1176 = vld [vmem:[#allocation2 + $0x112] sm:$0xff]
      %v1177 = vld [vmem:[#allocation2 + $0x122] sm:$0xff]
      %v1178 = vld [vmem:[#allocation2 + $0x12a] sm:$0xff]
      %v1179 = vld [vmem:[#allocation2 + $0x13a] sm:$0xff]
      %v1180 = vld [vmem:[#allocation2 + $0x142] sm:$0xff]
      %v1181 = vld [vmem:[#allocation2 + $0x152] sm:$0xff]
      %v1182 = vld [vmem:[#allocation2 + $0x15a] sm:$0xff]
      %v1183 = vld [vmem:[#allocation2 + $0x16a] sm:$0xff]
      %v1184 = vld [vmem:[#allocation2 + $0x172] sm:$0xff]
      %v1185 = vld [vmem:[#allocation3] sm:$0xff]
      %v1186 = vld [vmem:[#allocation3 + $0x8] sm:$0xff]
      %v1187 = vld [vmem:[#allocation3 + $0x10] sm:$0xff]
      %v1188 = vld [vmem:[#allocation3 + $0x18] sm:$0xff]
      %v1189 = vld [vmem:[#allocation3 + $0x20] sm:$0xff]
      %v1190 = vld [vmem:[#allocation3 + $0x28] sm:$0xff]
      %v1191 = vld [vmem:[#allocation3 + $0x30] sm:$0xff]
      %v1192 = vld [vmem:[#allocation3 + $0x38] sm:$0xff]
      %v1193 = vld [vmem:[#allocation3 + $0x40] sm:$0xff]
      %v1194 = vld [vmem:[#allocation3 + $0x48] sm:$0xff]
      %v1195 = vld [vmem:[#allocation3 + $0x50] sm:$0xff]
      %v1196 = vld [vmem:[#allocation3 + $0x58] sm:$0xff]
      %v1197 = vld [vmem:[#allocation3 + $0x60] sm:$0xff]
      %v1198 = vld [vmem:[#allocation3 + $0x68] sm:$0xff]
      %v1199 = vld [vmem:[#allocation3 + $0x70] sm:$0xff]
      %v1200 = vld [vmem:[#allocation3 + $0x78] sm:$0xff]
      %v1201 = vld [vmem:[#allocation3 + $0x80] sm:$0xff]
      %v1202 = vld [vmem:[#allocation3 + $0x88] sm:$0xff]
      %v1203 = vld [vmem:[#allocation3 + $0x90] sm:$0xff]
      %v1204 = vld [vmem:[#allocation3 + $0x98] sm:$0xff]
      %v1205 = vld [vmem:[#allocation3 + $0xa0] sm:$0xff]
      %v1206 = vld [vmem:[#allocation3 + $0xa8] sm:$0xff]
      %v1207 = vld [vmem:[#allocation3 + $0xb0] sm:$0xff]
      %v1208 = vld [vmem:[#allocation3 + $0xb8] sm:$0xff]
      %v1209 = vld [vmem:[#allocation3 + $0xc0] sm:$0xff]
      %v1210 = vld [vmem:[#allocation3 + $0xc8] sm:$0xff]
      %v1211 = vld [vmem:[#allocation3 + $0xd0] sm:$0xff]
      %v1212 = vld [vmem:[#allocation3 + $0xd8] sm:$0xff]
      %v1213 = vld [vmem:[#allocation3 + $0xe0] sm:$0xff]
      %v1214 = vld [vmem:[#allocation3 + $0xe8] sm:$0xff]
      %v1215 = vld [vmem:[#allocation3 + $0xf0] sm:$0xff]
      %v1216 = vld [vmem:[#allocation3 + $0xf8] sm:$0xff]
      %v1217 = vpack.c.bf16 %v1154, %v1153
      %v1218 = vpack.c.bf16 %v1156, %v1155
      %v1219 = vpack.c.bf16 %v1158, %v1157
      %v1220 = vpack.c.bf16 %v1160, %v1159
      %v1221 = vpack.c.bf16 %v1162, %v1161
      %v1222 = vpack.c.bf16 %v1164, %v1163
      %v1223 = vpack.c.bf16 %v1166, %v1165
      %v1224 = vpack.c.bf16 %v1168, %v1167
      %v1225 = vpack.c.bf16 %v1170, %v1169
      %v1226 = vpack.c.bf16 %v1172, %v1171
      %v1227 = vpack.c.bf16 %v1174, %v1173
      %v1228 = vpack.c.bf16 %v1176, %v1175
      %v1229 = vpack.c.bf16 %v1178, %v1177
      %v1230 = vpack.c.bf16 %v1180, %v1179
      %v1231 = vpack.c.bf16 %v1182, %v1181
      %v1232 = vpack.c.bf16 %v1184, %v1183
      %s1233 = scalar_lea.vmem %s3, 2
      %v1234 = vld [vmem:[%s1233] sm:$0x1]
      %v1236 = vsel %vm469, %v1217, 0
      %v1239 = vsel %vm469, %v1218, 0
      %v1242 = vsel %vm469, %v1219, 0
      %v1245 = vsel %vm469, %v1220, 0
      %v1248 = vsel %vm469, %v1221, 0
      %v1251 = vsel %vm469, %v1222, 0
      %v1254 = vsel %vm469, %v1223, 0
      %v1257 = vsel %vm469, %v1224, 0
      %v1260 = vsel %vm469, %v1225, 0
      %v1263 = vsel %vm469, %v1226, 0
      %v1266 = vsel %vm469, %v1227, 0
      %v1269 = vsel %vm469, %v1228, 0
      %v1272 = vsel %vm469, %v1229, 0
      %v1275 = vsel %vm469, %v1230, 0
      %v1278 = vsel %vm469, %v1231, 0
      %v1281 = vsel %vm469, %v1232, 0
      %v1284 = vsel %vm710, %v1234, 0
      %1286 = vmatpush.bf16.msra.mxu0 0
      %1287 = vmatpush.bf16.msra.mxu0 0
      %1288 = vmatpush.bf16.msra.mxu0 0
      %1289 = vmatpush.bf16.msra.mxu0 0
      %1290 = vmatpush.bf16.msra.mxu0 0
      %1291 = vmatpush.bf16.msra.mxu0 0
      %1292 = vmatpush.bf16.msra.mxu0 0
      %1293 = vmatpush.bf16.msra.mxu0 %v1284
      %1294 = vmatmul.bf16.gmra.mxu0 %v1236
      %v1295 = vpop.f32.mrf.mxu0
      %v1296 = vadd.f32 0.0, %v1295
      %v1297 = vpop.f32.mrf.mxu0
      %v1298 = vadd.f32 0.0, %v1297
      %1299 = vmatmul.bf16.gmra.mxu0 %v1239
      %v1300 = vpop.f32.mrf.mxu0
      %v1301 = vadd.f32 0.0, %v1300
      %v1302 = vpop.f32.mrf.mxu0
      %v1303 = vadd.f32 0.0, %v1302
      %1304 = vmatmul.bf16.gmra.mxu0 %v1242
      %v1305 = vpop.f32.mrf.mxu0
      %v1306 = vadd.f32 0.0, %v1305
      %v1307 = vpop.f32.mrf.mxu0
      %v1308 = vadd.f32 0.0, %v1307
      %1309 = vmatmul.bf16.gmra.mxu0 %v1245
      %v1310 = vpop.f32.mrf.mxu0
      %v1311 = vadd.f32 0.0, %v1310
      %v1312 = vpop.f32.mrf.mxu0
      %v1313 = vadd.f32 0.0, %v1312
      %1314 = vmatmul.bf16.gmra.mxu0 %v1248
      %v1315 = vpop.f32.mrf.mxu0
      %v1316 = vadd.f32 0.0, %v1315
      %v1317 = vpop.f32.mrf.mxu0
      %v1318 = vadd.f32 0.0, %v1317
      %1319 = vmatmul.bf16.gmra.mxu0 %v1251
      %v1320 = vpop.f32.mrf.mxu0
      %v1321 = vadd.f32 0.0, %v1320
      %v1322 = vpop.f32.mrf.mxu0
      %v1323 = vadd.f32 0.0, %v1322
      %1324 = vmatmul.bf16.gmra.mxu0 %v1254
      %v1325 = vpop.f32.mrf.mxu0
      %v1326 = vadd.f32 0.0, %v1325
      %v1327 = vpop.f32.mrf.mxu0
      %v1328 = vadd.f32 0.0, %v1327
      %1329 = vmatmul.bf16.gmra.mxu0 %v1257
      %v1330 = vpop.f32.mrf.mxu0
      %v1331 = vadd.f32 0.0, %v1330
      %v1332 = vpop.f32.mrf.mxu0
      %v1333 = vadd.f32 0.0, %v1332
      %1334 = vmatmul.bf16.gmra.mxu0 %v1260
      %v1335 = vpop.f32.mrf.mxu0
      %v1336 = vadd.f32 0.0, %v1335
      %v1337 = vpop.f32.mrf.mxu0
      %v1338 = vadd.f32 0.0, %v1337
      %1339 = vmatmul.bf16.gmra.mxu0 %v1263
      %v1340 = vpop.f32.mrf.mxu0
      %v1341 = vadd.f32 0.0, %v1340
      %v1342 = vpop.f32.mrf.mxu0
      %v1343 = vadd.f32 0.0, %v1342
      %1344 = vmatmul.bf16.gmra.mxu0 %v1266
      %v1345 = vpop.f32.mrf.mxu0
      %v1346 = vadd.f32 0.0, %v1345
      %v1347 = vpop.f32.mrf.mxu0
      %v1348 = vadd.f32 0.0, %v1347
      %1349 = vmatmul.bf16.gmra.mxu0 %v1269
      %v1350 = vpop.f32.mrf.mxu0
      %v1351 = vadd.f32 0.0, %v1350
      %v1352 = vpop.f32.mrf.mxu0
      %v1353 = vadd.f32 0.0, %v1352
      %1354 = vmatmul.bf16.gmra.mxu0 %v1272
      %v1355 = vpop.f32.mrf.mxu0
      %v1356 = vadd.f32 0.0, %v1355
      %v1357 = vpop.f32.mrf.mxu0
      %v1358 = vadd.f32 0.0, %v1357
      %1359 = vmatmul.bf16.gmra.mxu0 %v1275
      %v1360 = vpop.f32.mrf.mxu0
      %v1361 = vadd.f32 0.0, %v1360
      %v1362 = vpop.f32.mrf.mxu0
      %v1363 = vadd.f32 0.0, %v1362
      %1364 = vmatmul.bf16.gmra.mxu0 %v1278
      %v1365 = vpop.f32.mrf.mxu0
      %v1366 = vadd.f32 0.0, %v1365
      %v1367 = vpop.f32.mrf.mxu0
      %v1368 = vadd.f32 0.0, %v1367
      %1369 = vmatmul.bf16.gmra.mxu0 %v1281
      %v1370 = vpop.f32.mrf.mxu0
      %v1371 = vadd.f32 0.0, %v1370
      %v1372 = vpop.f32.mrf.mxu0
      %v1373 = vadd.f32 0.0, %v1372
      %1374 = vdwg.mxu0
      %v1375 = vadd.f32 %v1185, %v1296
      %v1376 = vadd.f32 %v1186, %v1298
      %v1377 = vadd.f32 %v1187, %v1301
      %v1378 = vadd.f32 %v1188, %v1303
      %v1379 = vadd.f32 %v1189, %v1306
      %v1380 = vadd.f32 %v1190, %v1308
      %v1381 = vadd.f32 %v1191, %v1311
      %v1382 = vadd.f32 %v1192, %v1313
      %v1383 = vadd.f32 %v1193, %v1316
      %v1384 = vadd.f32 %v1194, %v1318
      %v1385 = vadd.f32 %v1195, %v1321
      %v1386 = vadd.f32 %v1196, %v1323
      %v1387 = vadd.f32 %v1197, %v1326
      %v1388 = vadd.f32 %v1198, %v1328
      %v1389 = vadd.f32 %v1199, %v1331
      %v1390 = vadd.f32 %v1200, %v1333
      %v1391 = vadd.f32 %v1201, %v1336
      %v1392 = vadd.f32 %v1202, %v1338
      %v1393 = vadd.f32 %v1203, %v1341
      %v1394 = vadd.f32 %v1204, %v1343
      %v1395 = vadd.f32 %v1205, %v1346
      %v1396 = vadd.f32 %v1206, %v1348
      %v1397 = vadd.f32 %v1207, %v1351
      %v1398 = vadd.f32 %v1208, %v1353
      %v1399 = vadd.f32 %v1209, %v1356
      %v1400 = vadd.f32 %v1210, %v1358
      %v1401 = vadd.f32 %v1211, %v1361
      %v1402 = vadd.f32 %v1212, %v1363
      %v1403 = vadd.f32 %v1213, %v1366
      %v1404 = vadd.f32 %v1214, %v1368
      %v1405 = vadd.f32 %v1215, %v1371
      %v1406 = vadd.f32 %v1216, %v1373
      %1407 = vst.msk [vmem:[#allocation3] sm:$0xff] %vm548, %v1375
      %1408 = vst.msk [vmem:[#allocation3 + $0x8] sm:$0xff] %vm548, %v1376
      %1409 = vst.msk [vmem:[#allocation3 + $0x10] sm:$0xff] %vm548, %v1377
      %1410 = vst.msk [vmem:[#allocation3 + $0x18] sm:$0xff] %vm548, %v1378
      %1411 = vst.msk [vmem:[#allocation3 + $0x20] sm:$0xff] %vm548, %v1379
      %1412 = vst.msk [vmem:[#allocation3 + $0x28] sm:$0xff] %vm548, %v1380
      %1413 = vst.msk [vmem:[#allocation3 + $0x30] sm:$0xff] %vm548, %v1381
      %1414 = vst.msk [vmem:[#allocation3 + $0x38] sm:$0xff] %vm548, %v1382
      %1415 = vst.msk [vmem:[#allocation3 + $0x40] sm:$0xff] %vm548, %v1383
      %1416 = vst.msk [vmem:[#allocation3 + $0x48] sm:$0xff] %vm548, %v1384
      %1417 = vst.msk [vmem:[#allocation3 + $0x50] sm:$0xff] %vm548, %v1385
      %1418 = vst.msk [vmem:[#allocation3 + $0x58] sm:$0xff] %vm548, %v1386
      %1419 = vst.msk [vmem:[#allocation3 + $0x60] sm:$0xff] %vm548, %v1387
      %1420 = vst.msk [vmem:[#allocation3 + $0x68] sm:$0xff] %vm548, %v1388
      %1421 = vst.msk [vmem:[#allocation3 + $0x70] sm:$0xff] %vm548, %v1389
      %1422 = vst.msk [vmem:[#allocation3 + $0x78] sm:$0xff] %vm548, %v1390
      %1423 = vst.msk [vmem:[#allocation3 + $0x80] sm:$0xff] %vm548, %v1391
      %1424 = vst.msk [vmem:[#allocation3 + $0x88] sm:$0xff] %vm548, %v1392
      %1425 = vst.msk [vmem:[#allocation3 + $0x90] sm:$0xff] %vm548, %v1393
      %1426 = vst.msk [vmem:[#allocation3 + $0x98] sm:$0xff] %vm548, %v1394
      %1427 = vst.msk [vmem:[#allocation3 + $0xa0] sm:$0xff] %vm548, %v1395
      %1428 = vst.msk [vmem:[#allocation3 + $0xa8] sm:$0xff] %vm548, %v1396
      %1429 = vst.msk [vmem:[#allocation3 + $0xb0] sm:$0xff] %vm548, %v1397
      %1430 = vst.msk [vmem:[#allocation3 + $0xb8] sm:$0xff] %vm548, %v1398
      %1431 = vst.msk [vmem:[#allocation3 + $0xc0] sm:$0xff] %vm548, %v1399
      %1432 = vst.msk [vmem:[#allocation3 + $0xc8] sm:$0xff] %vm548, %v1400
      %1433 = vst.msk [vmem:[#allocation3 + $0xd0] sm:$0xff] %vm548, %v1401
      %1434 = vst.msk [vmem:[#allocation3 + $0xd8] sm:$0xff] %vm548, %v1402
      %1435 = vst.msk [vmem:[#allocation3 + $0xe0] sm:$0xff] %vm548, %v1403
      %1436 = vst.msk [vmem:[#allocation3 + $0xe8] sm:$0xff] %vm548, %v1404
      %1437 = vst.msk [vmem:[#allocation3 + $0xf0] sm:$0xff] %vm548, %v1405
      %1438 = vst.msk [vmem:[#allocation3 + $0xf8] sm:$0xff] %vm548, %v1406
      %v1439 = vld [vmem:[%s515] sm:$0xff]
      %v1440 = vld [vmem:[%s515 + $0x8] sm:$0xff]
      %v1441 = vld [vmem:[%s515 + $0x18] sm:$0xff]
      %v1442 = vld [vmem:[%s515 + $0x20] sm:$0xff]
      %v1443 = vld [vmem:[%s515 + $0x30] sm:$0xff]
      %v1444 = vld [vmem:[%s515 + $0x38] sm:$0xff]
      %v1445 = vld [vmem:[%s515 + $0x48] sm:$0xff]
      %v1446 = vld [vmem:[%s515 + $0x50] sm:$0xff]
      %v1447 = vld [vmem:[%s515 + $0x60] sm:$0xff]
      %v1448 = vld [vmem:[%s515 + $0x68] sm:$0xff]
      %v1449 = vld [vmem:[%s515 + $0x78] sm:$0xff]
      %v1450 = vld [vmem:[%s515 + $0x80] sm:$0xff]
      %v1451 = vld [vmem:[%s515 + $0x90] sm:$0xff]
      %v1452 = vld [vmem:[%s515 + $0x98] sm:$0xff]
      %v1453 = vld [vmem:[%s515 + $0xa8] sm:$0xff]
      %v1454 = vld [vmem:[%s515 + $0xb0] sm:$0xff]
      %v1455 = vld [vmem:[%s515 + $0xc0] sm:$0xff]
      %v1456 = vld [vmem:[%s515 + $0xc8] sm:$0xff]
      %v1457 = vld [vmem:[%s515 + $0xd8] sm:$0xff]
      %v1458 = vld [vmem:[%s515 + $0xe0] sm:$0xff]
      %v1459 = vld [vmem:[%s515 + $0xf0] sm:$0xff]
      %v1460 = vld [vmem:[%s515 + $0xf8] sm:$0xff]
      %v1461 = vld [vmem:[%s515 + $0x108] sm:$0xff]
      %v1462 = vld [vmem:[%s515 + $0x110] sm:$0xff]
      %v1463 = vld [vmem:[%s515 + $0x120] sm:$0xff]
      %v1464 = vld [vmem:[%s515 + $0x128] sm:$0xff]
      %v1465 = vld [vmem:[%s515 + $0x138] sm:$0xff]
      %v1466 = vld [vmem:[%s515 + $0x140] sm:$0xff]
      %v1467 = vld [vmem:[%s515 + $0x150] sm:$0xff]
      %v1468 = vld [vmem:[%s515 + $0x158] sm:$0xff]
      %v1469 = vld [vmem:[%s515 + $0x168] sm:$0xff]
      %v1470 = vld [vmem:[%s515 + $0x170] sm:$0xff]
      %v1471 = vld [vmem:[#allocation3] sm:$0xff]
      %v1472 = vld [vmem:[#allocation3 + $0x8] sm:$0xff]
      %v1473 = vld [vmem:[#allocation3 + $0x10] sm:$0xff]
      %v1474 = vld [vmem:[#allocation3 + $0x18] sm:$0xff]
      %v1475 = vld [vmem:[#allocation3 + $0x20] sm:$0xff]
      %v1476 = vld [vmem:[#allocation3 + $0x28] sm:$0xff]
      %v1477 = vld [vmem:[#allocation3 + $0x30] sm:$0xff]
      %v1478 = vld [vmem:[#allocation3 + $0x38] sm:$0xff]
      %v1479 = vld [vmem:[#allocation3 + $0x40] sm:$0xff]
      %v1480 = vld [vmem:[#allocation3 + $0x48] sm:$0xff]
      %v1481 = vld [vmem:[#allocation3 + $0x50] sm:$0xff]
      %v1482 = vld [vmem:[#allocation3 + $0x58] sm:$0xff]
      %v1483 = vld [vmem:[#allocation3 + $0x60] sm:$0xff]
      %v1484 = vld [vmem:[#allocation3 + $0x68] sm:$0xff]
      %v1485 = vld [vmem:[#allocation3 + $0x70] sm:$0xff]
      %v1486 = vld [vmem:[#allocation3 + $0x78] sm:$0xff]
      %v1487 = vld [vmem:[#allocation3 + $0x80] sm:$0xff]
      %v1488 = vld [vmem:[#allocation3 + $0x88] sm:$0xff]
      %v1489 = vld [vmem:[#allocation3 + $0x90] sm:$0xff]
      %v1490 = vld [vmem:[#allocation3 + $0x98] sm:$0xff]
      %v1491 = vld [vmem:[#allocation3 + $0xa0] sm:$0xff]
      %v1492 = vld [vmem:[#allocation3 + $0xa8] sm:$0xff]
      %v1493 = vld [vmem:[#allocation3 + $0xb0] sm:$0xff]
      %v1494 = vld [vmem:[#allocation3 + $0xb8] sm:$0xff]
      %v1495 = vld [vmem:[#allocation3 + $0xc0] sm:$0xff]
      %v1496 = vld [vmem:[#allocation3 + $0xc8] sm:$0xff]
      %v1497 = vld [vmem:[#allocation3 + $0xd0] sm:$0xff]
      %v1498 = vld [vmem:[#allocation3 + $0xd8] sm:$0xff]
      %v1499 = vld [vmem:[#allocation3 + $0xe0] sm:$0xff]
      %v1500 = vld [vmem:[#allocation3 + $0xe8] sm:$0xff]
      %v1501 = vld [vmem:[#allocation3 + $0xf0] sm:$0xff]
      %v1502 = vld [vmem:[#allocation3 + $0xf8] sm:$0xff]
      %v1503 = vpack.c.bf16 %v1440, %v1439
      %v1504 = vpack.c.bf16 %v1442, %v1441
      %v1505 = vpack.c.bf16 %v1444, %v1443
      %v1506 = vpack.c.bf16 %v1446, %v1445
      %v1507 = vpack.c.bf16 %v1448, %v1447
      %v1508 = vpack.c.bf16 %v1450, %v1449
      %v1509 = vpack.c.bf16 %v1452, %v1451
      %v1510 = vpack.c.bf16 %v1454, %v1453
      %v1511 = vpack.c.bf16 %v1456, %v1455
      %v1512 = vpack.c.bf16 %v1458, %v1457
      %v1513 = vpack.c.bf16 %v1460, %v1459
      %v1514 = vpack.c.bf16 %v1462, %v1461
      %v1515 = vpack.c.bf16 %v1464, %v1463
      %v1516 = vpack.c.bf16 %v1466, %v1465
      %v1517 = vpack.c.bf16 %v1468, %v1467
      %v1518 = vpack.c.bf16 %v1470, %v1469
      %s1519 = scalar_lea.vmem %s3, 3
      %v1520 = vld [vmem:[%s1519] sm:$0x1]
      %v1522 = vsel %vm469, %v1503, 0
      %v1525 = vsel %vm469, %v1504, 0
      %v1528 = vsel %vm469, %v1505, 0
      %v1531 = vsel %vm469, %v1506, 0
      %v1534 = vsel %vm469, %v1507, 0
      %v1537 = vsel %vm469, %v1508, 0
      %v1540 = vsel %vm469, %v1509, 0
      %v1543 = vsel %vm469, %v1510, 0
      %v1546 = vsel %vm469, %v1511, 0
      %v1549 = vsel %vm469, %v1512, 0
      %v1552 = vsel %vm469, %v1513, 0
      %v1555 = vsel %vm469, %v1514, 0
      %v1558 = vsel %vm469, %v1515, 0
      %v1561 = vsel %vm469, %v1516, 0
      %v1564 = vsel %vm469, %v1517, 0
      %v1567 = vsel %vm469, %v1518, 0
      %v1570 = vsel %vm710, %v1520, 0
      %1572 = vmatpush.bf16.msra.mxu0 0
      %1573 = vmatpush.bf16.msra.mxu0 0
      %1574 = vmatpush.bf16.msra.mxu0 0
      %1575 = vmatpush.bf16.msra.mxu0 0
      %1576 = vmatpush.bf16.msra.mxu0 0
      %1577 = vmatpush.bf16.msra.mxu0 0
      %1578 = vmatpush.bf16.msra.mxu0 0
      %1579 = vmatpush.bf16.msra.mxu0 %v1570
      %1580 = vmatmul.bf16.gmra.mxu0 %v1522
      %v1581 = vpop.f32.mrf.mxu0
      %v1582 = vadd.f32 0.0, %v1581
      %v1583 = vpop.f32.mrf.mxu0
      %v1584 = vadd.f32 0.0, %v1583
      %1585 = vmatmul.bf16.gmra.mxu0 %v1525
      %v1586 = vpop.f32.mrf.mxu0
      %v1587 = vadd.f32 0.0, %v1586
      %v1588 = vpop.f32.mrf.mxu0
      %v1589 = vadd.f32 0.0, %v1588
      %1590 = vmatmul.bf16.gmra.mxu0 %v1528
      %v1591 = vpop.f32.mrf.mxu0
      %v1592 = vadd.f32 0.0, %v1591
      %v1593 = vpop.f32.mrf.mxu0
      %v1594 = vadd.f32 0.0, %v1593
      %1595 = vmatmul.bf16.gmra.mxu0 %v1531
      %v1596 = vpop.f32.mrf.mxu0
      %v1597 = vadd.f32 0.0, %v1596
      %v1598 = vpop.f32.mrf.mxu0
      %v1599 = vadd.f32 0.0, %v1598
      %1600 = vmatmul.bf16.gmra.mxu0 %v1534
      %v1601 = vpop.f32.mrf.mxu0
      %v1602 = vadd.f32 0.0, %v1601
      %v1603 = vpop.f32.mrf.mxu0
      %v1604 = vadd.f32 0.0, %v1603
      %1605 = vmatmul.bf16.gmra.mxu0 %v1537
      %v1606 = vpop.f32.mrf.mxu0
      %v1607 = vadd.f32 0.0, %v1606
      %v1608 = vpop.f32.mrf.mxu0
      %v1609 = vadd.f32 0.0, %v1608
      %1610 = vmatmul.bf16.gmra.mxu0 %v1540
      %v1611 = vpop.f32.mrf.mxu0
      %v1612 = vadd.f32 0.0, %v1611
      %v1613 = vpop.f32.mrf.mxu0
      %v1614 = vadd.f32 0.0, %v1613
      %1615 = vmatmul.bf16.gmra.mxu0 %v1543
      %v1616 = vpop.f32.mrf.mxu0
      %v1617 = vadd.f32 0.0, %v1616
      %v1618 = vpop.f32.mrf.mxu0
      %v1619 = vadd.f32 0.0, %v1618
      %1620 = vmatmul.bf16.gmra.mxu0 %v1546
      %v1621 = vpop.f32.mrf.mxu0
      %v1622 = vadd.f32 0.0, %v1621
      %v1623 = vpop.f32.mrf.mxu0
      %v1624 = vadd.f32 0.0, %v1623
      %1625 = vmatmul.bf16.gmra.mxu0 %v1549
      %v1626 = vpop.f32.mrf.mxu0
      %v1627 = vadd.f32 0.0, %v1626
      %v1628 = vpop.f32.mrf.mxu0
      %v1629 = vadd.f32 0.0, %v1628
      %1630 = vmatmul.bf16.gmra.mxu0 %v1552
      %v1631 = vpop.f32.mrf.mxu0
      %v1632 = vadd.f32 0.0, %v1631
      %v1633 = vpop.f32.mrf.mxu0
      %v1634 = vadd.f32 0.0, %v1633
      %1635 = vmatmul.bf16.gmra.mxu0 %v1555
      %v1636 = vpop.f32.mrf.mxu0
      %v1637 = vadd.f32 0.0, %v1636
      %v1638 = vpop.f32.mrf.mxu0
      %v1639 = vadd.f32 0.0, %v1638
      %1640 = vmatmul.bf16.gmra.mxu0 %v1558
      %v1641 = vpop.f32.mrf.mxu0
      %v1642 = vadd.f32 0.0, %v1641
      %v1643 = vpop.f32.mrf.mxu0
      %v1644 = vadd.f32 0.0, %v1643
      %1645 = vmatmul.bf16.gmra.mxu0 %v1561
      %v1646 = vpop.f32.mrf.mxu0
      %v1647 = vadd.f32 0.0, %v1646
      %v1648 = vpop.f32.mrf.mxu0
      %v1649 = vadd.f32 0.0, %v1648
      %1650 = vmatmul.bf16.gmra.mxu0 %v1564
      %v1651 = vpop.f32.mrf.mxu0
      %v1652 = vadd.f32 0.0, %v1651
      %v1653 = vpop.f32.mrf.mxu0
      %v1654 = vadd.f32 0.0, %v1653
      %1655 = vmatmul.bf16.gmra.mxu0 %v1567
      %v1656 = vpop.f32.mrf.mxu0
      %v1657 = vadd.f32 0.0, %v1656
      %v1658 = vpop.f32.mrf.mxu0
      %v1659 = vadd.f32 0.0, %v1658
      %1660 = vdwg.mxu0
      %v1661 = vadd.f32 %v1471, %v1582
      %v1662 = vadd.f32 %v1472, %v1584
      %v1663 = vadd.f32 %v1473, %v1587
      %v1664 = vadd.f32 %v1474, %v1589
      %v1665 = vadd.f32 %v1475, %v1592
      %v1666 = vadd.f32 %v1476, %v1594
      %v1667 = vadd.f32 %v1477, %v1597
      %v1668 = vadd.f32 %v1478, %v1599
      %v1669 = vadd.f32 %v1479, %v1602
      %v1670 = vadd.f32 %v1480, %v1604
      %v1671 = vadd.f32 %v1481, %v1607
      %v1672 = vadd.f32 %v1482, %v1609
      %v1673 = vadd.f32 %v1483, %v1612
      %v1674 = vadd.f32 %v1484, %v1614
      %v1675 = vadd.f32 %v1485, %v1617
      %v1676 = vadd.f32 %v1486, %v1619
      %v1677 = vadd.f32 %v1487, %v1622
      %v1678 = vadd.f32 %v1488, %v1624
      %v1679 = vadd.f32 %v1489, %v1627
      %v1680 = vadd.f32 %v1490, %v1629
      %v1681 = vadd.f32 %v1491, %v1632
      %v1682 = vadd.f32 %v1492, %v1634
      %v1683 = vadd.f32 %v1493, %v1637
      %v1684 = vadd.f32 %v1494, %v1639
      %v1685 = vadd.f32 %v1495, %v1642
      %v1686 = vadd.f32 %v1496, %v1644
      %v1687 = vadd.f32 %v1497, %v1647
      %v1688 = vadd.f32 %v1498, %v1649
      %v1689 = vadd.f32 %v1499, %v1652
      %v1690 = vadd.f32 %v1500, %v1654
      %v1691 = vadd.f32 %v1501, %v1657
      %v1692 = vadd.f32 %v1502, %v1659
      %1693 = vst.msk [vmem:[#allocation3] sm:$0xff] %vm548, %v1661
      %1694 = vst.msk [vmem:[#allocation3 + $0x8] sm:$0xff] %vm548, %v1662
      %1695 = vst.msk [vmem:[#allocation3 + $0x10] sm:$0xff] %vm548, %v1663
      %1696 = vst.msk [vmem:[#allocation3 + $0x18] sm:$0xff] %vm548, %v1664
      %1697 = vst.msk [vmem:[#allocation3 + $0x20] sm:$0xff] %vm548, %v1665
      %1698 = vst.msk [vmem:[#allocation3 + $0x28] sm:$0xff] %vm548, %v1666
      %1699 = vst.msk [vmem:[#allocation3 + $0x30] sm:$0xff] %vm548, %v1667
      %1700 = vst.msk [vmem:[#allocation3 + $0x38] sm:$0xff] %vm548, %v1668
      %1701 = vst.msk [vmem:[#allocation3 + $0x40] sm:$0xff] %vm548, %v1669
      %1702 = vst.msk [vmem:[#allocation3 + $0x48] sm:$0xff] %vm548, %v1670
      %1703 = vst.msk [vmem:[#allocation3 + $0x50] sm:$0xff] %vm548, %v1671
      %1704 = vst.msk [vmem:[#allocation3 + $0x58] sm:$0xff] %vm548, %v1672
      %1705 = vst.msk [vmem:[#allocation3 + $0x60] sm:$0xff] %vm548, %v1673
      %1706 = vst.msk [vmem:[#allocation3 + $0x68] sm:$0xff] %vm548, %v1674
      %1707 = vst.msk [vmem:[#allocation3 + $0x70] sm:$0xff] %vm548, %v1675
      %1708 = vst.msk [vmem:[#allocation3 + $0x78] sm:$0xff] %vm548, %v1676
      %1709 = vst.msk [vmem:[#allocation3 + $0x80] sm:$0xff] %vm548, %v1677
      %1710 = vst.msk [vmem:[#allocation3 + $0x88] sm:$0xff] %vm548, %v1678
      %1711 = vst.msk [vmem:[#allocation3 + $0x90] sm:$0xff] %vm548, %v1679
      %1712 = vst.msk [vmem:[#allocation3 + $0x98] sm:$0xff] %vm548, %v1680
      %1713 = vst.msk [vmem:[#allocation3 + $0xa0] sm:$0xff] %vm548, %v1681
      %1714 = vst.msk [vmem:[#allocation3 + $0xa8] sm:$0xff] %vm548, %v1682
      %1715 = vst.msk [vmem:[#allocation3 + $0xb0] sm:$0xff] %vm548, %v1683
      %1716 = vst.msk [vmem:[#allocation3 + $0xb8] sm:$0xff] %vm548, %v1684
      %1717 = vst.msk [vmem:[#allocation3 + $0xc0] sm:$0xff] %vm548, %v1685
      %1718 = vst.msk [vmem:[#allocation3 + $0xc8] sm:$0xff] %vm548, %v1686
      %1719 = vst.msk [vmem:[#allocation3 + $0xd0] sm:$0xff] %vm548, %v1687
      %1720 = vst.msk [vmem:[#allocation3 + $0xd8] sm:$0xff] %vm548, %v1688
      %1721 = vst.msk [vmem:[#allocation3 + $0xe0] sm:$0xff] %vm548, %v1689
      %1722 = vst.msk [vmem:[#allocation3 + $0xe8] sm:$0xff] %vm548, %v1690
      %1723 = vst.msk [vmem:[#allocation3 + $0xf0] sm:$0xff] %vm548, %v1691
      %1724 = vst.msk [vmem:[#allocation3 + $0xf8] sm:$0xff] %vm548, %v1692
      %v1725 = vld [vmem:[%s515 + $0x1] sm:$0xff]
      %v1726 = vld [vmem:[%s515 + $0x9] sm:$0xff]
      %v1727 = vld [vmem:[%s515 + $0x19] sm:$0xff]
      %v1728 = vld [vmem:[%s515 + $0x21] sm:$0xff]
      %v1729 = vld [vmem:[%s515 + $0x31] sm:$0xff]
      %v1730 = vld [vmem:[%s515 + $0x39] sm:$0xff]
      %v1731 = vld [vmem:[%s515 + $0x49] sm:$0xff]
      %v1732 = vld [vmem:[%s515 + $0x51] sm:$0xff]
      %v1733 = vld [vmem:[%s515 + $0x61] sm:$0xff]
      %v1734 = vld [vmem:[%s515 + $0x69] sm:$0xff]
      %v1735 = vld [vmem:[%s515 + $0x79] sm:$0xff]
      %v1736 = vld [vmem:[%s515 + $0x81] sm:$0xff]
      %v1737 = vld [vmem:[%s515 + $0x91] sm:$0xff]
      %v1738 = vld [vmem:[%s515 + $0x99] sm:$0xff]
      %v1739 = vld [vmem:[%s515 + $0xa9] sm:$0xff]
      %v1740 = vld [vmem:[%s515 + $0xb1] sm:$0xff]
      %v1741 = vld [vmem:[%s515 + $0xc1] sm:$0xff]
      %v1742 = vld [vmem:[%s515 + $0xc9] sm:$0xff]
      %v1743 = vld [vmem:[%s515 + $0xd9] sm:$0xff]
      %v1744 = vld [vmem:[%s515 + $0xe1] sm:$0xff]
      %v1745 = vld [vmem:[%s515 + $0xf1] sm:$0xff]
      %v1746 = vld [vmem:[%s515 + $0xf9] sm:$0xff]
      %v1747 = vld [vmem:[%s515 + $0x109] sm:$0xff]
      %v1748 = vld [vmem:[%s515 + $0x111] sm:$0xff]
      %v1749 = vld [vmem:[%s515 + $0x121] sm:$0xff]
      %v1750 = vld [vmem:[%s515 + $0x129] sm:$0xff]
      %v1751 = vld [vmem:[%s515 + $0x139] sm:$0xff]
      %v1752 = vld [vmem:[%s515 + $0x141] sm:$0xff]
      %v1753 = vld [vmem:[%s515 + $0x151] sm:$0xff]
      %v1754 = vld [vmem:[%s515 + $0x159] sm:$0xff]
      %v1755 = vld [vmem:[%s515 + $0x169] sm:$0xff]
      %v1756 = vld [vmem:[%s515 + $0x171] sm:$0xff]
      %v1757 = vld [vmem:[#allocation3] sm:$0xff]
      %v1758 = vld [vmem:[#allocation3 + $0x8] sm:$0xff]
      %v1759 = vld [vmem:[#allocation3 + $0x10] sm:$0xff]
      %v1760 = vld [vmem:[#allocation3 + $0x18] sm:$0xff]
      %v1761 = vld [vmem:[#allocation3 + $0x20] sm:$0xff]
      %v1762 = vld [vmem:[#allocation3 + $0x28] sm:$0xff]
      %v1763 = vld [vmem:[#allocation3 + $0x30] sm:$0xff]
      %v1764 = vld [vmem:[#allocation3 + $0x38] sm:$0xff]
      %v1765 = vld [vmem:[#allocation3 + $0x40] sm:$0xff]
      %v1766 = vld [vmem:[#allocation3 + $0x48] sm:$0xff]
      %v1767 = vld [vmem:[#allocation3 + $0x50] sm:$0xff]
      %v1768 = vld [vmem:[#allocation3 + $0x58] sm:$0xff]
      %v1769 = vld [vmem:[#allocation3 + $0x60] sm:$0xff]
      %v1770 = vld [vmem:[#allocation3 + $0x68] sm:$0xff]
      %v1771 = vld [vmem:[#allocation3 + $0x70] sm:$0xff]
      %v1772 = vld [vmem:[#allocation3 + $0x78] sm:$0xff]
      %v1773 = vld [vmem:[#allocation3 + $0x80] sm:$0xff]
      %v1774 = vld [vmem:[#allocation3 + $0x88] sm:$0xff]
      %v1775 = vld [vmem:[#allocation3 + $0x90] sm:$0xff]
      %v1776 = vld [vmem:[#allocation3 + $0x98] sm:$0xff]
      %v1777 = vld [vmem:[#allocation3 + $0xa0] sm:$0xff]
      %v1778 = vld [vmem:[#allocation3 + $0xa8] sm:$0xff]
      %v1779 = vld [vmem:[#allocation3 + $0xb0] sm:$0xff]
      %v1780 = vld [vmem:[#allocation3 + $0xb8] sm:$0xff]
      %v1781 = vld [vmem:[#allocation3 + $0xc0] sm:$0xff]
      %v1782 = vld [vmem:[#allocation3 + $0xc8] sm:$0xff]
      %v1783 = vld [vmem:[#allocation3 + $0xd0] sm:$0xff]
      %v1784 = vld [vmem:[#allocation3 + $0xd8] sm:$0xff]
      %v1785 = vld [vmem:[#allocation3 + $0xe0] sm:$0xff]
      %v1786 = vld [vmem:[#allocation3 + $0xe8] sm:$0xff]
      %v1787 = vld [vmem:[#allocation3 + $0xf0] sm:$0xff]
      %v1788 = vld [vmem:[#allocation3 + $0xf8] sm:$0xff]
      %v1789 = vpack.c.bf16 %v1726, %v1725
      %v1790 = vpack.c.bf16 %v1728, %v1727
      %v1791 = vpack.c.bf16 %v1730, %v1729
      %v1792 = vpack.c.bf16 %v1732, %v1731
      %v1793 = vpack.c.bf16 %v1734, %v1733
      %v1794 = vpack.c.bf16 %v1736, %v1735
      %v1795 = vpack.c.bf16 %v1738, %v1737
      %v1796 = vpack.c.bf16 %v1740, %v1739
      %v1797 = vpack.c.bf16 %v1742, %v1741
      %v1798 = vpack.c.bf16 %v1744, %v1743
      %v1799 = vpack.c.bf16 %v1746, %v1745
      %v1800 = vpack.c.bf16 %v1748, %v1747
      %v1801 = vpack.c.bf16 %v1750, %v1749
      %v1802 = vpack.c.bf16 %v1752, %v1751
      %v1803 = vpack.c.bf16 %v1754, %v1753
      %v1804 = vpack.c.bf16 %v1756, %v1755
      %s1805 = scalar_lea.vmem %s3, 4
      %v1806 = vld [vmem:[%s1805] sm:$0x1]
      %v1808 = vsel %vm469, %v1789, 0
      %v1811 = vsel %vm469, %v1790, 0
      %v1814 = vsel %vm469, %v1791, 0
      %v1817 = vsel %vm469, %v1792, 0
      %v1820 = vsel %vm469, %v1793, 0
      %v1823 = vsel %vm469, %v1794, 0
      %v1826 = vsel %vm469, %v1795, 0
      %v1829 = vsel %vm469, %v1796, 0
      %v1832 = vsel %vm469, %v1797, 0
      %v1835 = vsel %vm469, %v1798, 0
      %v1838 = vsel %vm469, %v1799, 0
      %v1841 = vsel %vm469, %v1800, 0
      %v1844 = vsel %vm469, %v1801, 0
      %v1847 = vsel %vm469, %v1802, 0
      %v1850 = vsel %vm469, %v1803, 0
      %v1853 = vsel %vm469, %v1804, 0
      %v1856 = vsel %vm710, %v1806, 0
      %1858 = vmatpush.bf16.msra.mxu0 0
      %1859 = vmatpush.bf16.msra.mxu0 0
      %1860 = vmatpush.bf16.msra.mxu0 0
      %1861 = vmatpush.bf16.msra.mxu0 0
      %1862 = vmatpush.bf16.msra.mxu0 0
      %1863 = vmatpush.bf16.msra.mxu0 0
      %1864 = vmatpush.bf16.msra.mxu0 0
      %1865 = vmatpush.bf16.msra.mxu0 %v1856
      %1866 = vmatmul.bf16.gmra.mxu0 %v1808
      %v1867 = vpop.f32.mrf.mxu0
      %v1868 = vadd.f32 0.0, %v1867
      %v1869 = vpop.f32.mrf.mxu0
      %v1870 = vadd.f32 0.0, %v1869
      %1871 = vmatmul.bf16.gmra.mxu0 %v1811
      %v1872 = vpop.f32.mrf.mxu0
      %v1873 = vadd.f32 0.0, %v1872
      %v1874 = vpop.f32.mrf.mxu0
      %v1875 = vadd.f32 0.0, %v1874
      %1876 = vmatmul.bf16.gmra.mxu0 %v1814
      %v1877 = vpop.f32.mrf.mxu0
      %v1878 = vadd.f32 0.0, %v1877
      %v1879 = vpop.f32.mrf.mxu0
      %v1880 = vadd.f32 0.0, %v1879
      %1881 = vmatmul.bf16.gmra.mxu0 %v1817
      %v1882 = vpop.f32.mrf.mxu0
      %v1883 = vadd.f32 0.0, %v1882
      %v1884 = vpop.f32.mrf.mxu0
      %v1885 = vadd.f32 0.0, %v1884
      %1886 = vmatmul.bf16.gmra.mxu0 %v1820
      %v1887 = vpop.f32.mrf.mxu0
      %v1888 = vadd.f32 0.0, %v1887
      %v1889 = vpop.f32.mrf.mxu0
      %v1890 = vadd.f32 0.0, %v1889
      %1891 = vmatmul.bf16.gmra.mxu0 %v1823
      %v1892 = vpop.f32.mrf.mxu0
      %v1893 = vadd.f32 0.0, %v1892
      %v1894 = vpop.f32.mrf.mxu0
      %v1895 = vadd.f32 0.0, %v1894
      %1896 = vmatmul.bf16.gmra.mxu0 %v1826
      %v1897 = vpop.f32.mrf.mxu0
      %v1898 = vadd.f32 0.0, %v1897
      %v1899 = vpop.f32.mrf.mxu0
      %v1900 = vadd.f32 0.0, %v1899
      %1901 = vmatmul.bf16.gmra.mxu0 %v1829
      %v1902 = vpop.f32.mrf.mxu0
      %v1903 = vadd.f32 0.0, %v1902
      %v1904 = vpop.f32.mrf.mxu0
      %v1905 = vadd.f32 0.0, %v1904
      %1906 = vmatmul.bf16.gmra.mxu0 %v1832
      %v1907 = vpop.f32.mrf.mxu0
      %v1908 = vadd.f32 0.0, %v1907
      %v1909 = vpop.f32.mrf.mxu0
      %v1910 = vadd.f32 0.0, %v1909
      %1911 = vmatmul.bf16.gmra.mxu0 %v1835
      %v1912 = vpop.f32.mrf.mxu0
      %v1913 = vadd.f32 0.0, %v1912
      %v1914 = vpop.f32.mrf.mxu0
      %v1915 = vadd.f32 0.0, %v1914
      %1916 = vmatmul.bf16.gmra.mxu0 %v1838
      %v1917 = vpop.f32.mrf.mxu0
      %v1918 = vadd.f32 0.0, %v1917
      %v1919 = vpop.f32.mrf.mxu0
      %v1920 = vadd.f32 0.0, %v1919
      %1921 = vmatmul.bf16.gmra.mxu0 %v1841
      %v1922 = vpop.f32.mrf.mxu0
      %v1923 = vadd.f32 0.0, %v1922
      %v1924 = vpop.f32.mrf.mxu0
      %v1925 = vadd.f32 0.0, %v1924
      %1926 = vmatmul.bf16.gmra.mxu0 %v1844
      %v1927 = vpop.f32.mrf.mxu0
      %v1928 = vadd.f32 0.0, %v1927
      %v1929 = vpop.f32.mrf.mxu0
      %v1930 = vadd.f32 0.0, %v1929
      %1931 = vmatmul.bf16.gmra.mxu0 %v1847
      %v1932 = vpop.f32.mrf.mxu0
      %v1933 = vadd.f32 0.0, %v1932
      %v1934 = vpop.f32.mrf.mxu0
      %v1935 = vadd.f32 0.0, %v1934
      %1936 = vmatmul.bf16.gmra.mxu0 %v1850
      %v1937 = vpop.f32.mrf.mxu0
      %v1938 = vadd.f32 0.0, %v1937
      %v1939 = vpop.f32.mrf.mxu0
      %v1940 = vadd.f32 0.0, %v1939
      %1941 = vmatmul.bf16.gmra.mxu0 %v1853
      %v1942 = vpop.f32.mrf.mxu0
      %v1943 = vadd.f32 0.0, %v1942
      %v1944 = vpop.f32.mrf.mxu0
      %v1945 = vadd.f32 0.0, %v1944
      %1946 = vdwg.mxu0
      %v1947 = vadd.f32 %v1757, %v1868
      %v1948 = vadd.f32 %v1758, %v1870
      %v1949 = vadd.f32 %v1759, %v1873
      %v1950 = vadd.f32 %v1760, %v1875
      %v1951 = vadd.f32 %v1761, %v1878
      %v1952 = vadd.f32 %v1762, %v1880
      %v1953 = vadd.f32 %v1763, %v1883
      %v1954 = vadd.f32 %v1764, %v1885
      %v1955 = vadd.f32 %v1765, %v1888
      %v1956 = vadd.f32 %v1766, %v1890
      %v1957 = vadd.f32 %v1767, %v1893
      %v1958 = vadd.f32 %v1768, %v1895
      %v1959 = vadd.f32 %v1769, %v1898
      %v1960 = vadd.f32 %v1770, %v1900
      %v1961 = vadd.f32 %v1771, %v1903
      %v1962 = vadd.f32 %v1772, %v1905
      %v1963 = vadd.f32 %v1773, %v1908
      %v1964 = vadd.f32 %v1774, %v1910
      %v1965 = vadd.f32 %v1775, %v1913
      %v1966 = vadd.f32 %v1776, %v1915
      %v1967 = vadd.f32 %v1777, %v1918
      %v1968 = vadd.f32 %v1778, %v1920
      %v1969 = vadd.f32 %v1779, %v1923
      %v1970 = vadd.f32 %v1780, %v1925
      %v1971 = vadd.f32 %v1781, %v1928
      %v1972 = vadd.f32 %v1782, %v1930
      %v1973 = vadd.f32 %v1783, %v1933
      %v1974 = vadd.f32 %v1784, %v1935
      %v1975 = vadd.f32 %v1785, %v1938
      %v1976 = vadd.f32 %v1786, %v1940
      %v1977 = vadd.f32 %v1787, %v1943
      %v1978 = vadd.f32 %v1788, %v1945
      %1979 = vst.msk [vmem:[#allocation3] sm:$0xff] %vm548, %v1947
      %1980 = vst.msk [vmem:[#allocation3 + $0x8] sm:$0xff] %vm548, %v1948
      %1981 = vst.msk [vmem:[#allocation3 + $0x10] sm:$0xff] %vm548, %v1949
      %1982 = vst.msk [vmem:[#allocation3 + $0x18] sm:$0xff] %vm548, %v1950
      %1983 = vst.msk [vmem:[#allocation3 + $0x20] sm:$0xff] %vm548, %v1951
      %1984 = vst.msk [vmem:[#allocation3 + $0x28] sm:$0xff] %vm548, %v1952
      %1985 = vst.msk [vmem:[#allocation3 + $0x30] sm:$0xff] %vm548, %v1953
      %1986 = vst.msk [vmem:[#allocation3 + $0x38] sm:$0xff] %vm548, %v1954
      %1987 = vst.msk [vmem:[#allocation3 + $0x40] sm:$0xff] %vm548, %v1955
      %1988 = vst.msk [vmem:[#allocation3 + $0x48] sm:$0xff] %vm548, %v1956
      %1989 = vst.msk [vmem:[#allocation3 + $0x50] sm:$0xff] %vm548, %v1957
      %1990 = vst.msk [vmem:[#allocation3 + $0x58] sm:$0xff] %vm548, %v1958
      %1991 = vst.msk [vmem:[#allocation3 + $0x60] sm:$0xff] %vm548, %v1959
      %1992 = vst.msk [vmem:[#allocation3 + $0x68] sm:$0xff] %vm548, %v1960
      %1993 = vst.msk [vmem:[#allocation3 + $0x70] sm:$0xff] %vm548, %v1961
      %1994 = vst.msk [vmem:[#allocation3 + $0x78] sm:$0xff] %vm548, %v1962
      %1995 = vst.msk [vmem:[#allocation3 + $0x80] sm:$0xff] %vm548, %v1963
      %1996 = vst.msk [vmem:[#allocation3 + $0x88] sm:$0xff] %vm548, %v1964
      %1997 = vst.msk [vmem:[#allocation3 + $0x90] sm:$0xff] %vm548, %v1965
      %1998 = vst.msk [vmem:[#allocation3 + $0x98] sm:$0xff] %vm548, %v1966
      %1999 = vst.msk [vmem:[#allocation3 + $0xa0] sm:$0xff] %vm548, %v1967
      %2000 = vst.msk [vmem:[#allocation3 + $0xa8] sm:$0xff] %vm548, %v1968
      %2001 = vst.msk [vmem:[#allocation3 + $0xb0] sm:$0xff] %vm548, %v1969
      %2002 = vst.msk [vmem:[#allocation3 + $0xb8] sm:$0xff] %vm548, %v1970
      %2003 = vst.msk [vmem:[#allocation3 + $0xc0] sm:$0xff] %vm548, %v1971
      %2004 = vst.msk [vmem:[#allocation3 + $0xc8] sm:$0xff] %vm548, %v1972
      %2005 = vst.msk [vmem:[#allocation3 + $0xd0] sm:$0xff] %vm548, %v1973
      %2006 = vst.msk [vmem:[#allocation3 + $0xd8] sm:$0xff] %vm548, %v1974
      %2007 = vst.msk [vmem:[#allocation3 + $0xe0] sm:$0xff] %vm548, %v1975
      %2008 = vst.msk [vmem:[#allocation3 + $0xe8] sm:$0xff] %vm548, %v1976
      %2009 = vst.msk [vmem:[#allocation3 + $0xf0] sm:$0xff] %vm548, %v1977
      %2010 = vst.msk [vmem:[#allocation3 + $0xf8] sm:$0xff] %vm548, %v1978
      %v2011 = vld [vmem:[%s515 + $0x2] sm:$0xff]
      %v2012 = vld [vmem:[%s515 + $0xa] sm:$0xff]
      %v2013 = vld [vmem:[%s515 + $0x1a] sm:$0xff]
      %v2014 = vld [vmem:[%s515 + $0x22] sm:$0xff]
      %v2015 = vld [vmem:[%s515 + $0x32] sm:$0xff]
      %v2016 = vld [vmem:[%s515 + $0x3a] sm:$0xff]
      %v2017 = vld [vmem:[%s515 + $0x4a] sm:$0xff]
      %v2018 = vld [vmem:[%s515 + $0x52] sm:$0xff]
      %v2019 = vld [vmem:[%s515 + $0x62] sm:$0xff]
      %v2020 = vld [vmem:[%s515 + $0x6a] sm:$0xff]
      %v2021 = vld [vmem:[%s515 + $0x7a] sm:$0xff]
      %v2022 = vld [vmem:[%s515 + $0x82] sm:$0xff]
      %v2023 = vld [vmem:[%s515 + $0x92] sm:$0xff]
      %v2024 = vld [vmem:[%s515 + $0x9a] sm:$0xff]
      %v2025 = vld [vmem:[%s515 + $0xaa] sm:$0xff]
      %v2026 = vld [vmem:[%s515 + $0xb2] sm:$0xff]
      %v2027 = vld [vmem:[%s515 + $0xc2] sm:$0xff]
      %v2028 = vld [vmem:[%s515 + $0xca] sm:$0xff]
      %v2029 = vld [vmem:[%s515 + $0xda] sm:$0xff]
      %v2030 = vld [vmem:[%s515 + $0xe2] sm:$0xff]
      %v2031 = vld [vmem:[%s515 + $0xf2] sm:$0xff]
      %v2032 = vld [vmem:[%s515 + $0xfa] sm:$0xff]
      %v2033 = vld [vmem:[%s515 + $0x10a] sm:$0xff]
      %v2034 = vld [vmem:[%s515 + $0x112] sm:$0xff]
      %v2035 = vld [vmem:[%s515 + $0x122] sm:$0xff]
      %v2036 = vld [vmem:[%s515 + $0x12a] sm:$0xff]
      %v2037 = vld [vmem:[%s515 + $0x13a] sm:$0xff]
      %v2038 = vld [vmem:[%s515 + $0x142] sm:$0xff]
      %v2039 = vld [vmem:[%s515 + $0x152] sm:$0xff]
      %v2040 = vld [vmem:[%s515 + $0x15a] sm:$0xff]
      %v2041 = vld [vmem:[%s515 + $0x16a] sm:$0xff]
      %v2042 = vld [vmem:[%s515 + $0x172] sm:$0xff]
      %v2043 = vld [vmem:[#allocation3] sm:$0xff]
      %v2044 = vld [vmem:[#allocation3 + $0x8] sm:$0xff]
      %v2045 = vld [vmem:[#allocation3 + $0x10] sm:$0xff]
      %v2046 = vld [vmem:[#allocation3 + $0x18] sm:$0xff]
      %v2047 = vld [vmem:[#allocation3 + $0x20] sm:$0xff]
      %v2048 = vld [vmem:[#allocation3 + $0x28] sm:$0xff]
      %v2049 = vld [vmem:[#allocation3 + $0x30] sm:$0xff]
      %v2050 = vld [vmem:[#allocation3 + $0x38] sm:$0xff]
      %v2051 = vld [vmem:[#allocation3 + $0x40] sm:$0xff]
      %v2052 = vld [vmem:[#allocation3 + $0x48] sm:$0xff]
      %v2053 = vld [vmem:[#allocation3 + $0x50] sm:$0xff]
      %v2054 = vld [vmem:[#allocation3 + $0x58] sm:$0xff]
      %v2055 = vld [vmem:[#allocation3 + $0x60] sm:$0xff]
      %v2056 = vld [vmem:[#allocation3 + $0x68] sm:$0xff]
      %v2057 = vld [vmem:[#allocation3 + $0x70] sm:$0xff]
      %v2058 = vld [vmem:[#allocation3 + $0x78] sm:$0xff]
      %v2059 = vld [vmem:[#allocation3 + $0x80] sm:$0xff]
      %v2060 = vld [vmem:[#allocation3 + $0x88] sm:$0xff]
      %v2061 = vld [vmem:[#allocation3 + $0x90] sm:$0xff]
      %v2062 = vld [vmem:[#allocation3 + $0x98] sm:$0xff]
      %v2063 = vld [vmem:[#allocation3 + $0xa0] sm:$0xff]
      %v2064 = vld [vmem:[#allocation3 + $0xa8] sm:$0xff]
      %v2065 = vld [vmem:[#allocation3 + $0xb0] sm:$0xff]
      %v2066 = vld [vmem:[#allocation3 + $0xb8] sm:$0xff]
      %v2067 = vld [vmem:[#allocation3 + $0xc0] sm:$0xff]
      %v2068 = vld [vmem:[#allocation3 + $0xc8] sm:$0xff]
      %v2069 = vld [vmem:[#allocation3 + $0xd0] sm:$0xff]
      %v2070 = vld [vmem:[#allocation3 + $0xd8] sm:$0xff]
      %v2071 = vld [vmem:[#allocation3 + $0xe0] sm:$0xff]
      %v2072 = vld [vmem:[#allocation3 + $0xe8] sm:$0xff]
      %v2073 = vld [vmem:[#allocation3 + $0xf0] sm:$0xff]
      %v2074 = vld [vmem:[#allocation3 + $0xf8] sm:$0xff]
      %v2075 = vpack.c.bf16 %v2012, %v2011
      %v2076 = vpack.c.bf16 %v2014, %v2013
      %v2077 = vpack.c.bf16 %v2016, %v2015
      %v2078 = vpack.c.bf16 %v2018, %v2017
      %v2079 = vpack.c.bf16 %v2020, %v2019
      %v2080 = vpack.c.bf16 %v2022, %v2021
      %v2081 = vpack.c.bf16 %v2024, %v2023
      %v2082 = vpack.c.bf16 %v2026, %v2025
      %v2083 = vpack.c.bf16 %v2028, %v2027
      %v2084 = vpack.c.bf16 %v2030, %v2029
      %v2085 = vpack.c.bf16 %v2032, %v2031
      %v2086 = vpack.c.bf16 %v2034, %v2033
      %v2087 = vpack.c.bf16 %v2036, %v2035
      %v2088 = vpack.c.bf16 %v2038, %v2037
      %v2089 = vpack.c.bf16 %v2040, %v2039
      %v2090 = vpack.c.bf16 %v2042, %v2041
      %s2091 = scalar_lea.vmem %s3, 5
      %v2092 = vld [vmem:[%s2091] sm:$0x1]
      %v2094 = vsel %vm469, %v2075, 0
      %v2097 = vsel %vm469, %v2076, 0
      %v2100 = vsel %vm469, %v2077, 0
      %v2103 = vsel %vm469, %v2078, 0
      %v2106 = vsel %vm469, %v2079, 0
      %v2109 = vsel %vm469, %v2080, 0
      %v2112 = vsel %vm469, %v2081, 0
      %v2115 = vsel %vm469, %v2082, 0
      %v2118 = vsel %vm469, %v2083, 0
      %v2121 = vsel %vm469, %v2084, 0
      %v2124 = vsel %vm469, %v2085, 0
      %v2127 = vsel %vm469, %v2086, 0
      %v2130 = vsel %vm469, %v2087, 0
      %v2133 = vsel %vm469, %v2088, 0
      %v2136 = vsel %vm469, %v2089, 0
      %v2139 = vsel %vm469, %v2090, 0
      %v2142 = vsel %vm710, %v2092, 0
      %2144 = vmatpush.bf16.msra.mxu0 0
      %2145 = vmatpush.bf16.msra.mxu0 0
      %2146 = vmatpush.bf16.msra.mxu0 0
      %2147 = vmatpush.bf16.msra.mxu0 0
      %2148 = vmatpush.bf16.msra.mxu0 0
      %2149 = vmatpush.bf16.msra.mxu0 0
      %2150 = vmatpush.bf16.msra.mxu0 0
      %2151 = vmatpush.bf16.msra.mxu0 %v2142
      %2152 = vmatmul.bf16.gmra.mxu0 %v2094
      %v2153 = vpop.f32.mrf.mxu0
      %v2154 = vadd.f32 0.0, %v2153
      %v2155 = vpop.f32.mrf.mxu0
      %v2156 = vadd.f32 0.0, %v2155
      %2157 = vmatmul.bf16.gmra.mxu0 %v2097
      %v2158 = vpop.f32.mrf.mxu0
      %v2159 = vadd.f32 0.0, %v2158
      %v2160 = vpop.f32.mrf.mxu0
      %v2161 = vadd.f32 0.0, %v2160
      %2162 = vmatmul.bf16.gmra.mxu0 %v2100
      %v2163 = vpop.f32.mrf.mxu0
      %v2164 = vadd.f32 0.0, %v2163
      %v2165 = vpop.f32.mrf.mxu0
      %v2166 = vadd.f32 0.0, %v2165
      %2167 = vmatmul.bf16.gmra.mxu0 %v2103
      %v2168 = vpop.f32.mrf.mxu0
      %v2169 = vadd.f32 0.0, %v2168
      %v2170 = vpop.f32.mrf.mxu0
      %v2171 = vadd.f32 0.0, %v2170
      %2172 = vmatmul.bf16.gmra.mxu0 %v2106
      %v2173 = vpop.f32.mrf.mxu0
      %v2174 = vadd.f32 0.0, %v2173
      %v2175 = vpop.f32.mrf.mxu0
      %v2176 = vadd.f32 0.0, %v2175
      %2177 = vmatmul.bf16.gmra.mxu0 %v2109
      %v2178 = vpop.f32.mrf.mxu0
      %v2179 = vadd.f32 0.0, %v2178
      %v2180 = vpop.f32.mrf.mxu0
      %v2181 = vadd.f32 0.0, %v2180
      %2182 = vmatmul.bf16.gmra.mxu0 %v2112
      %v2183 = vpop.f32.mrf.mxu0
      %v2184 = vadd.f32 0.0, %v2183
      %v2185 = vpop.f32.mrf.mxu0
      %v2186 = vadd.f32 0.0, %v2185
      %2187 = vmatmul.bf16.gmra.mxu0 %v2115
      %v2188 = vpop.f32.mrf.mxu0
      %v2189 = vadd.f32 0.0, %v2188
      %v2190 = vpop.f32.mrf.mxu0
      %v2191 = vadd.f32 0.0, %v2190
      %2192 = vmatmul.bf16.gmra.mxu0 %v2118
      %v2193 = vpop.f32.mrf.mxu0
      %v2194 = vadd.f32 0.0, %v2193
      %v2195 = vpop.f32.mrf.mxu0
      %v2196 = vadd.f32 0.0, %v2195
      %2197 = vmatmul.bf16.gmra.mxu0 %v2121
      %v2198 = vpop.f32.mrf.mxu0
      %v2199 = vadd.f32 0.0, %v2198
      %v2200 = vpop.f32.mrf.mxu0
      %v2201 = vadd.f32 0.0, %v2200
      %2202 = vmatmul.bf16.gmra.mxu0 %v2124
      %v2203 = vpop.f32.mrf.mxu0
      %v2204 = vadd.f32 0.0, %v2203
      %v2205 = vpop.f32.mrf.mxu0
      %v2206 = vadd.f32 0.0, %v2205
      %2207 = vmatmul.bf16.gmra.mxu0 %v2127
      %v2208 = vpop.f32.mrf.mxu0
      %v2209 = vadd.f32 0.0, %v2208
      %v2210 = vpop.f32.mrf.mxu0
      %v2211 = vadd.f32 0.0, %v2210
      %2212 = vmatmul.bf16.gmra.mxu0 %v2130
      %v2213 = vpop.f32.mrf.mxu0
      %v2214 = vadd.f32 0.0, %v2213
      %v2215 = vpop.f32.mrf.mxu0
      %v2216 = vadd.f32 0.0, %v2215
      %2217 = vmatmul.bf16.gmra.mxu0 %v2133
      %v2218 = vpop.f32.mrf.mxu0
      %v2219 = vadd.f32 0.0, %v2218
      %v2220 = vpop.f32.mrf.mxu0
      %v2221 = vadd.f32 0.0, %v2220
      %2222 = vmatmul.bf16.gmra.mxu0 %v2136
      %v2223 = vpop.f32.mrf.mxu0
      %v2224 = vadd.f32 0.0, %v2223
      %v2225 = vpop.f32.mrf.mxu0
      %v2226 = vadd.f32 0.0, %v2225
      %2227 = vmatmul.bf16.gmra.mxu0 %v2139
      %v2228 = vpop.f32.mrf.mxu0
      %v2229 = vadd.f32 0.0, %v2228
      %v2230 = vpop.f32.mrf.mxu0
      %v2231 = vadd.f32 0.0, %v2230
      %2232 = vdwg.mxu0
      %v2233 = vadd.f32 %v2043, %v2154
      %v2234 = vadd.f32 %v2044, %v2156
      %v2235 = vadd.f32 %v2045, %v2159
      %v2236 = vadd.f32 %v2046, %v2161
      %v2237 = vadd.f32 %v2047, %v2164
      %v2238 = vadd.f32 %v2048, %v2166
      %v2239 = vadd.f32 %v2049, %v2169
      %v2240 = vadd.f32 %v2050, %v2171
      %v2241 = vadd.f32 %v2051, %v2174
      %v2242 = vadd.f32 %v2052, %v2176
      %v2243 = vadd.f32 %v2053, %v2179
      %v2244 = vadd.f32 %v2054, %v2181
      %v2245 = vadd.f32 %v2055, %v2184
      %v2246 = vadd.f32 %v2056, %v2186
      %v2247 = vadd.f32 %v2057, %v2189
      %v2248 = vadd.f32 %v2058, %v2191
      %v2249 = vadd.f32 %v2059, %v2194
      %v2250 = vadd.f32 %v2060, %v2196
      %v2251 = vadd.f32 %v2061, %v2199
      %v2252 = vadd.f32 %v2062, %v2201
      %v2253 = vadd.f32 %v2063, %v2204
      %v2254 = vadd.f32 %v2064, %v2206
      %v2255 = vadd.f32 %v2065, %v2209
      %v2256 = vadd.f32 %v2066, %v2211
      %v2257 = vadd.f32 %v2067, %v2214
      %v2258 = vadd.f32 %v2068, %v2216
      %v2259 = vadd.f32 %v2069, %v2219
      %v2260 = vadd.f32 %v2070, %v2221
      %v2261 = vadd.f32 %v2071, %v2224
      %v2262 = vadd.f32 %v2072, %v2226
      %v2263 = vadd.f32 %v2073, %v2229
      %v2264 = vadd.f32 %v2074, %v2231
      %2265 = vst.msk [vmem:[#allocation3] sm:$0xff] %vm548, %v2233
      %2266 = vst.msk [vmem:[#allocation3 + $0x8] sm:$0xff] %vm548, %v2234
      %2267 = vst.msk [vmem:[#allocation3 + $0x10] sm:$0xff] %vm548, %v2235
      %2268 = vst.msk [vmem:[#allocation3 + $0x18] sm:$0xff] %vm548, %v2236
      %2269 = vst.msk [vmem:[#allocation3 + $0x20] sm:$0xff] %vm548, %v2237
      %2270 = vst.msk [vmem:[#allocation3 + $0x28] sm:$0xff] %vm548, %v2238
      %2271 = vst.msk [vmem:[#allocation3 + $0x30] sm:$0xff] %vm548, %v2239
      %2272 = vst.msk [vmem:[#allocation3 + $0x38] sm:$0xff] %vm548, %v2240
      %2273 = vst.msk [vmem:[#allocation3 + $0x40] sm:$0xff] %vm548, %v2241
      %2274 = vst.msk [vmem:[#allocation3 + $0x48] sm:$0xff] %vm548, %v2242
      %2275 = vst.msk [vmem:[#allocation3 + $0x50] sm:$0xff] %vm548, %v2243
      %2276 = vst.msk [vmem:[#allocation3 + $0x58] sm:$0xff] %vm548, %v2244
      %2277 = vst.msk [vmem:[#allocation3 + $0x60] sm:$0xff] %vm548, %v2245
      %2278 = vst.msk [vmem:[#allocation3 + $0x68] sm:$0xff] %vm548, %v2246
      %2279 = vst.msk [vmem:[#allocation3 + $0x70] sm:$0xff] %vm548, %v2247
      %2280 = vst.msk [vmem:[#allocation3 + $0x78] sm:$0xff] %vm548, %v2248
      %2281 = vst.msk [vmem:[#allocation3 + $0x80] sm:$0xff] %vm548, %v2249
      %2282 = vst.msk [vmem:[#allocation3 + $0x88] sm:$0xff] %vm548, %v2250
      %2283 = vst.msk [vmem:[#allocation3 + $0x90] sm:$0xff] %vm548, %v2251
      %2284 = vst.msk [vmem:[#allocation3 + $0x98] sm:$0xff] %vm548, %v2252
      %2285 = vst.msk [vmem:[#allocation3 + $0xa0] sm:$0xff] %vm548, %v2253
      %2286 = vst.msk [vmem:[#allocation3 + $0xa8] sm:$0xff] %vm548, %v2254
      %2287 = vst.msk [vmem:[#allocation3 + $0xb0] sm:$0xff] %vm548, %v2255
      %2288 = vst.msk [vmem:[#allocation3 + $0xb8] sm:$0xff] %vm548, %v2256
      %2289 = vst.msk [vmem:[#allocation3 + $0xc0] sm:$0xff] %vm548, %v2257
      %2290 = vst.msk [vmem:[#allocation3 + $0xc8] sm:$0xff] %vm548, %v2258
      %2291 = vst.msk [vmem:[#allocation3 + $0xd0] sm:$0xff] %vm548, %v2259
      %2292 = vst.msk [vmem:[#allocation3 + $0xd8] sm:$0xff] %vm548, %v2260
      %2293 = vst.msk [vmem:[#allocation3 + $0xe0] sm:$0xff] %vm548, %v2261
      %2294 = vst.msk [vmem:[#allocation3 + $0xe8] sm:$0xff] %vm548, %v2262
      %2295 = vst.msk [vmem:[#allocation3 + $0xf0] sm:$0xff] %vm548, %v2263
      %2296 = vst.msk [vmem:[#allocation3 + $0xf8] sm:$0xff] %vm548, %v2264
      %s2297 = scalar_lea.vmem [#allocation2], 48
      %v2298 = vld [vmem:[%s2297] sm:$0xff]
      %v2299 = vld [vmem:[%s2297 + $0x8] sm:$0xff]
      %v2300 = vld [vmem:[%s2297 + $0x18] sm:$0xff]
      %v2301 = vld [vmem:[%s2297 + $0x20] sm:$0xff]
      %v2302 = vld [vmem:[%s2297 + $0x30] sm:$0xff]
      %v2303 = vld [vmem:[%s2297 + $0x38] sm:$0xff]
      %v2304 = vld [vmem:[%s2297 + $0x48] sm:$0xff]
      %v2305 = vld [vmem:[%s2297 + $0x50] sm:$0xff]
      %v2306 = vld [vmem:[%s2297 + $0x60] sm:$0xff]
      %v2307 = vld [vmem:[%s2297 + $0x68] sm:$0xff]
      %v2308 = vld [vmem:[%s2297 + $0x78] sm:$0xff]
      %v2309 = vld [vmem:[%s2297 + $0x80] sm:$0xff]
      %v2310 = vld [vmem:[%s2297 + $0x90] sm:$0xff]
      %v2311 = vld [vmem:[%s2297 + $0x98] sm:$0xff]
      %v2312 = vld [vmem:[%s2297 + $0xa8] sm:$0xff]
      %v2313 = vld [vmem:[%s2297 + $0xb0] sm:$0xff]
      %v2314 = vld [vmem:[%s2297 + $0xc0] sm:$0xff]
      %v2315 = vld [vmem:[%s2297 + $0xc8] sm:$0xff]
      %v2316 = vld [vmem:[%s2297 + $0xd8] sm:$0xff]
      %v2317 = vld [vmem:[%s2297 + $0xe0] sm:$0xff]
      %v2318 = vld [vmem:[%s2297 + $0xf0] sm:$0xff]
      %v2319 = vld [vmem:[%s2297 + $0xf8] sm:$0xff]
      %v2320 = vld [vmem:[%s2297 + $0x108] sm:$0xff]
      %v2321 = vld [vmem:[%s2297 + $0x110] sm:$0xff]
      %v2322 = vld [vmem:[%s2297 + $0x120] sm:$0xff]
      %v2323 = vld [vmem:[%s2297 + $0x128] sm:$0xff]
      %v2324 = vld [vmem:[%s2297 + $0x138] sm:$0xff]
      %v2325 = vld [vmem:[%s2297 + $0x140] sm:$0xff]
      %v2326 = vld [vmem:[%s2297 + $0x150] sm:$0xff]
      %v2327 = vld [vmem:[%s2297 + $0x158] sm:$0xff]
      %v2328 = vld [vmem:[%s2297 + $0x168] sm:$0xff]
      %v2329 = vld [vmem:[%s2297 + $0x170] sm:$0xff]
      %v2330 = vld [vmem:[#allocation3] sm:$0xff]
      %v2331 = vld [vmem:[#allocation3 + $0x8] sm:$0xff]
      %v2332 = vld [vmem:[#allocation3 + $0x10] sm:$0xff]
      %v2333 = vld [vmem:[#allocation3 + $0x18] sm:$0xff]
      %v2334 = vld [vmem:[#allocation3 + $0x20] sm:$0xff]
      %v2335 = vld [vmem:[#allocation3 + $0x28] sm:$0xff]
      %v2336 = vld [vmem:[#allocation3 + $0x30] sm:$0xff]
      %v2337 = vld [vmem:[#allocation3 + $0x38] sm:$0xff]
      %v2338 = vld [vmem:[#allocation3 + $0x40] sm:$0xff]
      %v2339 = vld [vmem:[#allocation3 + $0x48] sm:$0xff]
      %v2340 = vld [vmem:[#allocation3 + $0x50] sm:$0xff]
      %v2341 = vld [vmem:[#allocation3 + $0x58] sm:$0xff]
      %v2342 = vld [vmem:[#allocation3 + $0x60] sm:$0xff]
      %v2343 = vld [vmem:[#allocation3 + $0x68] sm:$0xff]
      %v2344 = vld [vmem:[#allocation3 + $0x70] sm:$0xff]
      %v2345 = vld [vmem:[#allocation3 + $0x78] sm:$0xff]
      %v2346 = vld [vmem:[#allocation3 + $0x80] sm:$0xff]
      %v2347 = vld [vmem:[#allocation3 + $0x88] sm:$0xff]
      %v2348 = vld [vmem:[#allocation3 + $0x90] sm:$0xff]
      %v2349 = vld [vmem:[#allocation3 + $0x98] sm:$0xff]
      %v2350 = vld [vmem:[#allocation3 + $0xa0] sm:$0xff]
      %v2351 = vld [vmem:[#allocation3 + $0xa8] sm:$0xff]
      %v2352 = vld [vmem:[#allocation3 + $0xb0] sm:$0xff]
      %v2353 = vld [vmem:[#allocation3 + $0xb8] sm:$0xff]
      %v2354 = vld [vmem:[#allocation3 + $0xc0] sm:$0xff]
      %v2355 = vld [vmem:[#allocation3 + $0xc8] sm:$0xff]
      %v2356 = vld [vmem:[#allocation3 + $0xd0] sm:$0xff]
      %v2357 = vld [vmem:[#allocation3 + $0xd8] sm:$0xff]
      %v2358 = vld [vmem:[#allocation3 + $0xe0] sm:$0xff]
      %v2359 = vld [vmem:[#allocation3 + $0xe8] sm:$0xff]
      %v2360 = vld [vmem:[#allocation3 + $0xf0] sm:$0xff]
      %v2361 = vld [vmem:[#allocation3 + $0xf8] sm:$0xff]
      %v2362 = vpack.c.bf16 %v2299, %v2298
      %v2363 = vpack.c.bf16 %v2301, %v2300
      %v2364 = vpack.c.bf16 %v2303, %v2302
      %v2365 = vpack.c.bf16 %v2305, %v2304
      %v2366 = vpack.c.bf16 %v2307, %v2306
      %v2367 = vpack.c.bf16 %v2309, %v2308
      %v2368 = vpack.c.bf16 %v2311, %v2310
      %v2369 = vpack.c.bf16 %v2313, %v2312
      %v2370 = vpack.c.bf16 %v2315, %v2314
      %v2371 = vpack.c.bf16 %v2317, %v2316
      %v2372 = vpack.c.bf16 %v2319, %v2318
      %v2373 = vpack.c.bf16 %v2321, %v2320
      %v2374 = vpack.c.bf16 %v2323, %v2322
      %v2375 = vpack.c.bf16 %v2325, %v2324
      %v2376 = vpack.c.bf16 %v2327, %v2326
      %v2377 = vpack.c.bf16 %v2329, %v2328
      %s2378 = scalar_lea.vmem %s3, 6
      %v2379 = vld [vmem:[%s2378] sm:$0x1]
      %v2381 = vsel %vm469, %v2362, 0
      %v2384 = vsel %vm469, %v2363, 0
      %v2387 = vsel %vm469, %v2364, 0
      %v2390 = vsel %vm469, %v2365, 0
      %v2393 = vsel %vm469, %v2366, 0
      %v2396 = vsel %vm469, %v2367, 0
      %v2399 = vsel %vm469, %v2368, 0
      %v2402 = vsel %vm469, %v2369, 0
      %v2405 = vsel %vm469, %v2370, 0
      %v2408 = vsel %vm469, %v2371, 0
      %v2411 = vsel %vm469, %v2372, 0
      %v2414 = vsel %vm469, %v2373, 0
      %v2417 = vsel %vm469, %v2374, 0
      %v2420 = vsel %vm469, %v2375, 0
      %v2423 = vsel %vm469, %v2376, 0
      %v2426 = vsel %vm469, %v2377, 0
      %v2429 = vsel %vm710, %v2379, 0
      %2431 = vmatpush.bf16.msra.mxu0 0
      %2432 = vmatpush.bf16.msra.mxu0 0
      %2433 = vmatpush.bf16.msra.mxu0 0
      %2434 = vmatpush.bf16.msra.mxu0 0
      %2435 = vmatpush.bf16.msra.mxu0 0
      %2436 = vmatpush.bf16.msra.mxu0 0
      %2437 = vmatpush.bf16.msra.mxu0 0
      %2438 = vmatpush.bf16.msra.mxu0 %v2429
      %2439 = vmatmul.bf16.gmra.mxu0 %v2381
      %v2440 = vpop.f32.mrf.mxu0
      %v2441 = vadd.f32 0.0, %v2440
      %v2442 = vpop.f32.mrf.mxu0
      %v2443 = vadd.f32 0.0, %v2442
      %2444 = vmatmul.bf16.gmra.mxu0 %v2384
      %v2445 = vpop.f32.mrf.mxu0
      %v2446 = vadd.f32 0.0, %v2445
      %v2447 = vpop.f32.mrf.mxu0
      %v2448 = vadd.f32 0.0, %v2447
      %2449 = vmatmul.bf16.gmra.mxu0 %v2387
      %v2450 = vpop.f32.mrf.mxu0
      %v2451 = vadd.f32 0.0, %v2450
      %v2452 = vpop.f32.mrf.mxu0
      %v2453 = vadd.f32 0.0, %v2452
      %2454 = vmatmul.bf16.gmra.mxu0 %v2390
      %v2455 = vpop.f32.mrf.mxu0
      %v2456 = vadd.f32 0.0, %v2455
      %v2457 = vpop.f32.mrf.mxu0
      %v2458 = vadd.f32 0.0, %v2457
      %2459 = vmatmul.bf16.gmra.mxu0 %v2393
      %v2460 = vpop.f32.mrf.mxu0
      %v2461 = vadd.f32 0.0, %v2460
      %v2462 = vpop.f32.mrf.mxu0
      %v2463 = vadd.f32 0.0, %v2462
      %2464 = vmatmul.bf16.gmra.mxu0 %v2396
      %v2465 = vpop.f32.mrf.mxu0
      %v2466 = vadd.f32 0.0, %v2465
      %v2467 = vpop.f32.mrf.mxu0
      %v2468 = vadd.f32 0.0, %v2467
      %2469 = vmatmul.bf16.gmra.mxu0 %v2399
      %v2470 = vpop.f32.mrf.mxu0
      %v2471 = vadd.f32 0.0, %v2470
      %v2472 = vpop.f32.mrf.mxu0
      %v2473 = vadd.f32 0.0, %v2472
      %2474 = vmatmul.bf16.gmra.mxu0 %v2402
      %v2475 = vpop.f32.mrf.mxu0
      %v2476 = vadd.f32 0.0, %v2475
      %v2477 = vpop.f32.mrf.mxu0
      %v2478 = vadd.f32 0.0, %v2477
      %2479 = vmatmul.bf16.gmra.mxu0 %v2405
      %v2480 = vpop.f32.mrf.mxu0
      %v2481 = vadd.f32 0.0, %v2480
      %v2482 = vpop.f32.mrf.mxu0
      %v2483 = vadd.f32 0.0, %v2482
      %2484 = vmatmul.bf16.gmra.mxu0 %v2408
      %v2485 = vpop.f32.mrf.mxu0
      %v2486 = vadd.f32 0.0, %v2485
      %v2487 = vpop.f32.mrf.mxu0
      %v2488 = vadd.f32 0.0, %v2487
      %2489 = vmatmul.bf16.gmra.mxu0 %v2411
      %v2490 = vpop.f32.mrf.mxu0
      %v2491 = vadd.f32 0.0, %v2490
      %v2492 = vpop.f32.mrf.mxu0
      %v2493 = vadd.f32 0.0, %v2492
      %2494 = vmatmul.bf16.gmra.mxu0 %v2414
      %v2495 = vpop.f32.mrf.mxu0
      %v2496 = vadd.f32 0.0, %v2495
      %v2497 = vpop.f32.mrf.mxu0
      %v2498 = vadd.f32 0.0, %v2497
      %2499 = vmatmul.bf16.gmra.mxu0 %v2417
      %v2500 = vpop.f32.mrf.mxu0
      %v2501 = vadd.f32 0.0, %v2500
      %v2502 = vpop.f32.mrf.mxu0
      %v2503 = vadd.f32 0.0, %v2502
      %2504 = vmatmul.bf16.gmra.mxu0 %v2420
      %v2505 = vpop.f32.mrf.mxu0
      %v2506 = vadd.f32 0.0, %v2505
      %v2507 = vpop.f32.mrf.mxu0
      %v2508 = vadd.f32 0.0, %v2507
      %2509 = vmatmul.bf16.gmra.mxu0 %v2423
      %v2510 = vpop.f32.mrf.mxu0
      %v2511 = vadd.f32 0.0, %v2510
      %v2512 = vpop.f32.mrf.mxu0
      %v2513 = vadd.f32 0.0, %v2512
      %2514 = vmatmul.bf16.gmra.mxu0 %v2426
      %v2515 = vpop.f32.mrf.mxu0
      %v2516 = vadd.f32 0.0, %v2515
      %v2517 = vpop.f32.mrf.mxu0
      %v2518 = vadd.f32 0.0, %v2517
      %2519 = vdwg.mxu0
      %v2520 = vadd.f32 %v2330, %v2441
      %v2521 = vadd.f32 %v2331, %v2443
      %v2522 = vadd.f32 %v2332, %v2446
      %v2523 = vadd.f32 %v2333, %v2448
      %v2524 = vadd.f32 %v2334, %v2451
      %v2525 = vadd.f32 %v2335, %v2453
      %v2526 = vadd.f32 %v2336, %v2456
      %v2527 = vadd.f32 %v2337, %v2458
      %v2528 = vadd.f32 %v2338, %v2461
      %v2529 = vadd.f32 %v2339, %v2463
      %v2530 = vadd.f32 %v2340, %v2466
      %v2531 = vadd.f32 %v2341, %v2468
      %v2532 = vadd.f32 %v2342, %v2471
      %v2533 = vadd.f32 %v2343, %v2473
      %v2534 = vadd.f32 %v2344, %v2476
      %v2535 = vadd.f32 %v2345, %v2478
      %v2536 = vadd.f32 %v2346, %v2481
      %v2537 = vadd.f32 %v2347, %v2483
      %v2538 = vadd.f32 %v2348, %v2486
      %v2539 = vadd.f32 %v2349, %v2488
      %v2540 = vadd.f32 %v2350, %v2491
      %v2541 = vadd.f32 %v2351, %v2493
      %v2542 = vadd.f32 %v2352, %v2496
      %v2543 = vadd.f32 %v2353, %v2498
      %v2544 = vadd.f32 %v2354, %v2501
      %v2545 = vadd.f32 %v2355, %v2503
      %v2546 = vadd.f32 %v2356, %v2506
      %v2547 = vadd.f32 %v2357, %v2508
      %v2548 = vadd.f32 %v2358, %v2511
      %v2549 = vadd.f32 %v2359, %v2513
      %v2550 = vadd.f32 %v2360, %v2516
      %v2551 = vadd.f32 %v2361, %v2518
      %2552 = vst.msk [vmem:[#allocation3] sm:$0xff] %vm548, %v2520
      %2553 = vst.msk [vmem:[#allocation3 + $0x8] sm:$0xff] %vm548, %v2521
      %2554 = vst.msk [vmem:[#allocation3 + $0x10] sm:$0xff] %vm548, %v2522
      %2555 = vst.msk [vmem:[#allocation3 + $0x18] sm:$0xff] %vm548, %v2523
      %2556 = vst.msk [vmem:[#allocation3 + $0x20] sm:$0xff] %vm548, %v2524
      %2557 = vst.msk [vmem:[#allocation3 + $0x28] sm:$0xff] %vm548, %v2525
      %2558 = vst.msk [vmem:[#allocation3 + $0x30] sm:$0xff] %vm548, %v2526
      %2559 = vst.msk [vmem:[#allocation3 + $0x38] sm:$0xff] %vm548, %v2527
      %2560 = vst.msk [vmem:[#allocation3 + $0x40] sm:$0xff] %vm548, %v2528
      %2561 = vst.msk [vmem:[#allocation3 + $0x48] sm:$0xff] %vm548, %v2529
      %2562 = vst.msk [vmem:[#allocation3 + $0x50] sm:$0xff] %vm548, %v2530
      %2563 = vst.msk [vmem:[#allocation3 + $0x58] sm:$0xff] %vm548, %v2531
      %2564 = vst.msk [vmem:[#allocation3 + $0x60] sm:$0xff] %vm548, %v2532
      %2565 = vst.msk [vmem:[#allocation3 + $0x68] sm:$0xff] %vm548, %v2533
      %2566 = vst.msk [vmem:[#allocation3 + $0x70] sm:$0xff] %vm548, %v2534
      %2567 = vst.msk [vmem:[#allocation3 + $0x78] sm:$0xff] %vm548, %v2535
      %2568 = vst.msk [vmem:[#allocation3 + $0x80] sm:$0xff] %vm548, %v2536
      %2569 = vst.msk [vmem:[#allocation3 + $0x88] sm:$0xff] %vm548, %v2537
      %2570 = vst.msk [vmem:[#allocation3 + $0x90] sm:$0xff] %vm548, %v2538
      %2571 = vst.msk [vmem:[#allocation3 + $0x98] sm:$0xff] %vm548, %v2539
      %2572 = vst.msk [vmem:[#allocation3 + $0xa0] sm:$0xff] %vm548, %v2540
      %2573 = vst.msk [vmem:[#allocation3 + $0xa8] sm:$0xff] %vm548, %v2541
      %2574 = vst.msk [vmem:[#allocation3 + $0xb0] sm:$0xff] %vm548, %v2542
      %2575 = vst.msk [vmem:[#allocation3 + $0xb8] sm:$0xff] %vm548, %v2543
      %2576 = vst.msk [vmem:[#allocation3 + $0xc0] sm:$0xff] %vm548, %v2544
      %2577 = vst.msk [vmem:[#allocation3 + $0xc8] sm:$0xff] %vm548, %v2545
      %2578 = vst.msk [vmem:[#allocation3 + $0xd0] sm:$0xff] %vm548, %v2546
      %2579 = vst.msk [vmem:[#allocation3 + $0xd8] sm:$0xff] %vm548, %v2547
      %2580 = vst.msk [vmem:[#allocation3 + $0xe0] sm:$0xff] %vm548, %v2548
      %2581 = vst.msk [vmem:[#allocation3 + $0xe8] sm:$0xff] %vm548, %v2549
      %2582 = vst.msk [vmem:[#allocation3 + $0xf0] sm:$0xff] %vm548, %v2550
      %2583 = vst.msk [vmem:[#allocation3 + $0xf8] sm:$0xff] %vm548, %v2551
      %v2584 = vld [vmem:[%s2297 + $0x1] sm:$0xff]
      %v2585 = vld [vmem:[%s2297 + $0x9] sm:$0xff]
      %v2586 = vld [vmem:[%s2297 + $0x19] sm:$0xff]
      %v2587 = vld [vmem:[%s2297 + $0x21] sm:$0xff]
      %v2588 = vld [vmem:[%s2297 + $0x31] sm:$0xff]
      %v2589 = vld [vmem:[%s2297 + $0x39] sm:$0xff]
      %v2590 = vld [vmem:[%s2297 + $0x49] sm:$0xff]
      %v2591 = vld [vmem:[%s2297 + $0x51] sm:$0xff]
      %v2592 = vld [vmem:[%s2297 + $0x61] sm:$0xff]
      %v2593 = vld [vmem:[%s2297 + $0x69] sm:$0xff]
      %v2594 = vld [vmem:[%s2297 + $0x79] sm:$0xff]
      %v2595 = vld [vmem:[%s2297 + $0x81] sm:$0xff]
      %v2596 = vld [vmem:[%s2297 + $0x91] sm:$0xff]
      %v2597 = vld [vmem:[%s2297 + $0x99] sm:$0xff]
      %v2598 = vld [vmem:[%s2297 + $0xa9] sm:$0xff]
      %v2599 = vld [vmem:[%s2297 + $0xb1] sm:$0xff]
      %v2600 = vld [vmem:[%s2297 + $0xc1] sm:$0xff]
      %v2601 = vld [vmem:[%s2297 + $0xc9] sm:$0xff]
      %v2602 = vld [vmem:[%s2297 + $0xd9] sm:$0xff]
      %v2603 = vld [vmem:[%s2297 + $0xe1] sm:$0xff]
      %v2604 = vld [vmem:[%s2297 + $0xf1] sm:$0xff]
      %v2605 = vld [vmem:[%s2297 + $0xf9] sm:$0xff]
      %v2606 = vld [vmem:[%s2297 + $0x109] sm:$0xff]
      %v2607 = vld [vmem:[%s2297 + $0x111] sm:$0xff]
      %v2608 = vld [vmem:[%s2297 + $0x121] sm:$0xff]
      %v2609 = vld [vmem:[%s2297 + $0x129] sm:$0xff]
      %v2610 = vld [vmem:[%s2297 + $0x139] sm:$0xff]
      %v2611 = vld [vmem:[%s2297 + $0x141] sm:$0xff]
      %v2612 = vld [vmem:[%s2297 + $0x151] sm:$0xff]
      %v2613 = vld [vmem:[%s2297 + $0x159] sm:$0xff]
      %v2614 = vld [vmem:[%s2297 + $0x169] sm:$0xff]
      %v2615 = vld [vmem:[%s2297 + $0x171] sm:$0xff]
      %v2616 = vld [vmem:[#allocation3] sm:$0xff]
      %v2617 = vld [vmem:[#allocation3 + $0x8] sm:$0xff]
      %v2618 = vld [vmem:[#allocation3 + $0x10] sm:$0xff]
      %v2619 = vld [vmem:[#allocation3 + $0x18] sm:$0xff]
      %v2620 = vld [vmem:[#allocation3 + $0x20] sm:$0xff]
      %v2621 = vld [vmem:[#allocation3 + $0x28] sm:$0xff]
      %v2622 = vld [vmem:[#allocation3 + $0x30] sm:$0xff]
      %v2623 = vld [vmem:[#allocation3 + $0x38] sm:$0xff]
      %v2624 = vld [vmem:[#allocation3 + $0x40] sm:$0xff]
      %v2625 = vld [vmem:[#allocation3 + $0x48] sm:$0xff]
      %v2626 = vld [vmem:[#allocation3 + $0x50] sm:$0xff]
      %v2627 = vld [vmem:[#allocation3 + $0x58] sm:$0xff]
      %v2628 = vld [vmem:[#allocation3 + $0x60] sm:$0xff]
      %v2629 = vld [vmem:[#allocation3 + $0x68] sm:$0xff]
      %v2630 = vld [vmem:[#allocation3 + $0x70] sm:$0xff]
      %v2631 = vld [vmem:[#allocation3 + $0x78] sm:$0xff]
      %v2632 = vld [vmem:[#allocation3 + $0x80] sm:$0xff]
      %v2633 = vld [vmem:[#allocation3 + $0x88] sm:$0xff]
      %v2634 = vld [vmem:[#allocation3 + $0x90] sm:$0xff]
      %v2635 = vld [vmem:[#allocation3 + $0x98] sm:$0xff]
      %v2636 = vld [vmem:[#allocation3 + $0xa0] sm:$0xff]
      %v2637 = vld [vmem:[#allocation3 + $0xa8] sm:$0xff]
      %v2638 = vld [vmem:[#allocation3 + $0xb0] sm:$0xff]
      %v2639 = vld [vmem:[#allocation3 + $0xb8] sm:$0xff]
      %v2640 = vld [vmem:[#allocation3 + $0xc0] sm:$0xff]
      %v2641 = vld [vmem:[#allocation3 + $0xc8] sm:$0xff]
      %v2642 = vld [vmem:[#allocation3 + $0xd0] sm:$0xff]
      %v2643 = vld [vmem:[#allocation3 + $0xd8] sm:$0xff]
      %v2644 = vld [vmem:[#allocation3 + $0xe0] sm:$0xff]
      %v2645 = vld [vmem:[#allocation3 + $0xe8] sm:$0xff]
      %v2646 = vld [vmem:[#allocation3 + $0xf0] sm:$0xff]
      %v2647 = vld [vmem:[#allocation3 + $0xf8] sm:$0xff]
      %v2648 = vpack.c.bf16 %v2585, %v2584
      %v2649 = vpack.c.bf16 %v2587, %v2586
      %v2650 = vpack.c.bf16 %v2589, %v2588
      %v2651 = vpack.c.bf16 %v2591, %v2590
      %v2652 = vpack.c.bf16 %v2593, %v2592
      %v2653 = vpack.c.bf16 %v2595, %v2594
      %v2654 = vpack.c.bf16 %v2597, %v2596
      %v2655 = vpack.c.bf16 %v2599, %v2598
      %v2656 = vpack.c.bf16 %v2601, %v2600
      %v2657 = vpack.c.bf16 %v2603, %v2602
      %v2658 = vpack.c.bf16 %v2605, %v2604
      %v2659 = vpack.c.bf16 %v2607, %v2606
      %v2660 = vpack.c.bf16 %v2609, %v2608
      %v2661 = vpack.c.bf16 %v2611, %v2610
      %v2662 = vpack.c.bf16 %v2613, %v2612
      %v2663 = vpack.c.bf16 %v2615, %v2614
      %s2664 = scalar_lea.vmem %s3, 7
      %v2665 = vld [vmem:[%s2664] sm:$0x1]
      %v2667 = vsel %vm469, %v2648, 0
      %v2670 = vsel %vm469, %v2649, 0
      %v2673 = vsel %vm469, %v2650, 0
      %v2676 = vsel %vm469, %v2651, 0
      %v2679 = vsel %vm469, %v2652, 0
      %v2682 = vsel %vm469, %v2653, 0
      %v2685 = vsel %vm469, %v2654, 0
      %v2688 = vsel %vm469, %v2655, 0
      %v2691 = vsel %vm469, %v2656, 0
      %v2694 = vsel %vm469, %v2657, 0
      %v2697 = vsel %vm469, %v2658, 0
      %v2700 = vsel %vm469, %v2659, 0
      %v2703 = vsel %vm469, %v2660, 0
      %v2706 = vsel %vm469, %v2661, 0
      %v2709 = vsel %vm469, %v2662, 0
      %v2712 = vsel %vm469, %v2663, 0
      %v2715 = vsel %vm710, %v2665, 0
      %2717 = vmatpush.bf16.msra.mxu0 0
      %2718 = vmatpush.bf16.msra.mxu0 0
      %2719 = vmatpush.bf16.msra.mxu0 0
      %2720 = vmatpush.bf16.msra.mxu0 0
      %2721 = vmatpush.bf16.msra.mxu0 0
      %2722 = vmatpush.bf16.msra.mxu0 0
      %2723 = vmatpush.bf16.msra.mxu0 0
      %2724 = vmatpush.bf16.msra.mxu0 %v2715
      %2725 = vmatmul.bf16.gmra.mxu0 %v2667
      %v2726 = vpop.f32.mrf.mxu0
      %v2727 = vadd.f32 0.0, %v2726
      %v2728 = vpop.f32.mrf.mxu0
      %v2729 = vadd.f32 0.0, %v2728
      %2730 = vmatmul.bf16.gmra.mxu0 %v2670
      %v2731 = vpop.f32.mrf.mxu0
      %v2732 = vadd.f32 0.0, %v2731
      %v2733 = vpop.f32.mrf.mxu0
      %v2734 = vadd.f32 0.0, %v2733
      %2735 = vmatmul.bf16.gmra.mxu0 %v2673
      %v2736 = vpop.f32.mrf.mxu0
      %v2737 = vadd.f32 0.0, %v2736
      %v2738 = vpop.f32.mrf.mxu0
      %v2739 = vadd.f32 0.0, %v2738
      %2740 = vmatmul.bf16.gmra.mxu0 %v2676
      %v2741 = vpop.f32.mrf.mxu0
      %v2742 = vadd.f32 0.0, %v2741
      %v2743 = vpop.f32.mrf.mxu0
      %v2744 = vadd.f32 0.0, %v2743
      %2745 = vmatmul.bf16.gmra.mxu0 %v2679
      %v2746 = vpop.f32.mrf.mxu0
      %v2747 = vadd.f32 0.0, %v2746
      %v2748 = vpop.f32.mrf.mxu0
      %v2749 = vadd.f32 0.0, %v2748
      %2750 = vmatmul.bf16.gmra.mxu0 %v2682
      %v2751 = vpop.f32.mrf.mxu0
      %v2752 = vadd.f32 0.0, %v2751
      %v2753 = vpop.f32.mrf.mxu0
      %v2754 = vadd.f32 0.0, %v2753
      %2755 = vmatmul.bf16.gmra.mxu0 %v2685
      %v2756 = vpop.f32.mrf.mxu0
      %v2757 = vadd.f32 0.0, %v2756
      %v2758 = vpop.f32.mrf.mxu0
      %v2759 = vadd.f32 0.0, %v2758
      %2760 = vmatmul.bf16.gmra.mxu0 %v2688
      %v2761 = vpop.f32.mrf.mxu0
      %v2762 = vadd.f32 0.0, %v2761
      %v2763 = vpop.f32.mrf.mxu0
      %v2764 = vadd.f32 0.0, %v2763
      %2765 = vmatmul.bf16.gmra.mxu0 %v2691
      %v2766 = vpop.f32.mrf.mxu0
      %v2767 = vadd.f32 0.0, %v2766
      %v2768 = vpop.f32.mrf.mxu0
      %v2769 = vadd.f32 0.0, %v2768
      %2770 = vmatmul.bf16.gmra.mxu0 %v2694
      %v2771 = vpop.f32.mrf.mxu0
      %v2772 = vadd.f32 0.0, %v2771
      %v2773 = vpop.f32.mrf.mxu0
      %v2774 = vadd.f32 0.0, %v2773
      %2775 = vmatmul.bf16.gmra.mxu0 %v2697
      %v2776 = vpop.f32.mrf.mxu0
      %v2777 = vadd.f32 0.0, %v2776
      %v2778 = vpop.f32.mrf.mxu0
      %v2779 = vadd.f32 0.0, %v2778
      %2780 = vmatmul.bf16.gmra.mxu0 %v2700
      %v2781 = vpop.f32.mrf.mxu0
      %v2782 = vadd.f32 0.0, %v2781
      %v2783 = vpop.f32.mrf.mxu0
      %v2784 = vadd.f32 0.0, %v2783
      %2785 = vmatmul.bf16.gmra.mxu0 %v2703
      %v2786 = vpop.f32.mrf.mxu0
      %v2787 = vadd.f32 0.0, %v2786
      %v2788 = vpop.f32.mrf.mxu0
      %v2789 = vadd.f32 0.0, %v2788
      %2790 = vmatmul.bf16.gmra.mxu0 %v2706
      %v2791 = vpop.f32.mrf.mxu0
      %v2792 = vadd.f32 0.0, %v2791
      %v2793 = vpop.f32.mrf.mxu0
      %v2794 = vadd.f32 0.0, %v2793
      %2795 = vmatmul.bf16.gmra.mxu0 %v2709
      %v2796 = vpop.f32.mrf.mxu0
      %v2797 = vadd.f32 0.0, %v2796
      %v2798 = vpop.f32.mrf.mxu0
      %v2799 = vadd.f32 0.0, %v2798
      %2800 = vmatmul.bf16.gmra.mxu0 %v2712
      %v2801 = vpop.f32.mrf.mxu0
      %v2802 = vadd.f32 0.0, %v2801
      %v2803 = vpop.f32.mrf.mxu0
      %v2804 = vadd.f32 0.0, %v2803
      %2805 = vdwg.mxu0
      %v2806 = vadd.f32 %v2616, %v2727
      %v2807 = vadd.f32 %v2617, %v2729
      %v2808 = vadd.f32 %v2618, %v2732
      %v2809 = vadd.f32 %v2619, %v2734
      %v2810 = vadd.f32 %v2620, %v2737
      %v2811 = vadd.f32 %v2621, %v2739
      %v2812 = vadd.f32 %v2622, %v2742
      %v2813 = vadd.f32 %v2623, %v2744
      %v2814 = vadd.f32 %v2624, %v2747
      %v2815 = vadd.f32 %v2625, %v2749
      %v2816 = vadd.f32 %v2626, %v2752
      %v2817 = vadd.f32 %v2627, %v2754
      %v2818 = vadd.f32 %v2628, %v2757
      %v2819 = vadd.f32 %v2629, %v2759
      %v2820 = vadd.f32 %v2630, %v2762
      %v2821 = vadd.f32 %v2631, %v2764
      %v2822 = vadd.f32 %v2632, %v2767
      %v2823 = vadd.f32 %v2633, %v2769
      %v2824 = vadd.f32 %v2634, %v2772
      %v2825 = vadd.f32 %v2635, %v2774
      %v2826 = vadd.f32 %v2636, %v2777
      %v2827 = vadd.f32 %v2637, %v2779
      %v2828 = vadd.f32 %v2638, %v2782
      %v2829 = vadd.f32 %v2639, %v2784
      %v2830 = vadd.f32 %v2640, %v2787
      %v2831 = vadd.f32 %v2641, %v2789
      %v2832 = vadd.f32 %v2642, %v2792
      %v2833 = vadd.f32 %v2643, %v2794
      %v2834 = vadd.f32 %v2644, %v2797
      %v2835 = vadd.f32 %v2645, %v2799
      %v2836 = vadd.f32 %v2646, %v2802
      %v2837 = vadd.f32 %v2647, %v2804
      %2838 = vst.msk [vmem:[#allocation3] sm:$0xff] %vm548, %v2806
      %2839 = vst.msk [vmem:[#allocation3 + $0x8] sm:$0xff] %vm548, %v2807
      %2840 = vst.msk [vmem:[#allocation3 + $0x10] sm:$0xff] %vm548, %v2808
      %2841 = vst.msk [vmem:[#allocation3 + $0x18] sm:$0xff] %vm548, %v2809
      %2842 = vst.msk [vmem:[#allocation3 + $0x20] sm:$0xff] %vm548, %v2810
      %2843 = vst.msk [vmem:[#allocation3 + $0x28] sm:$0xff] %vm548, %v2811
      %2844 = vst.msk [vmem:[#allocation3 + $0x30] sm:$0xff] %vm548, %v2812
      %2845 = vst.msk [vmem:[#allocation3 + $0x38] sm:$0xff] %vm548, %v2813
      %2846 = vst.msk [vmem:[#allocation3 + $0x40] sm:$0xff] %vm548, %v2814
      %2847 = vst.msk [vmem:[#allocation3 + $0x48] sm:$0xff] %vm548, %v2815
      %2848 = vst.msk [vmem:[#allocation3 + $0x50] sm:$0xff] %vm548, %v2816
      %2849 = vst.msk [vmem:[#allocation3 + $0x58] sm:$0xff] %vm548, %v2817
      %2850 = vst.msk [vmem:[#allocation3 + $0x60] sm:$0xff] %vm548, %v2818
      %2851 = vst.msk [vmem:[#allocation3 + $0x68] sm:$0xff] %vm548, %v2819
      %2852 = vst.msk [vmem:[#allocation3 + $0x70] sm:$0xff] %vm548, %v2820
      %2853 = vst.msk [vmem:[#allocation3 + $0x78] sm:$0xff] %vm548, %v2821
      %2854 = vst.msk [vmem:[#allocation3 + $0x80] sm:$0xff] %vm548, %v2822
      %2855 = vst.msk [vmem:[#allocation3 + $0x88] sm:$0xff] %vm548, %v2823
      %2856 = vst.msk [vmem:[#allocation3 + $0x90] sm:$0xff] %vm548, %v2824
      %2857 = vst.msk [vmem:[#allocation3 + $0x98] sm:$0xff] %vm548, %v2825
      %2858 = vst.msk [vmem:[#allocation3 + $0xa0] sm:$0xff] %vm548, %v2826
      %2859 = vst.msk [vmem:[#allocation3 + $0xa8] sm:$0xff] %vm548, %v2827
      %2860 = vst.msk [vmem:[#allocation3 + $0xb0] sm:$0xff] %vm548, %v2828
      %2861 = vst.msk [vmem:[#allocation3 + $0xb8] sm:$0xff] %vm548, %v2829
      %2862 = vst.msk [vmem:[#allocation3 + $0xc0] sm:$0xff] %vm548, %v2830
      %2863 = vst.msk [vmem:[#allocation3 + $0xc8] sm:$0xff] %vm548, %v2831
      %2864 = vst.msk [vmem:[#allocation3 + $0xd0] sm:$0xff] %vm548, %v2832
      %2865 = vst.msk [vmem:[#allocation3 + $0xd8] sm:$0xff] %vm548, %v2833
      %2866 = vst.msk [vmem:[#allocation3 + $0xe0] sm:$0xff] %vm548, %v2834
      %2867 = vst.msk [vmem:[#allocation3 + $0xe8] sm:$0xff] %vm548, %v2835
      %2868 = vst.msk [vmem:[#allocation3 + $0xf0] sm:$0xff] %vm548, %v2836
      %2869 = vst.msk [vmem:[#allocation3 + $0xf8] sm:$0xff] %vm548, %v2837
      %v2870 = vld [vmem:[%s2297 + $0x2] sm:$0xff]
      %v2871 = vld [vmem:[%s2297 + $0xa] sm:$0xff]
      %v2872 = vld [vmem:[%s2297 + $0x1a] sm:$0xff]
      %v2873 = vld [vmem:[%s2297 + $0x22] sm:$0xff]
      %v2874 = vld [vmem:[%s2297 + $0x32] sm:$0xff]
      %v2875 = vld [vmem:[%s2297 + $0x3a] sm:$0xff]
      %v2876 = vld [vmem:[%s2297 + $0x4a] sm:$0xff]
      %v2877 = vld [vmem:[%s2297 + $0x52] sm:$0xff]
      %v2878 = vld [vmem:[%s2297 + $0x62] sm:$0xff]
      %v2879 = vld [vmem:[%s2297 + $0x6a] sm:$0xff]
      %v2880 = vld [vmem:[%s2297 + $0x7a] sm:$0xff]
      %v2881 = vld [vmem:[%s2297 + $0x82] sm:$0xff]
      %v2882 = vld [vmem:[%s2297 + $0x92] sm:$0xff]
      %v2883 = vld [vmem:[%s2297 + $0x9a] sm:$0xff]
      %v2884 = vld [vmem:[%s2297 + $0xaa] sm:$0xff]
      %v2885 = vld [vmem:[%s2297 + $0xb2] sm:$0xff]
      %v2886 = vld [vmem:[%s2297 + $0xc2] sm:$0xff]
      %v2887 = vld [vmem:[%s2297 + $0xca] sm:$0xff]
      %v2888 = vld [vmem:[%s2297 + $0xda] sm:$0xff]
      %v2889 = vld [vmem:[%s2297 + $0xe2] sm:$0xff]
      %v2890 = vld [vmem:[%s2297 + $0xf2] sm:$0xff]
      %v2891 = vld [vmem:[%s2297 + $0xfa] sm:$0xff]
      %v2892 = vld [vmem:[%s2297 + $0x10a] sm:$0xff]
      %v2893 = vld [vmem:[%s2297 + $0x112] sm:$0xff]
      %v2894 = vld [vmem:[%s2297 + $0x122] sm:$0xff]
      %v2895 = vld [vmem:[%s2297 + $0x12a] sm:$0xff]
      %v2896 = vld [vmem:[%s2297 + $0x13a] sm:$0xff]
      %v2897 = vld [vmem:[%s2297 + $0x142] sm:$0xff]
      %v2898 = vld [vmem:[%s2297 + $0x152] sm:$0xff]
      %v2899 = vld [vmem:[%s2297 + $0x15a] sm:$0xff]
      %v2900 = vld [vmem:[%s2297 + $0x16a] sm:$0xff]
      %v2901 = vld [vmem:[%s2297 + $0x172] sm:$0xff]
      %v2902 = vld [vmem:[#allocation3] sm:$0xff]
      %v2903 = vld [vmem:[#allocation3 + $0x8] sm:$0xff]
      %v2904 = vld [vmem:[#allocation3 + $0x10] sm:$0xff]
      %v2905 = vld [vmem:[#allocation3 + $0x18] sm:$0xff]
      %v2906 = vld [vmem:[#allocation3 + $0x20] sm:$0xff]
      %v2907 = vld [vmem:[#allocation3 + $0x28] sm:$0xff]
      %v2908 = vld [vmem:[#allocation3 + $0x30] sm:$0xff]
      %v2909 = vld [vmem:[#allocation3 + $0x38] sm:$0xff]
      %v2910 = vld [vmem:[#allocation3 + $0x40] sm:$0xff]
      %v2911 = vld [vmem:[#allocation3 + $0x48] sm:$0xff]
      %v2912 = vld [vmem:[#allocation3 + $0x50] sm:$0xff]
      %v2913 = vld [vmem:[#allocation3 + $0x58] sm:$0xff]
      %v2914 = vld [vmem:[#allocation3 + $0x60] sm:$0xff]
      %v2915 = vld [vmem:[#allocation3 + $0x68] sm:$0xff]
      %v2916 = vld [vmem:[#allocation3 + $0x70] sm:$0xff]
      %v2917 = vld [vmem:[#allocation3 + $0x78] sm:$0xff]
      %v2918 = vld [vmem:[#allocation3 + $0x80] sm:$0xff]
      %v2919 = vld [vmem:[#allocation3 + $0x88] sm:$0xff]
      %v2920 = vld [vmem:[#allocation3 + $0x90] sm:$0xff]
      %v2921 = vld [vmem:[#allocation3 + $0x98] sm:$0xff]
      %v2922 = vld [vmem:[#allocation3 + $0xa0] sm:$0xff]
      %v2923 = vld [vmem:[#allocation3 + $0xa8] sm:$0xff]
      %v2924 = vld [vmem:[#allocation3 + $0xb0] sm:$0xff]
      %v2925 = vld [vmem:[#allocation3 + $0xb8] sm:$0xff]
      %v2926 = vld [vmem:[#allocation3 + $0xc0] sm:$0xff]
      %v2927 = vld [vmem:[#allocation3 + $0xc8] sm:$0xff]
      %v2928 = vld [vmem:[#allocation3 + $0xd0] sm:$0xff]
      %v2929 = vld [vmem:[#allocation3 + $0xd8] sm:$0xff]
      %v2930 = vld [vmem:[#allocation3 + $0xe0] sm:$0xff]
      %v2931 = vld [vmem:[#allocation3 + $0xe8] sm:$0xff]
      %v2932 = vld [vmem:[#allocation3 + $0xf0] sm:$0xff]
      %v2933 = vld [vmem:[#allocation3 + $0xf8] sm:$0xff]
      %v2934 = vpack.c.bf16 %v2871, %v2870
      %v2935 = vpack.c.bf16 %v2873, %v2872
      %v2936 = vpack.c.bf16 %v2875, %v2874
      %v2937 = vpack.c.bf16 %v2877, %v2876
      %v2938 = vpack.c.bf16 %v2879, %v2878
      %v2939 = vpack.c.bf16 %v2881, %v2880
      %v2940 = vpack.c.bf16 %v2883, %v2882
      %v2941 = vpack.c.bf16 %v2885, %v2884
      %v2942 = vpack.c.bf16 %v2887, %v2886
      %v2943 = vpack.c.bf16 %v2889, %v2888
      %v2944 = vpack.c.bf16 %v2891, %v2890
      %v2945 = vpack.c.bf16 %v2893, %v2892
      %v2946 = vpack.c.bf16 %v2895, %v2894
      %v2947 = vpack.c.bf16 %v2897, %v2896
      %v2948 = vpack.c.bf16 %v2899, %v2898
      %v2949 = vpack.c.bf16 %v2901, %v2900
      %s2950 = scalar_lea.vmem %s3, 8
      %v2951 = vld [vmem:[%s2950] sm:$0x1]
      %v2953 = vsel %vm469, %v2934, 0
      %v2956 = vsel %vm469, %v2935, 0
      %v2959 = vsel %vm469, %v2936, 0
      %v2962 = vsel %vm469, %v2937, 0
      %v2965 = vsel %vm469, %v2938, 0
      %v2968 = vsel %vm469, %v2939, 0
      %v2971 = vsel %vm469, %v2940, 0
      %v2974 = vsel %vm469, %v2941, 0
      %v2977 = vsel %vm469, %v2942, 0
      %v2980 = vsel %vm469, %v2943, 0
      %v2983 = vsel %vm469, %v2944, 0
      %v2986 = vsel %vm469, %v2945, 0
      %v2989 = vsel %vm469, %v2946, 0
      %v2992 = vsel %vm469, %v2947, 0
      %v2995 = vsel %vm469, %v2948, 0
      %v2998 = vsel %vm469, %v2949, 0
      %v3001 = vsel %vm710, %v2951, 0
      %3003 = vmatpush.bf16.msra.mxu0 0
      %3004 = vmatpush.bf16.msra.mxu0 0
      %3005 = vmatpush.bf16.msra.mxu0 0
      %3006 = vmatpush.bf16.msra.mxu0 0
      %3007 = vmatpush.bf16.msra.mxu0 0
      %3008 = vmatpush.bf16.msra.mxu0 0
      %3009 = vmatpush.bf16.msra.mxu0 0
      %3010 = vmatpush.bf16.msra.mxu0 %v3001
      %3011 = vmatmul.bf16.gmra.mxu0 %v2953
      %v3012 = vpop.f32.mrf.mxu0
      %v3013 = vadd.f32 0.0, %v3012
      %v3014 = vpop.f32.mrf.mxu0
      %v3015 = vadd.f32 0.0, %v3014
      %3016 = vmatmul.bf16.gmra.mxu0 %v2956
      %v3017 = vpop.f32.mrf.mxu0
      %v3018 = vadd.f32 0.0, %v3017
      %v3019 = vpop.f32.mrf.mxu0
      %v3020 = vadd.f32 0.0, %v3019
      %3021 = vmatmul.bf16.gmra.mxu0 %v2959
      %v3022 = vpop.f32.mrf.mxu0
      %v3023 = vadd.f32 0.0, %v3022
      %v3024 = vpop.f32.mrf.mxu0
      %v3025 = vadd.f32 0.0, %v3024
      %3026 = vmatmul.bf16.gmra.mxu0 %v2962
      %v3027 = vpop.f32.mrf.mxu0
      %v3028 = vadd.f32 0.0, %v3027
      %v3029 = vpop.f32.mrf.mxu0
      %v3030 = vadd.f32 0.0, %v3029
      %3031 = vmatmul.bf16.gmra.mxu0 %v2965
      %v3032 = vpop.f32.mrf.mxu0
      %v3033 = vadd.f32 0.0, %v3032
      %v3034 = vpop.f32.mrf.mxu0
      %v3035 = vadd.f32 0.0, %v3034
      %3036 = vmatmul.bf16.gmra.mxu0 %v2968
      %v3037 = vpop.f32.mrf.mxu0
      %v3038 = vadd.f32 0.0, %v3037
      %v3039 = vpop.f32.mrf.mxu0
      %v3040 = vadd.f32 0.0, %v3039
      %3041 = vmatmul.bf16.gmra.mxu0 %v2971
      %v3042 = vpop.f32.mrf.mxu0
      %v3043 = vadd.f32 0.0, %v3042
      %v3044 = vpop.f32.mrf.mxu0
      %v3045 = vadd.f32 0.0, %v3044
      %3046 = vmatmul.bf16.gmra.mxu0 %v2974
      %v3047 = vpop.f32.mrf.mxu0
      %v3048 = vadd.f32 0.0, %v3047
      %v3049 = vpop.f32.mrf.mxu0
      %v3050 = vadd.f32 0.0, %v3049
      %3051 = vmatmul.bf16.gmra.mxu0 %v2977
      %v3052 = vpop.f32.mrf.mxu0
      %v3053 = vadd.f32 0.0, %v3052
      %v3054 = vpop.f32.mrf.mxu0
      %v3055 = vadd.f32 0.0, %v3054
      %3056 = vmatmul.bf16.gmra.mxu0 %v2980
      %v3057 = vpop.f32.mrf.mxu0
      %v3058 = vadd.f32 0.0, %v3057
      %v3059 = vpop.f32.mrf.mxu0
      %v3060 = vadd.f32 0.0, %v3059
      %3061 = vmatmul.bf16.gmra.mxu0 %v2983
      %v3062 = vpop.f32.mrf.mxu0
      %v3063 = vadd.f32 0.0, %v3062
      %v3064 = vpop.f32.mrf.mxu0
      %v3065 = vadd.f32 0.0, %v3064
      %3066 = vmatmul.bf16.gmra.mxu0 %v2986
      %v3067 = vpop.f32.mrf.mxu0
      %v3068 = vadd.f32 0.0, %v3067
      %v3069 = vpop.f32.mrf.mxu0
      %v3070 = vadd.f32 0.0, %v3069
      %3071 = vmatmul.bf16.gmra.mxu0 %v2989
      %v3072 = vpop.f32.mrf.mxu0
      %v3073 = vadd.f32 0.0, %v3072
      %v3074 = vpop.f32.mrf.mxu0
      %v3075 = vadd.f32 0.0, %v3074
      %3076 = vmatmul.bf16.gmra.mxu0 %v2992
      %v3077 = vpop.f32.mrf.mxu0
      %v3078 = vadd.f32 0.0, %v3077
      %v3079 = vpop.f32.mrf.mxu0
      %v3080 = vadd.f32 0.0, %v3079
      %3081 = vmatmul.bf16.gmra.mxu0 %v2995
      %v3082 = vpop.f32.mrf.mxu0
      %v3083 = vadd.f32 0.0, %v3082
      %v3084 = vpop.f32.mrf.mxu0
      %v3085 = vadd.f32 0.0, %v3084
      %3086 = vmatmul.bf16.gmra.mxu0 %v2998
      %v3087 = vpop.f32.mrf.mxu0
      %v3088 = vadd.f32 0.0, %v3087
      %v3089 = vpop.f32.mrf.mxu0
      %v3090 = vadd.f32 0.0, %v3089
      %3091 = vdwg.mxu0
      %v3092 = vadd.f32 %v2902, %v3013
      %v3093 = vadd.f32 %v2903, %v3015
      %v3094 = vadd.f32 %v2904, %v3018
      %v3095 = vadd.f32 %v2905, %v3020
      %v3096 = vadd.f32 %v2906, %v3023
      %v3097 = vadd.f32 %v2907, %v3025
      %v3098 = vadd.f32 %v2908, %v3028
      %v3099 = vadd.f32 %v2909, %v3030
      %v3100 = vadd.f32 %v2910, %v3033
      %v3101 = vadd.f32 %v2911, %v3035
      %v3102 = vadd.f32 %v2912, %v3038
      %v3103 = vadd.f32 %v2913, %v3040
      %v3104 = vadd.f32 %v2914, %v3043
      %v3105 = vadd.f32 %v2915, %v3045
      %v3106 = vadd.f32 %v2916, %v3048
      %v3107 = vadd.f32 %v2917, %v3050
      %v3108 = vadd.f32 %v2918, %v3053
      %v3109 = vadd.f32 %v2919, %v3055
      %v3110 = vadd.f32 %v2920, %v3058
      %v3111 = vadd.f32 %v2921, %v3060
      %v3112 = vadd.f32 %v2922, %v3063
      %v3113 = vadd.f32 %v2923, %v3065
      %v3114 = vadd.f32 %v2924, %v3068
      %v3115 = vadd.f32 %v2925, %v3070
      %v3116 = vadd.f32 %v2926, %v3073
      %v3117 = vadd.f32 %v2927, %v3075
      %v3118 = vadd.f32 %v2928, %v3078
      %v3119 = vadd.f32 %v2929, %v3080
      %v3120 = vadd.f32 %v2930, %v3083
      %v3121 = vadd.f32 %v2931, %v3085
      %v3122 = vadd.f32 %v2932, %v3088
      %v3123 = vadd.f32 %v2933, %v3090
      %3124 = vst.msk [vmem:[#allocation3] sm:$0xff] %vm548, %v3092
      %3125 = vst.msk [vmem:[#allocation3 + $0x8] sm:$0xff] %vm548, %v3093
      %3126 = vst.msk [vmem:[#allocation3 + $0x10] sm:$0xff] %vm548, %v3094
      %3127 = vst.msk [vmem:[#allocation3 + $0x18] sm:$0xff] %vm548, %v3095
      %3128 = vst.msk [vmem:[#allocation3 + $0x20] sm:$0xff] %vm548, %v3096
      %3129 = vst.msk [vmem:[#allocation3 + $0x28] sm:$0xff] %vm548, %v3097
      %3130 = vst.msk [vmem:[#allocation3 + $0x30] sm:$0xff] %vm548, %v3098
      %3131 = vst.msk [vmem:[#allocation3 + $0x38] sm:$0xff] %vm548, %v3099
      %3132 = vst.msk [vmem:[#allocation3 + $0x40] sm:$0xff] %vm548, %v3100
      %3133 = vst.msk [vmem:[#allocation3 + $0x48] sm:$0xff] %vm548, %v3101
      %3134 = vst.msk [vmem:[#allocation3 + $0x50] sm:$0xff] %vm548, %v3102
      %3135 = vst.msk [vmem:[#allocation3 + $0x58] sm:$0xff] %vm548, %v3103
      %3136 = vst.msk [vmem:[#allocation3 + $0x60] sm:$0xff] %vm548, %v3104
      %3137 = vst.msk [vmem:[#allocation3 + $0x68] sm:$0xff] %vm548, %v3105
      %3138 = vst.msk [vmem:[#allocation3 + $0x70] sm:$0xff] %vm548, %v3106
      %3139 = vst.msk [vmem:[#allocation3 + $0x78] sm:$0xff] %vm548, %v3107
      %3140 = vst.msk [vmem:[#allocation3 + $0x80] sm:$0xff] %vm548, %v3108
      %3141 = vst.msk [vmem:[#allocation3 + $0x88] sm:$0xff] %vm548, %v3109
      %3142 = vst.msk [vmem:[#allocation3 + $0x90] sm:$0xff] %vm548, %v3110
      %3143 = vst.msk [vmem:[#allocation3 + $0x98] sm:$0xff] %vm548, %v3111
      %3144 = vst.msk [vmem:[#allocation3 + $0xa0] sm:$0xff] %vm548, %v3112
      %3145 = vst.msk [vmem:[#allocation3 + $0xa8] sm:$0xff] %vm548, %v3113
      %3146 = vst.msk [vmem:[#allocation3 + $0xb0] sm:$0xff] %vm548, %v3114
      %3147 = vst.msk [vmem:[#allocation3 + $0xb8] sm:$0xff] %vm548, %v3115
      %3148 = vst.msk [vmem:[#allocation3 + $0xc0] sm:$0xff] %vm548, %v3116
      %3149 = vst.msk [vmem:[#allocation3 + $0xc8] sm:$0xff] %vm548, %v3117
      %3150 = vst.msk [vmem:[#allocation3 + $0xd0] sm:$0xff] %vm548, %v3118
      %3151 = vst.msk [vmem:[#allocation3 + $0xd8] sm:$0xff] %vm548, %v3119
      %3152 = vst.msk [vmem:[#allocation3 + $0xe0] sm:$0xff] %vm548, %v3120
      %3153 = vst.msk [vmem:[#allocation3 + $0xe8] sm:$0xff] %vm548, %v3121
      %3154 = vst.msk [vmem:[#allocation3 + $0xf0] sm:$0xff] %vm548, %v3122
      %3155 = vst.msk [vmem:[#allocation3 + $0xf8] sm:$0xff] %vm548, %v3123
      %v3156 = vld [vmem:[#allocation3] sm:$0xff]
      %v3157 = vld [vmem:[#allocation3 + $0x8] sm:$0xff]
      %v3158 = vld [vmem:[#allocation3 + $0x10] sm:$0xff]
      %v3159 = vld [vmem:[#allocation3 + $0x18] sm:$0xff]
      %v3160 = vld [vmem:[#allocation3 + $0x20] sm:$0xff]
      %v3161 = vld [vmem:[#allocation3 + $0x28] sm:$0xff]
      %v3162 = vld [vmem:[#allocation3 + $0x30] sm:$0xff]
      %v3163 = vld [vmem:[#allocation3 + $0x38] sm:$0xff]
      %v3164 = vld [vmem:[#allocation3 + $0x40] sm:$0xff]
      %v3165 = vld [vmem:[#allocation3 + $0x48] sm:$0xff]
      %v3166 = vld [vmem:[#allocation3 + $0x50] sm:$0xff]
      %v3167 = vld [vmem:[#allocation3 + $0x58] sm:$0xff]
      %v3168 = vld [vmem:[#allocation3 + $0x60] sm:$0xff]
      %v3169 = vld [vmem:[#allocation3 + $0x68] sm:$0xff]
      %v3170 = vld [vmem:[#allocation3 + $0x70] sm:$0xff]
      %v3171 = vld [vmem:[#allocation3 + $0x78] sm:$0xff]
      %v3172 = vld [vmem:[#allocation3 + $0x80] sm:$0xff]
      %v3173 = vld [vmem:[#allocation3 + $0x88] sm:$0xff]
      %v3174 = vld [vmem:[#allocation3 + $0x90] sm:$0xff]
      %v3175 = vld [vmem:[#allocation3 + $0x98] sm:$0xff]
      %v3176 = vld [vmem:[#allocation3 + $0xa0] sm:$0xff]
      %v3177 = vld [vmem:[#allocation3 + $0xa8] sm:$0xff]
      %v3178 = vld [vmem:[#allocation3 + $0xb0] sm:$0xff]
      %v3179 = vld [vmem:[#allocation3 + $0xb8] sm:$0xff]
      %v3180 = vld [vmem:[#allocation3 + $0xc0] sm:$0xff]
      %v3181 = vld [vmem:[#allocation3 + $0xc8] sm:$0xff]
      %v3182 = vld [vmem:[#allocation3 + $0xd0] sm:$0xff]
      %v3183 = vld [vmem:[#allocation3 + $0xd8] sm:$0xff]
      %v3184 = vld [vmem:[#allocation3 + $0xe0] sm:$0xff]
      %v3185 = vld [vmem:[#allocation3 + $0xe8] sm:$0xff]
      %v3186 = vld [vmem:[#allocation3 + $0xf0] sm:$0xff]
      %v3187 = vld [vmem:[#allocation3 + $0xf8] sm:$0xff]
      %v3188 = vsel %vm548, %v3156, 0.0
      %v3189 = vsel %vm548, %v3157, 0.0
      %v3190 = vadd.f32 %v3188, %v3189
      %v3191 = vsel %vm548, %v3158, 0.0
      %v3192 = vadd.f32 %v3190, %v3191
      %v3193 = vsel %vm548, %v3159, 0.0
      %v3194 = vadd.f32 %v3192, %v3193
      %v3195 = vsel %vm548, %v3160, 0.0
      %v3196 = vadd.f32 %v3194, %v3195
      %v3197 = vsel %vm548, %v3161, 0.0
      %v3198 = vadd.f32 %v3196, %v3197
      %v3199 = vsel %vm548, %v3162, 0.0
      %v3200 = vadd.f32 %v3198, %v3199
      %v3201 = vsel %vm548, %v3163, 0.0
      %v3202 = vadd.f32 %v3200, %v3201
      %v3203 = vsel %vm548, %v3164, 0.0
      %v3204 = vadd.f32 %v3202, %v3203
      %v3205 = vsel %vm548, %v3165, 0.0
      %v3206 = vadd.f32 %v3204, %v3205
      %v3207 = vsel %vm548, %v3166, 0.0
      %v3208 = vadd.f32 %v3206, %v3207
      %v3209 = vsel %vm548, %v3167, 0.0
      %v3210 = vadd.f32 %v3208, %v3209
      %v3211 = vsel %vm548, %v3168, 0.0
      %v3212 = vadd.f32 %v3210, %v3211
      %v3213 = vsel %vm548, %v3169, 0.0
      %v3214 = vadd.f32 %v3212, %v3213
      %v3215 = vsel %vm548, %v3170, 0.0
      %v3216 = vadd.f32 %v3214, %v3215
      %v3217 = vsel %vm548, %v3171, 0.0
      %v3218 = vadd.f32 %v3216, %v3217
      %v3219 = vsel %vm548, %v3172, 0.0
      %v3220 = vadd.f32 %v3218, %v3219
      %v3221 = vsel %vm548, %v3173, 0.0
      %v3222 = vadd.f32 %v3220, %v3221
      %v3223 = vsel %vm548, %v3174, 0.0
      %v3224 = vadd.f32 %v3222, %v3223
      %v3225 = vsel %vm548, %v3175, 0.0
      %v3226 = vadd.f32 %v3224, %v3225
      %v3227 = vsel %vm548, %v3176, 0.0
      %v3228 = vadd.f32 %v3226, %v3227
      %v3229 = vsel %vm548, %v3177, 0.0
      %v3230 = vadd.f32 %v3228, %v3229
      %v3231 = vsel %vm548, %v3178, 0.0
      %v3232 = vadd.f32 %v3230, %v3231
      %v3233 = vsel %vm548, %v3179, 0.0
      %v3234 = vadd.f32 %v3232, %v3233
      %v3235 = vsel %vm548, %v3180, 0.0
      %v3236 = vadd.f32 %v3234, %v3235
      %v3237 = vsel %vm548, %v3181, 0.0
      %v3238 = vadd.f32 %v3236, %v3237
      %v3239 = vsel %vm548, %v3182, 0.0
      %v3240 = vadd.f32 %v3238, %v3239
      %v3241 = vsel %vm548, %v3183, 0.0
      %v3242 = vadd.f32 %v3240, %v3241
      %v3243 = vsel %vm548, %v3184, 0.0
      %v3244 = vadd.f32 %v3242, %v3243
      %v3245 = vsel %vm548, %v3185, 0.0
      %v3246 = vadd.f32 %v3244, %v3245
      %v3247 = vsel %vm548, %v3186, 0.0
      %v3248 = vadd.f32 %v3246, %v3247
      %v3249 = vsel %vm548, %v3187, 0.0
      %v3250 = vadd.f32 %v3248, %v3249
      %v3251 = vrot.slane %v3250, 4
      %v3252 = vadd.f32 %v3250, %v3251
      %v3253 = vrot.slane %v3252, 2
      %v3254 = vadd.f32 %v3252, %v3253
      %v3255 = vrot.slane %v3254, 1
      %v3256 = vadd.f32 %v3254, %v3255
      %v3257 = vmul.f32 %v3156, %v3156
      %v3258 = vmul.f32 %v3157, %v3157
      %v3259 = vmul.f32 %v3158, %v3158
      %v3260 = vmul.f32 %v3159, %v3159
      %v3261 = vmul.f32 %v3160, %v3160
      %v3262 = vmul.f32 %v3161, %v3161
      %v3263 = vmul.f32 %v3162, %v3162
      %v3264 = vmul.f32 %v3163, %v3163
      %v3265 = vmul.f32 %v3164, %v3164
      %v3266 = vmul.f32 %v3165, %v3165
      %v3267 = vmul.f32 %v3166, %v3166
      %v3268 = vmul.f32 %v3167, %v3167
      %v3269 = vmul.f32 %v3168, %v3168
      %v3270 = vmul.f32 %v3169, %v3169
      %v3271 = vmul.f32 %v3170, %v3170
      %v3272 = vmul.f32 %v3171, %v3171
      %v3273 = vmul.f32 %v3172, %v3172
      %v3274 = vmul.f32 %v3173, %v3173
      %v3275 = vmul.f32 %v3174, %v3174
      %v3276 = vmul.f32 %v3175, %v3175
      %v3277 = vmul.f32 %v3176, %v3176
      %v3278 = vmul.f32 %v3177, %v3177
      %v3279 = vmul.f32 %v3178, %v3178
      %v3280 = vmul.f32 %v3179, %v3179
      %v3281 = vmul.f32 %v3180, %v3180
      %v3282 = vmul.f32 %v3181, %v3181
      %v3283 = vmul.f32 %v3182, %v3182
      %v3284 = vmul.f32 %v3183, %v3183
      %v3285 = vmul.f32 %v3184, %v3184
      %v3286 = vmul.f32 %v3185, %v3185
      %v3287 = vmul.f32 %v3186, %v3186
      %v3288 = vmul.f32 %v3187, %v3187
      %v3289 = vsel %vm548, %v3257, 0.0
      %v3290 = vsel %vm548, %v3258, 0.0
      %v3291 = vadd.f32 %v3289, %v3290
      %v3292 = vsel %vm548, %v3259, 0.0
      %v3293 = vadd.f32 %v3291, %v3292
      %v3294 = vsel %vm548, %v3260, 0.0
      %v3295 = vadd.f32 %v3293, %v3294
      %v3296 = vsel %vm548, %v3261, 0.0
      %v3297 = vadd.f32 %v3295, %v3296
      %v3298 = vsel %vm548, %v3262, 0.0
      %v3299 = vadd.f32 %v3297, %v3298
      %v3300 = vsel %vm548, %v3263, 0.0
      %v3301 = vadd.f32 %v3299, %v3300
      %v3302 = vsel %vm548, %v3264, 0.0
      %v3303 = vadd.f32 %v3301, %v3302
      %v3304 = vsel %vm548, %v3265, 0.0
      %v3305 = vadd.f32 %v3303, %v3304
      %v3306 = vsel %vm548, %v3266, 0.0
      %v3307 = vadd.f32 %v3305, %v3306
      %v3308 = vsel %vm548, %v3267, 0.0
      %v3309 = vadd.f32 %v3307, %v3308
      %v3310 = vsel %vm548, %v3268, 0.0
      %v3311 = vadd.f32 %v3309, %v3310
      %v3312 = vsel %vm548, %v3269, 0.0
      %v3313 = vadd.f32 %v3311, %v3312
      %v3314 = vsel %vm548, %v3270, 0.0
      %v3315 = vadd.f32 %v3313, %v3314
      %v3316 = vsel %vm548, %v3271, 0.0
      %v3317 = vadd.f32 %v3315, %v3316
      %v3318 = vsel %vm548, %v3272, 0.0
      %v3319 = vadd.f32 %v3317, %v3318
      %v3320 = vsel %vm548, %v3273, 0.0
      %v3321 = vadd.f32 %v3319, %v3320
      %v3322 = vsel %vm548, %v3274, 0.0
      %v3323 = vadd.f32 %v3321, %v3322
      %v3324 = vsel %vm548, %v3275, 0.0
      %v3325 = vadd.f32 %v3323, %v3324
      %v3326 = vsel %vm548, %v3276, 0.0
      %v3327 = vadd.f32 %v3325, %v3326
      %v3328 = vsel %vm548, %v3277, 0.0
      %v3329 = vadd.f32 %v3327, %v3328
      %v3330 = vsel %vm548, %v3278, 0.0
      %v3331 = vadd.f32 %v3329, %v3330
      %v3332 = vsel %vm548, %v3279, 0.0
      %v3333 = vadd.f32 %v3331, %v3332
      %v3334 = vsel %vm548, %v3280, 0.0
      %v3335 = vadd.f32 %v3333, %v3334
      %v3336 = vsel %vm548, %v3281, 0.0
      %v3337 = vadd.f32 %v3335, %v3336
      %v3338 = vsel %vm548, %v3282, 0.0
      %v3339 = vadd.f32 %v3337, %v3338
      %v3340 = vsel %vm548, %v3283, 0.0
      %v3341 = vadd.f32 %v3339, %v3340
      %v3342 = vsel %vm548, %v3284, 0.0
      %v3343 = vadd.f32 %v3341, %v3342
      %v3344 = vsel %vm548, %v3285, 0.0
      %v3345 = vadd.f32 %v3343, %v3344
      %v3346 = vsel %vm548, %v3286, 0.0
      %v3347 = vadd.f32 %v3345, %v3346
      %v3348 = vsel %vm548, %v3287, 0.0
      %v3349 = vadd.f32 %v3347, %v3348
      %v3350 = vsel %vm548, %v3288, 0.0
      %v3351 = vadd.f32 %v3349, %v3350
      %v3352 = vrot.slane %v3351, 4
      %v3353 = vadd.f32 %v3351, %v3352
      %v3354 = vrot.slane %v3353, 2
      %v3355 = vadd.f32 %v3353, %v3354
      %v3356 = vrot.slane %v3355, 1
      %v3357 = vadd.f32 %v3355, %v3356
      %v3358 = vsel %vm710, %v3256, %v3357
      %vm3359 = vcmask 25600
      %3360 = vst.msk [vmem:[%s235] sm:$0x3] %vm3359, %v3358
      %v3361 = vpack.c.bf16 %v3156, %v3156
      %v3362 = vpack.c.bf16 %v3157, %v3157
      %v3363 = vpack.c.bf16 %v3158, %v3158
      %v3364 = vpack.c.bf16 %v3159, %v3159
      %v3365 = vpack.c.bf16 %v3160, %v3160
      %v3366 = vpack.c.bf16 %v3161, %v3161
      %v3367 = vpack.c.bf16 %v3162, %v3162
      %v3368 = vpack.c.bf16 %v3163, %v3163
      %v3369 = vpack.c.bf16 %v3164, %v3164
      %v3370 = vpack.c.bf16 %v3165, %v3165
      %v3371 = vpack.c.bf16 %v3166, %v3166
      %v3372 = vpack.c.bf16 %v3167, %v3167
      %v3373 = vpack.c.bf16 %v3168, %v3168
      %v3374 = vpack.c.bf16 %v3169, %v3169
      %v3375 = vpack.c.bf16 %v3170, %v3170
      %v3376 = vpack.c.bf16 %v3171, %v3171
      %v3377 = vpack.c.bf16 %v3172, %v3172
      %v3378 = vpack.c.bf16 %v3173, %v3173
      %v3379 = vpack.c.bf16 %v3174, %v3174
      %v3380 = vpack.c.bf16 %v3175, %v3175
      %v3381 = vpack.c.bf16 %v3176, %v3176
      %v3382 = vpack.c.bf16 %v3177, %v3177
      %v3383 = vpack.c.bf16 %v3178, %v3178
      %v3384 = vpack.c.bf16 %v3179, %v3179
      %v3385 = vpack.c.bf16 %v3180, %v3180
      %v3386 = vpack.c.bf16 %v3181, %v3181
      %v3387 = vpack.c.bf16 %v3182, %v3182
      %v3388 = vpack.c.bf16 %v3183, %v3183
      %v3389 = vpack.c.bf16 %v3184, %v3184
      %v3390 = vpack.c.bf16 %v3185, %v3185
      %v3391 = vpack.c.bf16 %v3186, %v3186
      %v3392 = vpack.c.bf16 %v3187, %v3187
      %vm3393 = vcmask 27648
      %3394 = vst.msk [vmem:[%s231] sm:$0xf] %vm3393, %v3361
      %3395 = vst.msk [vmem:[%s231 + $0x4] sm:$0xf] %vm3393, %v3362
      %3396 = vst.msk [vmem:[%s231 + $0x8] sm:$0xf] %vm3393, %v3363
      %3397 = vst.msk [vmem:[%s231 + $0xc] sm:$0xf] %vm3393, %v3364
      %3398 = vst.msk [vmem:[%s231 + $0x10] sm:$0xf] %vm3393, %v3365
      %3399 = vst.msk [vmem:[%s231 + $0x14] sm:$0xf] %vm3393, %v3366
      %3400 = vst.msk [vmem:[%s231 + $0x18] sm:$0xf] %vm3393, %v3367
      %3401 = vst.msk [vmem:[%s231 + $0x1c] sm:$0xf] %vm3393, %v3368
      %3402 = vst.msk [vmem:[%s231 + $0x20] sm:$0xf] %vm3393, %v3369
      %3403 = vst.msk [vmem:[%s231 + $0x24] sm:$0xf] %vm3393, %v3370
      %3404 = vst.msk [vmem:[%s231 + $0x28] sm:$0xf] %vm3393, %v3371
      %3405 = vst.msk [vmem:[%s231 + $0x2c] sm:$0xf] %vm3393, %v3372
      %3406 = vst.msk [vmem:[%s231 + $0x30] sm:$0xf] %vm3393, %v3373
      %3407 = vst.msk [vmem:[%s231 + $0x34] sm:$0xf] %vm3393, %v3374
      %3408 = vst.msk [vmem:[%s231 + $0x38] sm:$0xf] %vm3393, %v3375
      %3409 = vst.msk [vmem:[%s231 + $0x3c] sm:$0xf] %vm3393, %v3376
      %3410 = vst.msk [vmem:[%s231 + $0x40] sm:$0xf] %vm3393, %v3377
      %3411 = vst.msk [vmem:[%s231 + $0x44] sm:$0xf] %vm3393, %v3378
      %3412 = vst.msk [vmem:[%s231 + $0x48] sm:$0xf] %vm3393, %v3379
      %3413 = vst.msk [vmem:[%s231 + $0x4c] sm:$0xf] %vm3393, %v3380
      %3414 = vst.msk [vmem:[%s231 + $0x50] sm:$0xf] %vm3393, %v3381
      %3415 = vst.msk [vmem:[%s231 + $0x54] sm:$0xf] %vm3393, %v3382
      %3416 = vst.msk [vmem:[%s231 + $0x58] sm:$0xf] %vm3393, %v3383
      %3417 = vst.msk [vmem:[%s231 + $0x5c] sm:$0xf] %vm3393, %v3384
      %3418 = vst.msk [vmem:[%s231 + $0x60] sm:$0xf] %vm3393, %v3385
      %3419 = vst.msk [vmem:[%s231 + $0x64] sm:$0xf] %vm3393, %v3386
      %3420 = vst.msk [vmem:[%s231 + $0x68] sm:$0xf] %vm3393, %v3387
      %3421 = vst.msk [vmem:[%s231 + $0x6c] sm:$0xf] %vm3393, %v3388
      %3422 = vst.msk [vmem:[%s231 + $0x70] sm:$0xf] %vm3393, %v3389
      %3423 = vst.msk [vmem:[%s231 + $0x74] sm:$0xf] %vm3393, %v3390
      %3424 = vst.msk [vmem:[%s231 + $0x78] sm:$0xf] %vm3393, %v3391
      %3425 = vst.msk [vmem:[%s231 + $0x7c] sm:$0xf] %vm3393, %v3392
      %p3426 = scmp.lt.s32.totalorder %s17, 1
      %s3427 = scalar_select %p3426, %s17, 1
      %s3428 = smul.addr %s3427, 32
      %s3429 = smul.addr %s3428, 4
      %s3430 = scalar_lea.vmem %s4, %s3429
      %p3431 = scmp.lt.s32.totalorder %s17, 1
      %s3432 = scalar_select %p3431, %s17, 1
      %s3433 = smul.addr %s3432, 2
      %s3434 = scalar_lea.vmem %s5, %s3433
      // Predicated region
      $region37: #{residual_block_forward.4} parent=35 // pred_check
        %p3435 = pneg %p124
      $region38: #{residual_block_forward.4} parent=35 // pred_check_branch
        %3437 = sbr.rel (%p3435) target = $region40
      $region39: #{residual_block_forward.4} parent=35 // pred_region
        _
      $region40: #{residual_block_forward.4} parent=35 // pred_fallthru
        _
      // Predicated region
      $region41: #{residual_block_forward.4} parent=35 // pred_check
        %p3438 = pneg %p150
      $region42: #{residual_block_forward.4} parent=35 // pred_check_branch
        %3440 = sbr.rel (%p3438) target = $region44
      $region43: #{residual_block_forward.4} parent=35 // pred_region
        _
      $region44: #{residual_block_forward.4} parent=35 // pred_fallthru
        _
    $region36: #{residual_block_forward.4} parent=5 // pred_fallthru
      _
    %p3441 = scmp.le.s32.totalorder 2, %s12
    // Predicated region
    $region45: #{residual_block_forward.4} parent=5 // pred_check
      %p3442 = pneg %p3441
    $region46: #{residual_block_forward.4} parent=5 // pred_check_branch
      %3444 = sbr.rel (%p3442) target = $region48
    $region47: #{residual_block_forward.4} parent=5 // pred_region
      %s3445 = ssub.s32 %s12, 2
      // Predicated region
      $region49: #{residual_block_forward.4} parent=47 // pred_check
        %p3446 = pneg %p130
      $region50: #{residual_block_forward.4} parent=47 // pred_check_branch
        %3448 = sbr.rel (%p3446) target = $region52
      $region51: #{residual_block_forward.4} parent=47 // pred_region
        %p3449 = scmp.lt.s32.totalorder %s18, 1
        %s3450 = scalar_select %p3449, %s18, 1
        %s3451 = smul.addr %s3450, 32
        %s3452 = smul.addr %s3451, 4
        %s3453 = scalar_lea.vmem %s4, %s3452
      $region52: #{residual_block_forward.4} parent=47 // pred_fallthru
        _
      // Predicated region
      $region53: #{residual_block_forward.4} parent=47 // pred_check
        %p3454 = pneg %p156
      $region54: #{residual_block_forward.4} parent=47 // pred_check_branch
        %3456 = sbr.rel (%p3454) target = $region56
      $region55: #{residual_block_forward.4} parent=47 // pred_region
        %p3457 = scmp.lt.s32.totalorder %s18, 1
        %s3458 = scalar_select %p3457, %s18, 1
        %s3459 = smul.addr %s3458, 2
        %s3460 = scalar_lea.vmem %s5, %s3459
      $region56: #{residual_block_forward.4} parent=47 // pred_fallthru
        _
    $region48: #{residual_block_forward.4} parent=5 // pred_fallthru
      _
  $region6: #{residual_block_forward.4} parent=0 // loop_footer
    %s16 = sadd.s32 1, %s12
  $region7: #{residual_block_forward.4} parent=0 // loop_footer_branch
    %11 = sbr.rel target = $region3
  $region8: #{residual_block_forward.4} parent=0 // loop_exit
    _

</llo_original>
